<compile_context>
chip_gen: v6e
topology: v6e:2x2x1
jax: 0.10.0
libtpu: 0.0.40
codegen_flags: <defaults>
</compile_context>

<pallas_src>
import math
from functools import partial

import jax
import jax.numpy as jnp
from jax.experimental import pallas as pl
from jax.experimental.pallas import tpu as pltpu

LN_EPS = 1e-5                        # PyTorch nn.LayerNorm default
COMPUTE_DTYPE = jnp.bfloat16         # MXU operand dtype (accumulation is f32)
ATTN_DTYPE = jnp.bfloat16            # attention-probability storage dtype
MASK_VALUE = -1e30                   # finite "-inf" -> no NaN on all-masked rows

_VMEM_LIMIT_CACHE = None


def _vmem_limit_bytes():
    """Generation-aware scoped-VMEM cap: ~3/4 of physical, capped at 96 MiB."""
    global _VMEM_LIMIT_CACHE
    if _VMEM_LIMIT_CACHE is None:
        limit = 48 * 1024 * 1024                       # safe everywhere fallback
        try:
            info = pltpu.get_tpu_info()
            cap = getattr(info, "vmem_capacity_bytes", None) or \
                  getattr(info, "vmem_bytes", None)
            if cap:
                limit = int(min(96 * 1024 * 1024, (int(cap) * 3) // 4))
        except Exception:
            pass
        _VMEM_LIMIT_CACHE = limit
    return _VMEM_LIMIT_CACHE


def _layer_norm(y, gamma, beta):
    mu = jnp.mean(y, axis=-1, keepdims=True)
    var = jnp.mean((y - mu) ** 2, axis=-1, keepdims=True)
    return (y - mu) * jax.lax.rsqrt(var + LN_EPS) * gamma + beta


# ----------------------------------------------------------------------------
# Kernel 1: input Linear + LayerNorm + positional-encoding add
#           grid = (B, T // tm); PE streamed per time tile (no HBM broadcast).
# ----------------------------------------------------------------------------
def _input_proj_kernel(x_ref, w_ref, b_ref, g_ref, be_ref, pe_ref, out_ref):
    x = x_ref[0].astype(COMPUTE_DTYPE)                             # (tm, Din)
    y = jnp.dot(x, w_ref[...], preferred_element_type=jnp.float32) + b_ref[...]
    y = _layer_norm(y, g_ref[...], be_ref[...])
    out_ref[0] = y + pe_ref[...]


def _choose_time_tile(t):
    if t <= 512:
        return t
    for tm in (512, 256, 128):
        if t % tm == 0:
            return tm
    return t          # ragged long T: single full-extent block


def input_proj(x, w, b, gamma, beta, pe):
    B, T, Din = x.shape
    Dm = w.shape[1]
    tm = _choose_time_tile(T)
    nt = T // tm

    cost = pl.CostEstimate(
        flops=int(2 * B * T * Din * Dm),
        transcendentals=int(B * T),
        bytes_accessed=int(4 * B * T * (Din + Dm) + 4 * T * Dm
                           + 2 * Din * Dm + 16 * Dm))

    return pl.pallas_call(
        _input_proj_kernel,
        out_shape=jax.ShapeDtypeStruct((B, T, Dm), jnp.float32),
        grid=(B, nt),
        in_specs=[
            pl.BlockSpec((1, tm, Din), lambda bi, ti: (bi, ti, 0)),   # x
            pl.BlockSpec((Din, Dm), lambda bi, ti: (0, 0)),           # W (bf16)
            pl.BlockSpec((1, Dm), lambda bi, ti: (0, 0)),             # b
            pl.BlockSpec((1, Dm), lambda bi, ti: (0, 0)),             # LN gamma
            pl.BlockSpec((1, Dm), lambda bi, ti: (0, 0)),             # LN beta
            pl.BlockSpec((tm, Dm), lambda bi, ti: (ti, 0)),           # PE (time tile)
        ],
        out_specs=pl.BlockSpec((1, tm, Dm), lambda bi, ti: (bi, ti, 0)),
        compiler_params=pltpu.CompilerParams(
            dimension_semantics=("parallel", "parallel"),
            vmem_limit_bytes=_vmem_limit_bytes()),
        cost_estimate=cost,
    )(x, w.astype(COMPUTE_DTYPE), b, gamma, beta, pe)


# ----------------------------------------------------------------------------
# Kernel 2: fused encoder layer
#   fused-QKV GEMM (once per batch) -> per-head attention over query tiles
#   -> single output-projection GEMM -> residual/LN/mask -> FFN -> residual/LN/mask
# ----------------------------------------------------------------------------
def _encoder_layer_kernel(len_ref, x_ref,
                          wqkv_ref, bqkv_ref, wo_ref, bo_ref, ga_ref, ba_ref,
                          w1_ref, b1_ref, w2_ref, b2_ref, gf_ref, bf_ref,
                          out_ref, attn_ref,
                          q_scr, k_scr, v_scr,
                          *, num_heads, dim_key, dim_value, tq):
    H, dk, dv = num_heads, dim_key, dim_value
    T, D = x_ref.shape[1], x_ref.shape[2]
    b = pl.program_id(0)
    qi = pl.program_id(1)
    valid_len = len_ref[b]                                          # scalar (SMEM)

    # ---- fused Q/K/V projection for the whole sequence, once per batch ----
    @pl.when(qi == 0)
    def _():
        x2 = x_ref[0].astype(COMPUTE_DTYPE)                         # (T, D)
        qkv = jnp.dot(x2, wqkv_ref[...],
                      preferred_element_type=jnp.float32) + bqkv_ref[...]
        hdk = H * dk
        for h in range(H):                                          # cheap split
            q_scr[h] = qkv[:, h * dk:(h + 1) * dk].astype(COMPUTE_DTYPE)
            k_scr[h] = qkv[:, hdk + h * dk: hdk + (h + 1) * dk].astype(COMPUTE_DTYPE)
            v_scr[h] = qkv[:, 2 * hdk + h * dv: 2 * hdk + (h + 1) * dv].astype(COMPUTE_DTYPE)

    q_start = pl.multiple_of(qi * tq, tq)
    x_tile = x_ref[0, pl.ds(q_start, tq), :]                        # (tq, D) f32 residual
    q_h = q_scr[:, pl.ds(q_start, tq), :]                           # (H, tq, dk) bf16

    # ---- scores + softmax (f32 statistics, exact normalization) ----
    inv_temp = 1.0 / math.sqrt(float(dk))
    s = jnp.einsum('hqd,hkd->hqk', q_h, k_scr[...],
                   preferred_element_type=jnp.float32) * inv_temp   # (H, tq, T)

    key_pos = jax.lax.broadcasted_iota(jnp.int32, (1, 1, T), 2)
    s = jnp.where(key_pos >= valid_len, MASK_VALUE, s)              # finite mask
    s_max = jnp.max(s, axis=-1, keepdims=True)
    e = jnp.exp(s - s_max)
    p = e * (1.0 / jnp.sum(e, axis=-1, keepdims=True))              # exact softmax
    attn_ref[...] = p[:, None, :, :].astype(attn_ref.dtype)         # (H,1,tq,T) bf16

    # ---- context + single fused output-projection GEMM ----
    ctx = jnp.einsum('hqk,hkd->hqd', p.astype(COMPUTE_DTYPE), v_scr[...],
                     preferred_element_type=jnp.float32)            # (H, tq, dv)
    ctx2 = jnp.concatenate([ctx[h] for h in range(H)], axis=-1)     # (tq, H*dv)
    o = jnp.dot(ctx2.astype(COMPUTE_DTYPE), wo_ref[...],
                preferred_element_type=jnp.float32) + bo_ref[...]   # (tq, D)

    y = _layer_norm(o + x_tile, ga_ref[...], ba_ref[...])
    q_pos = jax.lax.broadcasted_iota(jnp.int32, (tq, 1), 0) + q_start
    non_pad = (q_pos < valid_len).astype(jnp.float32)               # (tq, 1)
    y = y * non_pad

    # ---- position-wise FFN (1x1 convs == linears) + residual + LN + mask ----
    h1 = jnp.dot(y.astype(COMPUTE_DTYPE), w1_ref[...],
                 preferred_element_type=jnp.float32) + b1_ref[...]
    h1 = jnp.maximum(h1, 0.0)                                       # ReLU
    z = jnp.dot(h1.astype(COMPUTE_DTYPE), w2_ref[...],
                preferred_element_type=jnp.float32) + b2_ref[...]
    z = _layer_norm(z + y, gf_ref[...], bf_ref[...])
    out_ref[0] = z * non_pad


def _choose_q_tile(t):
    if t <= 512:
        return t
    for tq in (256, 128):
        if t % tq == 0:
            return tq
    return t          # ragged long T: fall back to one full-T tile


def encoder_layer(x, lp, lengths, num_heads, dim_key, dim_value):
    B, T, D = x.shape
    H, dk, dv = num_heads, dim_key, dim_value
    Di = lp["w1"].shape[1]
    Ntot = H * (2 * dk + dv)
    tq = _choose_q_tile(T)
    nq = T // tq

    # Host-side one-time weight fusion/casts; biases / LN params stay f32.
    wqkv = jnp.concatenate([lp["wq"], lp["wk"], lp["wv"]], axis=1).astype(COMPUTE_DTYPE)
    bqkv = jnp.concatenate([lp["bq"], lp["bk"], lp["bv"]], axis=1)
    wo = lp["wo"].astype(COMPUTE_DTYPE)                    # (H*dv, D)
    w1 = lp["w1"].astype(COMPUTE_DTYPE)
    w2 = lp["w2"].astype(COMPUTE_DTYPE)

    def const(shape):   # constant block index => weight stays resident in VMEM
        return pl.BlockSpec(shape, lambda b, q, lens: (0,) * len(shape))

    grid_spec = pltpu.PrefetchScalarGridSpec(
        num_scalar_prefetch=1,
        grid=(B, nq),
        in_specs=[
            pl.BlockSpec((1, T, D), lambda b, q, lens: (b, 0, 0)),   # x (per batch)
            const((D, Ntot)), const((1, Ntot)),                      # fused Wqkv, bqkv
            const((H * dv, D)), const((1, D)),                       # Wo, bo
            const((1, D)), const((1, D)),                            # ln_attn g/b
            const((D, Di)), const((1, Di)),                          # W1, b1
            const((Di, D)), const((1, D)),                           # W2, b2
            const((1, D)), const((1, D)),                            # ln_ffn g/b
        ],
        out_specs=[
            pl.BlockSpec((1, tq, D), lambda b, q, lens: (b, q, 0)),
            pl.BlockSpec((H, 1, tq, T), lambda b, q, lens: (0, b, q, 0)),
        ],
        scratch_shapes=[
            pltpu.VMEM((H, T, dk), COMPUTE_DTYPE),                   # Q (per head)
            pltpu.VMEM((H, T, dk), COMPUTE_DTYPE),                   # K
            pltpu.VMEM((H, T, dv), COMPUTE_DTYPE),                   # V
        ],
    )

    flops = (2 * B * T * D * Ntot                 # fused QKV projection
             + 2 * B * H * T * T * (dk + dv)      # scores + context
             + 2 * B * T * (H * dv) * D           # output projection
             + 4 * B * T * D * Di)                # FFN
    cost = pl.CostEstimate(
        flops=int(flops),
        transcendentals=int(B * H * T * T + 2 * B * T),
        bytes_accessed=int(4 * 2 * B * T * D                         # x in + out
                           + 2 * H * B * T * T                        # bf16 attn out
                           + 2 * (D * Ntot + H * dv * D + 2 * D * Di)  # bf16 weights
                           + 4 * (Ntot + 6 * D + Di) + 4 * B))

    out, attn = pl.pallas_call(
        partial(_encoder_layer_kernel, num_heads=H, dim_key=dk, dim_value=dv, tq=tq),
        out_shape=(jax.ShapeDtypeStruct((B, T, D), jnp.float32),
                   jax.ShapeDtypeStruct((H, B, T, T), ATTN_DTYPE)),
        grid_spec=grid_spec,
        compiler_params=pltpu.CompilerParams(
            dimension_semantics=("parallel", "arbitrary"),
            vmem_limit_bytes=_vmem_limit_bytes()),
        cost_estimate=cost,
    )(lengths, x, wqkv, bqkv, wo, lp["bo"],
      lp["ln_attn_g"], lp["ln_attn_b"],
      w1, lp["b1"], w2, lp["b2"],
      lp["ln_ffn_g"], lp["ln_ffn_b"])
    return out, attn


# ----------------------------------------------------------------------------
# Parameter construction (deterministic) and full encoder forward
# ----------------------------------------------------------------------------
def make_positional_encoding(dim_model, max_len):
    position = jnp.arange(max_len, dtype=jnp.float32)[:, None]
    exp_term = jnp.exp(jnp.arange(0, dim_model, 2, dtype=jnp.float32)
                       * -(math.log(10000.0) / dim_model))
    pe = jnp.zeros((max_len, dim_model), jnp.float32)
    pe = pe.at[:, 0::2].set(jnp.sin(position * exp_term))
    pe = pe.at[:, 1::2].set(jnp.cos(position * exp_term))
    return pe


def make_params(key, num_layers, num_heads, dim_model, dim_key, dim_value,
                dim_input, dim_inner, src_max_length):
    # weights stored as (in_dim, out_dim) so kernels compute x @ W directly
    def lin(k, din, dout, scale):
        return (jax.random.normal(k, (din, dout), jnp.float32) * scale,
                jnp.zeros((1, dout), jnp.float32))

    keys = jax.random.split(key, 1 + 5 * num_layers)
    in_w, in_b = lin(keys[0], dim_input, dim_model, 1.0 / math.sqrt(dim_input))
    params = {
        "in_w": in_w, "in_b": in_b,
        "ln_in_g": jnp.ones((1, dim_model), jnp.float32),
        "ln_in_b": jnp.zeros((1, dim_model), jnp.float32),
        "pe": make_positional_encoding(dim_model, src_max_length),
        "layers": [],
    }
    for l in range(num_layers):
        k0, k1, k2, k3, k4 = keys[1 + 5 * l: 1 + 5 * (l + 1)]
        wq, bq = lin(k0, dim_model, num_heads * dim_key,
                     math.sqrt(2.0 / (dim_model + dim_key)))
        wk, bk = lin(k1, dim_model, num_heads * dim_key,
                     math.sqrt(2.0 / (dim_model + dim_key)))
        wv, bv = lin(k2, dim_model, num_heads * dim_value,
                     math.sqrt(2.0 / (dim_model + dim_value)))
        wo, bo = lin(k3, num_heads * dim_value, dim_model,
                     1.0 / math.sqrt(num_heads * dim_value))
        k4a, k4b = jax.random.split(k4)
        w1, b1 = lin(k4a, dim_model, dim_inner, 1.0 / math.sqrt(dim_model))
        w2, b2 = lin(k4b, dim_inner, dim_model, 1.0 / math.sqrt(dim_inner))
        params["layers"].append({
            "wq": wq, "bq": bq, "wk": wk, "bk": bk, "wv": wv, "bv": bv,
            "wo": wo, "bo": bo,
            "ln_attn_g": jnp.ones((1, dim_model), jnp.float32),
            "ln_attn_b": jnp.zeros((1, dim_model), jnp.float32),
            "w1": w1, "b1": b1, "w2": w2, "b2": b2,
            "ln_ffn_g": jnp.ones((1, dim_model), jnp.float32),
            "ln_ffn_b": jnp.zeros((1, dim_model), jnp.float32),
        })
    return params


def encoder_forward(params, padded_input, input_lengths,
                    num_heads, dim_key, dim_value):
    B, T, _ = padded_input.shape
    lengths = input_lengths.astype(jnp.int32)

    enc = input_proj(padded_input, params["in_w"], params["in_b"],
                     params["ln_in_g"], params["ln_in_b"], params["pe"][:T])

    attn_list = []
    for lp in params["layers"]:
        enc, attn = encoder_layer(enc, lp, lengths, num_heads, dim_key, dim_value)
        # attn is already heads-major (H, B, T, T): torch layout (H*B, T, T)
        # with index h*B + b is a pure reshape (no HBM transpose pass).
        attn_list.append(attn.reshape(num_heads * B, T, T))
    return enc, attn_list


if __name__ == "__main__":
    # Small, module-consistent shapes
    B, T = 2, 8
    num_layers, num_heads = 2, 2
    dim_input, dim_model = 16, 32
    dim_key, dim_value = 16, 16
    dim_inner = 64
    src_max_length = 32

    root = jax.random.PRNGKey(0)
    k_x, k_p = jax.random.split(root)
    padded_input = jax.random.normal(k_x, (B, T, dim_input), jnp.float32)
    input_lengths = jnp.array([T, 5], dtype=jnp.int32)

    params = make_params(k_p, num_layers, num_heads, dim_model, dim_key,
                         dim_value, dim_input, dim_inner, src_max_length)

    fwd = jax.jit(encoder_forward, static_argnums=(3, 4, 5))
    enc_out, attn_list = fwd(params, padded_input, input_lengths,
                             num_heads, dim_key, dim_value)
    jax.block_until_ready(enc_out)
    for a in attn_list:
        jax.block_until_ready(a)

    assert enc_out.shape == (B, T, dim_model)
    assert len(attn_list) == num_layers
    assert all(a.shape == (num_heads * B, T, T) for a in attn_list)
    assert bool(jnp.all(jnp.isfinite(enc_out)))
    for a in attn_list:
        af = a.astype(jnp.float32)
        assert bool(jnp.all(jnp.isfinite(af)))
        # exact softmax normalization; only bf16 storage rounding remains
        assert float(jnp.max(jnp.abs(jnp.sum(af, axis=-1) - 1.0))) < 2e-2
    # padded rows (batch 1, t >= 5) must be exactly zeroed by the non-pad mask
    assert float(jnp.max(jnp.abs(enc_out[1, 5:]))) == 0.0
    print("KERNEL_OK")
</pallas_src>

<mosaic_0001>
module attributes {stable_mosaic.version = 11 : i64} {
  func.func @_input_proj_kernel(%arg0: i32, %arg1: i32, %arg2: memref<1x8x16xf32, #tpu.memory_space<vmem>>, %arg3: memref<16x32xbf16, #tpu.memory_space<vmem>>, %arg4: memref<1x32xf32, #tpu.memory_space<vmem>>, %arg5: memref<1x32xf32, #tpu.memory_space<vmem>>, %arg6: memref<1x32xf32, #tpu.memory_space<vmem>>, %arg7: memref<8x32xf32, #tpu.memory_space<vmem>>, %arg8: memref<1x8x32xf32, #tpu.memory_space<vmem>>) attributes {dimension_semantics = [#tpu.dimension_semantics<parallel>, #tpu.dimension_semantics<parallel>], iteration_bounds = array<i64: 2, 1>, scalar_prefetch = 0 : i64, scratch_operands = 0 : i64, tpu.core_type = #tpu.core_type<tc>, window_params = [{transform_indices = @transform_0, window_bounds = array<i64: 1, 8, 16>}, {pipeline_mode = #tpu.pipeline_mode<synchronous>, transform_indices = @transform_1, window_bounds = array<i64: 16, 32>}, {pipeline_mode = #tpu.pipeline_mode<synchronous>, transform_indices = @transform_2, window_bounds = array<i64: 1, 32>}, {pipeline_mode = #tpu.pipeline_mode<synchronous>, transform_indices = @transform_3, window_bounds = array<i64: 1, 32>}, {pipeline_mode = #tpu.pipeline_mode<synchronous>, transform_indices = @transform_4, window_bounds = array<i64: 1, 32>}, {transform_indices = @transform_5, window_bounds = array<i64: 8, 32>}, {transform_indices = @transform_6, window_bounds = array<i64: 1, 8, 32>}]} {
    %c0 = arith.constant 0 : index
    %c0_0 = arith.constant 0 : index
    %c0_1 = arith.constant 0 : index
    %0 = vector.load %arg2[%c0, %c0_0, %c0_1] : memref<1x8x16xf32, #tpu.memory_space<vmem>>, vector<1x8x16xf32>
    %1 = vector.shape_cast %0 : vector<1x8x16xf32> to vector<8x16xf32>
    %2 = arith.truncf %1 : vector<8x16xf32> to vector<8x16xbf16>
    %c0_2 = arith.constant 0 : index
    %c0_3 = arith.constant 0 : index
    %3 = vector.load %arg3[%c0_2, %c0_3] : memref<16x32xbf16, #tpu.memory_space<vmem>>, vector<16x32xbf16>
    %cst = arith.constant dense<0.000000e+00> : vector<8x32xf32>
    %4 = tpu.matmul %2, %3, %cst {dimension_numbers = #tpu.dot_dimension_numbers<[1], [0], [0], [1], [0, 0, 1, 1], [], []>} : vector<8x16xbf16>, vector<16x32xbf16>, vector<8x32xf32> -> vector<8x32xf32>
    %c0_4 = arith.constant 0 : index
    %c0_5 = arith.constant 0 : index
    %5 = vector.load %arg4[%c0_4, %c0_5] : memref<1x32xf32, #tpu.memory_space<vmem>>, vector<1x32xf32>
    %6 = vector.broadcast %5 : vector<1x32xf32> to vector<8x32xf32>
    %7 = arith.addf %4, %6 : vector<8x32xf32>
    %c0_6 = arith.constant 0 : index
    %c0_7 = arith.constant 0 : index
    %8 = vector.load %arg5[%c0_6, %c0_7] : memref<1x32xf32, #tpu.memory_space<vmem>>, vector<1x32xf32>
    %c0_8 = arith.constant 0 : index
    %c0_9 = arith.constant 0 : index
    %9 = vector.load %arg6[%c0_8, %c0_9] : memref<1x32xf32, #tpu.memory_space<vmem>>, vector<1x32xf32>
    %cst_10 = arith.constant dense<0.000000e+00> : vector<8xf32>
    %10 = vector.multi_reduction <add>, %7, %cst_10 [1] : vector<8x32xf32> to vector<8xf32>
    %11 = vector.shape_cast %10 : vector<8xf32> to vector<8x1xf32>
    %cst_11 = arith.constant 3.200000e+01 : f32
    %12 = vector.broadcast %cst_11 : f32 to vector<8x1xf32>
    %13 = arith.divf %11, %12 : vector<8x1xf32>
    %14 = vector.broadcast %13 : vector<8x1xf32> to vector<8x32xf32>
    %15 = arith.subf %7, %14 : vector<8x32xf32>
    %16 = arith.mulf %15, %15 : vector<8x32xf32>
    %cst_12 = arith.constant dense<0.000000e+00> : vector<8xf32>
    %17 = vector.multi_reduction <add>, %16, %cst_12 [1] : vector<8x32xf32> to vector<8xf32>
    %18 = vector.shape_cast %17 : vector<8xf32> to vector<8x1xf32>
    %cst_13 = arith.constant 3.200000e+01 : f32
    %19 = vector.broadcast %cst_13 : f32 to vector<8x1xf32>
    %20 = arith.divf %18, %19 : vector<8x1xf32>
    %21 = vector.broadcast %13 : vector<8x1xf32> to vector<8x32xf32>
    %22 = arith.subf %7, %21 : vector<8x32xf32>
    %cst_14 = arith.constant 9.99999974E-6 : f32
    %23 = vector.broadcast %cst_14 : f32 to vector<8x1xf32>
    %24 = arith.addf %20, %23 : vector<8x1xf32>
    %25 = math.rsqrt %24 : vector<8x1xf32>
    %26 = vector.broadcast %25 : vector<8x1xf32> to vector<8x32xf32>
    %27 = arith.mulf %22, %26 : vector<8x32xf32>
    %28 = vector.broadcast %8 : vector<1x32xf32> to vector<8x32xf32>
    %29 = arith.mulf %27, %28 : vector<8x32xf32>
    %30 = vector.broadcast %9 : vector<1x32xf32> to vector<8x32xf32>
    %31 = arith.addf %29, %30 : vector<8x32xf32>
    %c0_15 = arith.constant 0 : index
    %c0_16 = arith.constant 0 : index
    %32 = vector.load %arg7[%c0_15, %c0_16] : memref<8x32xf32, #tpu.memory_space<vmem>>, vector<8x32xf32>
    %33 = arith.addf %31, %32 : vector<8x32xf32>
    %c0_17 = arith.constant 0 : index
    %c0_18 = arith.constant 0 : index
    %c0_19 = arith.constant 0 : index
    %34 = vector.load %arg8[%c0_17, %c0_18, %c0_19] : memref<1x8x32xf32, #tpu.memory_space<vmem>>, vector<1x8x32xf32>
    %35 = vector.shape_cast %34 : vector<1x8x32xf32> to vector<8x32xf32>
    %36 = vector.shape_cast %33 : vector<8x32xf32> to vector<1x8x32xf32>
    tpu.vector_store %arg8[%c0_17, %c0_18, %c0_19], %36 {strides = array<i32>} : memref<1x8x32xf32, #tpu.memory_space<vmem>>, vector<1x8x32xf32>,
    return
  }
  func.func @transform_0(%arg0: i32, %arg1: i32) -> (i32, i32, i32) {
    %c0_i32 = arith.constant 0 : i32
    %c0_i32_0 = arith.constant 0 : i32
    return %arg0, %arg1, %c0_i32 : i32, i32, i32
  }
  func.func @transform_1(%arg0: i32, %arg1: i32) -> (i32, i32) {
    %c0_i32 = arith.constant 0 : i32
    %c0_i32_0 = arith.constant 0 : i32
    %c0_i32_1 = arith.constant 0 : i32
    return %c0_i32, %c0_i32_0 : i32, i32
  }
  func.func @transform_2(%arg0: i32, %arg1: i32) -> (i32, i32) {
    %c0_i32 = arith.constant 0 : i32
    %c0_i32_0 = arith.constant 0 : i32
    %c0_i32_1 = arith.constant 0 : i32
    return %c0_i32, %c0_i32_0 : i32, i32
  }
  func.func @transform_3(%arg0: i32, %arg1: i32) -> (i32, i32) {
    %c0_i32 = arith.constant 0 : i32
    %c0_i32_0 = arith.constant 0 : i32
    %c0_i32_1 = arith.constant 0 : i32
    return %c0_i32, %c0_i32_0 : i32, i32
  }
  func.func @transform_4(%arg0: i32, %arg1: i32) -> (i32, i32) {
    %c0_i32 = arith.constant 0 : i32
    %c0_i32_0 = arith.constant 0 : i32
    %c0_i32_1 = arith.constant 0 : i32
    return %c0_i32, %c0_i32_0 : i32, i32
  }
  func.func @transform_5(%arg0: i32, %arg1: i32) -> (i32, i32) {
    %c0_i32 = arith.constant 0 : i32
    %c0_i32_0 = arith.constant 0 : i32
    return %arg1, %c0_i32 : i32, i32
  }
  func.func @transform_6(%arg0: i32, %arg1: i32) -> (i32, i32, i32) {
    %c0_i32 = arith.constant 0 : i32
    %c0_i32_0 = arith.constant 0 : i32
    return %arg0, %arg1, %c0_i32 : i32, i32, i32
  }
}

module attributes {stable_mosaic.version = 11 : i64} {
  func.func @_encoder_layer_kernel(%arg0: i32, %arg1: i32, %arg2: memref<2xi32, #tpu.memory_space<smem>>, %arg3: memref<1x8x32xf32, #tpu.memory_space<vmem>>, %arg4: memref<32x96xbf16, #tpu.memory_space<vmem>>, %arg5: memref<1x96xf32, #tpu.memory_space<vmem>>, %arg6: memref<32x32xbf16, #tpu.memory_space<vmem>>, %arg7: memref<1x32xf32, #tpu.memory_space<vmem>>, %arg8: memref<1x32xf32, #tpu.memory_space<vmem>>, %arg9: memref<1x32xf32, #tpu.memory_space<vmem>>, %arg10: memref<32x64xbf16, #tpu.memory_space<vmem>>, %arg11: memref<1x64xf32, #tpu.memory_space<vmem>>, %arg12: memref<64x32xbf16, #tpu.memory_space<vmem>>, %arg13: memref<1x32xf32, #tpu.memory_space<vmem>>, %arg14: memref<1x32xf32, #tpu.memory_space<vmem>>, %arg15: memref<1x32xf32, #tpu.memory_space<vmem>>, %arg16: memref<1x8x32xf32, #tpu.memory_space<vmem>>, %arg17: memref<2x1x8x8xbf16, #tpu.memory_space<vmem>>, %arg18: memref<2x8x16xbf16, #tpu.memory_space<vmem>>, %arg19: memref<2x8x16xbf16, #tpu.memory_space<vmem>>, %arg20: memref<2x8x16xbf16, #tpu.memory_space<vmem>>) attributes {dimension_semantics = [#tpu.dimension_semantics<parallel>, #tpu.dimension_semantics<arbitrary>], iteration_bounds = array<i64: 2, 1>, scalar_prefetch = 1 : i64, scratch_operands = 3 : i64, tpu.core_type = #tpu.core_type<tc>, window_params = [{transform_indices = @transform_0, window_bounds = array<i64: 1, 8, 32>}, {pipeline_mode = #tpu.pipeline_mode<synchronous>, transform_indices = @transform_1, window_bounds = array<i64: 32, 96>}, {pipeline_mode = #tpu.pipeline_mode<synchronous>, transform_indices = @transform_2, window_bounds = array<i64: 1, 96>}, {pipeline_mode = #tpu.pipeline_mode<synchronous>, transform_indices = @transform_3, window_bounds = array<i64: 32, 32>}, {pipeline_mode = #tpu.pipeline_mode<synchronous>, transform_indices = @transform_4, window_bounds = array<i64: 1, 32>}, {pipeline_mode = #tpu.pipeline_mode<synchronous>, transform_indices = @transform_5, window_bounds = array<i64: 1, 32>}, {pipeline_mode = #tpu.pipeline_mode<synchronous>, transform_indices = @transform_6, window_bounds = array<i64: 1, 32>}, {pipeline_mode = #tpu.pipeline_mode<synchronous>, transform_indices = @transform_7, window_bounds = array<i64: 32, 64>}, {pipeline_mode = #tpu.pipeline_mode<synchronous>, transform_indices = @transform_8, window_bounds = array<i64: 1, 64>}, {pipeline_mode = #tpu.pipeline_mode<synchronous>, transform_indices = @transform_9, window_bounds = array<i64: 64, 32>}, {pipeline_mode = #tpu.pipeline_mode<synchronous>, transform_indices = @transform_10, window_bounds = array<i64: 1, 32>}, {pipeline_mode = #tpu.pipeline_mode<synchronous>, transform_indices = @transform_11, window_bounds = array<i64: 1, 32>}, {pipeline_mode = #tpu.pipeline_mode<synchronous>, transform_indices = @transform_12, window_bounds = array<i64: 1, 32>}, {transform_indices = @transform_13, window_bounds = array<i64: 1, 8, 32>}, {transform_indices = @transform_14, window_bounds = array<i64: 2, 1, 8, 8>}]} {
    %0 = arith.index_cast %arg0 : i32 to index
    %1 = memref.load %arg2[%0] : memref<2xi32, #tpu.memory_space<smem>>
    %c0_i32 = arith.constant 0 : i32
    %2 = arith.cmpi eq, %arg1, %c0_i32 : i32
    %3 = arith.extui %2 : i1 to i32
    %c0_i32_0 = arith.constant 0 : i32
    %4 = arith.cmpi ne, %3, %c0_i32_0 : i32
    scf.if %4 {
      %c0_57 = arith.constant 0 : index
      %c0_58 = arith.constant 0 : index
      %c0_59 = arith.constant 0 : index
      %129 = vector.load %arg3[%c0_57, %c0_58, %c0_59] : memref<1x8x32xf32, #tpu.memory_space<vmem>>, vector<1x8x32xf32>
      %130 = vector.shape_cast %129 : vector<1x8x32xf32> to vector<8x32xf32>
      %131 = arith.truncf %130 : vector<8x32xf32> to vector<8x32xbf16>
      %c0_60 = arith.constant 0 : index
      %c0_61 = arith.constant 0 : index
      %132 = vector.load %arg4[%c0_60, %c0_61] : memref<32x96xbf16, #tpu.memory_space<vmem>>, vector<32x96xbf16>
      %cst_62 = arith.constant dense<0.000000e+00> : vector<8x96xf32>
      %133 = tpu.matmul %131, %132, %cst_62 {dimension_numbers = #tpu.dot_dimension_numbers<[1], [0], [0], [1], [0, 0, 1, 1], [], []>} : vector<8x32xbf16>, vector<32x96xbf16>, vector<8x96xf32> -> vector<8x96xf32>
      %c0_63 = arith.constant 0 : index
      %c0_64 = arith.constant 0 : index
      %134 = vector.load %arg5[%c0_63, %c0_64] : memref<1x96xf32, #tpu.memory_space<vmem>>, vector<1x96xf32>
      %135 = vector.broadcast %134 : vector<1x96xf32> to vector<8x96xf32>
      %136 = arith.addf %133, %135 : vector<8x96xf32>
      %137 = vector.extract_strided_slice %136 {offsets = [0, 0], sizes = [8, 16], strides = [1, 1]} : vector<8x96xf32> to vector<8x16xf32>
      %138 = arith.truncf %137 : vector<8x16xf32> to vector<8x16xbf16>
      %c0_65 = arith.constant 0 : index
      %c0_66 = arith.constant 0 : index
      %c0_67 = arith.constant 0 : index
      %139 = vector.load %arg18[%c0_65, %c0_66, %c0_67] : memref<2x8x16xbf16, #tpu.memory_space<vmem>>, vector<1x8x16xbf16>
      %140 = vector.shape_cast %139 : vector<1x8x16xbf16> to vector<8x16xbf16>
      %141 = vector.shape_cast %138 : vector<8x16xbf16> to vector<1x8x16xbf16>
      tpu.vector_store %arg18[%c0_65, %c0_66, %c0_67], %141 {strides = array<i32>} : memref<2x8x16xbf16, #tpu.memory_space<vmem>>, vector<1x8x16xbf16>,
      %142 = vector.extract_strided_slice %136 {offsets = [0, 32], sizes = [8, 16], strides = [1, 1]} : vector<8x96xf32> to vector<8x16xf32>
      %143 = arith.truncf %142 : vector<8x16xf32> to vector<8x16xbf16>
      %c0_68 = arith.constant 0 : index
      %c0_69 = arith.constant 0 : index
      %c0_70 = arith.constant 0 : index
      %144 = vector.load %arg19[%c0_68, %c0_69, %c0_70] : memref<2x8x16xbf16, #tpu.memory_space<vmem>>, vector<1x8x16xbf16>
      %145 = vector.shape_cast %144 : vector<1x8x16xbf16> to vector<8x16xbf16>
      %146 = vector.shape_cast %143 : vector<8x16xbf16> to vector<1x8x16xbf16>
      tpu.vector_store %arg19[%c0_68, %c0_69, %c0_70], %146 {strides = array<i32>} : memref<2x8x16xbf16, #tpu.memory_space<vmem>>, vector<1x8x16xbf16>,
      %147 = vector.extract_strided_slice %136 {offsets = [0, 64], sizes = [8, 16], strides = [1, 1]} : vector<8x96xf32> to vector<8x16xf32>
      %148 = arith.truncf %147 : vector<8x16xf32> to vector<8x16xbf16>
      %c0_71 = arith.constant 0 : index
      %c0_72 = arith.constant 0 : index
      %c0_73 = arith.constant 0 : index
      %149 = vector.load %arg20[%c0_71, %c0_72, %c0_73] : memref<2x8x16xbf16, #tpu.memory_space<vmem>>, vector<1x8x16xbf16>
      %150 = vector.shape_cast %149 : vector<1x8x16xbf16> to vector<8x16xbf16>
      %151 = vector.shape_cast %148 : vector<8x16xbf16> to vector<1x8x16xbf16>
      tpu.vector_store %arg20[%c0_71, %c0_72, %c0_73], %151 {strides = array<i32>} : memref<2x8x16xbf16, #tpu.memory_space<vmem>>, vector<1x8x16xbf16>,
      %152 = vector.extract_strided_slice %136 {offsets = [0, 16], sizes = [8, 16], strides = [1, 1]} : vector<8x96xf32> to vector<8x16xf32>
      %153 = arith.truncf %152 : vector<8x16xf32> to vector<8x16xbf16>
      %c1 = arith.constant 1 : index
      %c0_74 = arith.constant 0 : index
      %c0_75 = arith.constant 0 : index
      %154 = vector.load %arg18[%c1, %c0_74, %c0_75] : memref<2x8x16xbf16, #tpu.memory_space<vmem>>, vector<1x8x16xbf16>
      %155 = vector.shape_cast %154 : vector<1x8x16xbf16> to vector<8x16xbf16>
      %156 = vector.shape_cast %153 : vector<8x16xbf16> to vector<1x8x16xbf16>
      tpu.vector_store %arg18[%c1, %c0_74, %c0_75], %156 {strides = array<i32>} : memref<2x8x16xbf16, #tpu.memory_space<vmem>>, vector<1x8x16xbf16>,
      %157 = vector.extract_strided_slice %136 {offsets = [0, 48], sizes = [8, 16], strides = [1, 1]} : vector<8x96xf32> to vector<8x16xf32>
      %158 = arith.truncf %157 : vector<8x16xf32> to vector<8x16xbf16>
      %c1_76 = arith.constant 1 : index
      %c0_77 = arith.constant 0 : index
      %c0_78 = arith.constant 0 : index
      %159 = vector.load %arg19[%c1_76, %c0_77, %c0_78] : memref<2x8x16xbf16, #tpu.memory_space<vmem>>, vector<1x8x16xbf16>
      %160 = vector.shape_cast %159 : vector<1x8x16xbf16> to vector<8x16xbf16>
      %161 = vector.shape_cast %158 : vector<8x16xbf16> to vector<1x8x16xbf16>
      tpu.vector_store %arg19[%c1_76, %c0_77, %c0_78], %161 {strides = array<i32>} : memref<2x8x16xbf16, #tpu.memory_space<vmem>>, vector<1x8x16xbf16>,
      %162 = vector.extract_strided_slice %136 {offsets = [0, 80], sizes = [8, 16], strides = [1, 1]} : vector<8x96xf32> to vector<8x16xf32>
      %163 = arith.truncf %162 : vector<8x16xf32> to vector<8x16xbf16>
      %c1_79 = arith.constant 1 : index
      %c0_80 = arith.constant 0 : index
      %c0_81 = arith.constant 0 : index
      %164 = vector.load %arg20[%c1_79, %c0_80, %c0_81] : memref<2x8x16xbf16, #tpu.memory_space<vmem>>, vector<1x8x16xbf16>
      %165 = vector.shape_cast %164 : vector<1x8x16xbf16> to vector<8x16xbf16>
      %166 = vector.shape_cast %163 : vector<8x16xbf16> to vector<1x8x16xbf16>
      tpu.vector_store %arg20[%c1_79, %c0_80, %c0_81], %166 {strides = array<i32>} : memref<2x8x16xbf16, #tpu.memory_space<vmem>>, vector<1x8x16xbf16>,
    } else {
    }
    %c8_i32 = arith.constant 8 : i32
    %5 = arith.muli %arg1, %c8_i32 : i32
    %6 = tpu.assume_multiple %5, 8 : i32
    %c0 = arith.constant 0 : index
    %7 = arith.index_cast %6 : i32 to index
    %c0_1 = arith.constant 0 : index
    %8 = vector.load %arg3[%c0, %7, %c0_1] : memref<1x8x32xf32, #tpu.memory_space<vmem>>, vector<1x8x32xf32>
    %9 = vector.shape_cast %8 : vector<1x8x32xf32> to vector<8x32xf32>
    %c0_2 = arith.constant 0 : index
    %10 = arith.index_cast %6 : i32 to index
    %c0_3 = arith.constant 0 : index
    %11 = vector.load %arg18[%c0_2, %10, %c0_3] : memref<2x8x16xbf16, #tpu.memory_space<vmem>>, vector<2x8x16xbf16>
    %c0_4 = arith.constant 0 : index
    %c0_5 = arith.constant 0 : index
    %c0_6 = arith.constant 0 : index
    %12 = vector.load %arg19[%c0_4, %c0_5, %c0_6] : memref<2x8x16xbf16, #tpu.memory_space<vmem>>, vector<2x8x16xbf16>
    "tpu.trace_start"() <{level = 10 : i32, message = "hqd,hkd->hqk"}> : () -> ()
    %cst = arith.constant dense<0.000000e+00> : vector<2x8x8xf32>
    %13 = tpu.matmul %11, %12, %cst {dimension_numbers = #tpu.dot_dimension_numbers<[2], [2], [1], [1], [0, 0, 0, 1, 1, 1], [0], [0]>} : vector<2x8x16xbf16>, vector<2x8x16xbf16>, vector<2x8x8xf32> -> vector<2x8x8xf32>
    "tpu.trace_stop"() : () -> ()
    %cst_7 = arith.constant 2.500000e-01 : f32
    %14 = vector.broadcast %cst_7 : f32 to vector<2x8x8xf32>
    %15 = arith.mulf %13, %14 : vector<2x8x8xf32>
    %16 = tpu.iota {dimensions = array<i32: 2>} : vector<1x1x8xi32>
    %17 = vector.broadcast %1 : i32 to vector<1x1x8xi32>
    %18 = arith.cmpi sge, %16, %17 : vector<1x1x8xi32>
    %cst_8 = arith.constant -1.000000e+30 : f32
    %19 = vector.shape_cast %18 : vector<1x1x8xi1> to vector<1x1x8xi1>
    %20 = vector.broadcast %19 : vector<1x1x8xi1> to vector<2x8x8xi1>
    %21 = vector.broadcast %cst_8 : f32 to vector<2x8x8xf32>
    %22 = arith.select %20, %21, %15 : vector<2x8x8xi1>, vector<2x8x8xf32>
    %cst_9 = arith.constant dense<0xFF800000> : vector<2x8xf32>
    %23 = vector.multi_reduction <maximumf>, %22, %cst_9 [2] : vector<2x8x8xf32> to vector<2x8xf32>
    %24 = vector.shape_cast %23 : vector<2x8xf32> to vector<2x8x1xf32>
    %25 = vector.broadcast %24 : vector<2x8x1xf32> to vector<2x8x8xf32>
    %26 = arith.subf %22, %25 : vector<2x8x8xf32>
    %27 = math.exp %26 : vector<2x8x8xf32>
    %cst_10 = arith.constant dense<0.000000e+00> : vector<2x8xf32>
    %28 = vector.multi_reduction <add>, %27, %cst_10 [2] : vector<2x8x8xf32> to vector<2x8xf32>
    %29 = vector.shape_cast %28 : vector<2x8xf32> to vector<2x8x1xf32>
    %cst_11 = arith.constant 1.000000e+00 : f32
    %30 = vector.broadcast %cst_11 : f32 to vector<2x8x1xf32>
    %31 = arith.divf %30, %29 : vector<2x8x1xf32>
    %32 = vector.broadcast %31 : vector<2x8x1xf32> to vector<2x8x8xf32>
    %33 = arith.mulf %27, %32 : vector<2x8x8xf32>
    %34 = vector.shape_cast %33 : vector<2x8x8xf32> to vector<2x1x8x8xf32>
    %35 = arith.truncf %34 : vector<2x1x8x8xf32> to vector<2x1x8x8xbf16>
    %c0_12 = arith.constant 0 : index
    %c0_13 = arith.constant 0 : index
    %c0_14 = arith.constant 0 : index
    %c0_15 = arith.constant 0 : index
    %36 = vector.load %arg17[%c0_12, %c0_13, %c0_14, %c0_15] : memref<2x1x8x8xbf16, #tpu.memory_space<vmem>>, vector<2x1x8x8xbf16>
    tpu.vector_store %arg17[%c0_12, %c0_13, %c0_14, %c0_15], %35 {strides = array<i32>} : memref<2x1x8x8xbf16, #tpu.memory_space<vmem>>, vector<2x1x8x8xbf16>,
    %37 = arith.truncf %33 : vector<2x8x8xf32> to vector<2x8x8xbf16>
    %c0_16 = arith.constant 0 : index
    %c0_17 = arith.constant 0 : index
    %c0_18 = arith.constant 0 : index
    %38 = vector.load %arg20[%c0_16, %c0_17, %c0_18] : memref<2x8x16xbf16, #tpu.memory_space<vmem>>, vector<2x8x16xbf16>
    "tpu.trace_start"() <{level = 10 : i32, message = "hqk,hkd->hqd"}> : () -> ()
    %cst_19 = arith.constant dense<0.000000e+00> : vector<2x8x16xf32>
    %39 = tpu.matmul %37, %38, %cst_19 {dimension_numbers = #tpu.dot_dimension_numbers<[2], [1], [1], [2], [0, 0, 0, 1, 1, 2], [0], [0]>} : vector<2x8x8xbf16>, vector<2x8x16xbf16>, vector<2x8x16xf32> -> vector<2x8x16xf32>
    "tpu.trace_stop"() : () -> ()
    %40 = vector.extract_strided_slice %39 {offsets = [0, 0, 0], sizes = [1, 8, 16], strides = [1, 1, 1]} : vector<2x8x16xf32> to vector<1x8x16xf32>
    %41 = vector.shape_cast %40 : vector<1x8x16xf32> to vector<8x16xf32>
    %42 = vector.extract_strided_slice %39 {offsets = [1, 0, 0], sizes = [1, 8, 16], strides = [1, 1, 1]} : vector<2x8x16xf32> to vector<1x8x16xf32>
    %43 = vector.shape_cast %42 : vector<1x8x16xf32> to vector<8x16xf32>
    %44 = tpu.concatenate %41, %43 in 1 : vector<8x16xf32>, vector<8x16xf32> -> vector<8x32xf32>
    %45 = arith.truncf %44 : vector<8x32xf32> to vector<8x32xbf16>
    %c0_20 = arith.constant 0 : index
    %c0_21 = arith.constant 0 : index
    %46 = vector.load %arg6[%c0_20, %c0_21] : memref<32x32xbf16, #tpu.memory_space<vmem>>, vector<32x32xbf16>
    %cst_22 = arith.constant dense<0.000000e+00> : vector<8x32xf32>
    %47 = tpu.matmul %45, %46, %cst_22 {dimension_numbers = #tpu.dot_dimension_numbers<[1], [0], [0], [1], [0, 0, 1, 1], [], []>} : vector<8x32xbf16>, vector<32x32xbf16>, vector<8x32xf32> -> vector<8x32xf32>
    %c0_23 = arith.constant 0 : index
    %c0_24 = arith.constant 0 : index
    %48 = vector.load %arg7[%c0_23, %c0_24] : memref<1x32xf32, #tpu.memory_space<vmem>>, vector<1x32xf32>
    %49 = vector.broadcast %48 : vector<1x32xf32> to vector<8x32xf32>
    %50 = arith.addf %47, %49 : vector<8x32xf32>
    %51 = arith.addf %50, %9 : vector<8x32xf32>
    %c0_25 = arith.constant 0 : index
    %c0_26 = arith.constant 0 : index
    %52 = vector.load %arg8[%c0_25, %c0_26] : memref<1x32xf32, #tpu.memory_space<vmem>>, vector<1x32xf32>
    %c0_27 = arith.constant 0 : index
    %c0_28 = arith.constant 0 : index
    %53 = vector.load %arg9[%c0_27, %c0_28] : memref<1x32xf32, #tpu.memory_space<vmem>>, vector<1x32xf32>
    %cst_29 = arith.constant dense<0.000000e+00> : vector<8xf32>
    %54 = vector.multi_reduction <add>, %51, %cst_29 [1] : vector<8x32xf32> to vector<8xf32>
    %55 = vector.shape_cast %54 : vector<8xf32> to vector<8x1xf32>
    %cst_30 = arith.constant 3.200000e+01 : f32
    %56 = vector.broadcast %cst_30 : f32 to vector<8x1xf32>
    %57 = arith.divf %55, %56 : vector<8x1xf32>
    %58 = vector.broadcast %57 : vector<8x1xf32> to vector<8x32xf32>
    %59 = arith.subf %51, %58 : vector<8x32xf32>
    %60 = arith.mulf %59, %59 : vector<8x32xf32>
    %cst_31 = arith.constant dense<0.000000e+00> : vector<8xf32>
    %61 = vector.multi_reduction <add>, %60, %cst_31 [1] : vector<8x32xf32> to vector<8xf32>
    %62 = vector.shape_cast %61 : vector<8xf32> to vector<8x1xf32>
    %cst_32 = arith.constant 3.200000e+01 : f32
    %63 = vector.broadcast %cst_32 : f32 to vector<8x1xf32>
    %64 = arith.divf %62, %63 : vector<8x1xf32>
    %65 = vector.broadcast %57 : vector<8x1xf32> to vector<8x32xf32>
    %66 = arith.subf %51, %65 : vector<8x32xf32>
    %cst_33 = arith.constant 9.99999974E-6 : f32
    %67 = vector.broadcast %cst_33 : f32 to vector<8x1xf32>
    %68 = arith.addf %64, %67 : vector<8x1xf32>
    %69 = math.rsqrt %68 : vector<8x1xf32>
    %70 = vector.broadcast %69 : vector<8x1xf32> to vector<8x32xf32>
    %71 = arith.mulf %66, %70 : vector<8x32xf32>
    %72 = vector.broadcast %52 : vector<1x32xf32> to vector<8x32xf32>
    %73 = arith.mulf %71, %72 : vector<8x32xf32>
    %74 = vector.broadcast %53 : vector<1x32xf32> to vector<8x32xf32>
    %75 = arith.addf %73, %74 : vector<8x32xf32>
    %76 = tpu.iota {dimensions = array<i32: 0>} : vector<8x1xi32>
    %77 = vector.broadcast %6 : i32 to vector<8x1xi32>
    %78 = arith.addi %76, %77 : vector<8x1xi32>
    %79 = vector.broadcast %1 : i32 to vector<8x1xi32>
    %80 = arith.cmpi slt, %78, %79 : vector<8x1xi32>
    %81 = arith.extui %80 : vector<8x1xi1> to vector<8x1xi32>
    %82 = arith.sitofp %81 : vector<8x1xi32> to vector<8x1xf32>
    %83 = vector.broadcast %82 : vector<8x1xf32> to vector<8x32xf32>
    %84 = arith.mulf %75, %83 : vector<8x32xf32>
    %85 = arith.truncf %84 : vector<8x32xf32> to vector<8x32xbf16>
    %c0_34 = arith.constant 0 : index
    %c0_35 = arith.constant 0 : index
    %86 = vector.load %arg10[%c0_34, %c0_35] : memref<32x64xbf16, #tpu.memory_space<vmem>>, vector<32x64xbf16>
    %cst_36 = arith.constant dense<0.000000e+00> : vector<8x64xf32>
    %87 = tpu.matmul %85, %86, %cst_36 {dimension_numbers = #tpu.dot_dimension_numbers<[1], [0], [0], [1], [0, 0, 1, 1], [], []>} : vector<8x32xbf16>, vector<32x64xbf16>, vector<8x64xf32> -> vector<8x64xf32>
    %c0_37 = arith.constant 0 : index
    %c0_38 = arith.constant 0 : index
    %88 = vector.load %arg11[%c0_37, %c0_38] : memref<1x64xf32, #tpu.memory_space<vmem>>, vector<1x64xf32>
    %89 = vector.broadcast %88 : vector<1x64xf32> to vector<8x64xf32>
    %90 = arith.addf %87, %89 : vector<8x64xf32>
    %cst_39 = arith.constant 0.000000e+00 : f32
    %91 = vector.broadcast %cst_39 : f32 to vector<8x64xf32>
    %92 = arith.maximumf %90, %91 : vector<8x64xf32>
    %93 = arith.truncf %92 : vector<8x64xf32> to vector<8x64xbf16>
    %c0_40 = arith.constant 0 : index
    %c0_41 = arith.constant 0 : index
    %94 = vector.load %arg12[%c0_40, %c0_41] : memref<64x32xbf16, #tpu.memory_space<vmem>>, vector<64x32xbf16>
    %cst_42 = arith.constant dense<0.000000e+00> : vector<8x32xf32>
    %95 = tpu.matmul %93, %94, %cst_42 {dimension_numbers = #tpu.dot_dimension_numbers<[1], [0], [0], [1], [0, 0, 1, 1], [], []>} : vector<8x64xbf16>, vector<64x32xbf16>, vector<8x32xf32> -> vector<8x32xf32>
    %c0_43 = arith.constant 0 : index
    %c0_44 = arith.constant 0 : index
    %96 = vector.load %arg13[%c0_43, %c0_44] : memref<1x32xf32, #tpu.memory_space<vmem>>, vector<1x32xf32>
    %97 = vector.broadcast %96 : vector<1x32xf32> to vector<8x32xf32>
    %98 = arith.addf %95, %97 : vector<8x32xf32>
    %99 = arith.addf %98, %84 : vector<8x32xf32>
    %c0_45 = arith.constant 0 : index
    %c0_46 = arith.constant 0 : index
    %100 = vector.load %arg14[%c0_45, %c0_46] : memref<1x32xf32, #tpu.memory_space<vmem>>, vector<1x32xf32>
    %c0_47 = arith.constant 0 : index
    %c0_48 = arith.constant 0 : index
    %101 = vector.load %arg15[%c0_47, %c0_48] : memref<1x32xf32, #tpu.memory_space<vmem>>, vector<1x32xf32>
    %cst_49 = arith.constant dense<0.000000e+00> : vector<8xf32>
    %102 = vector.multi_reduction <add>, %99, %cst_49 [1] : vector<8x32xf32> to vector<8xf32>
    %103 = vector.shape_cast %102 : vector<8xf32> to vector<8x1xf32>
    %cst_50 = arith.constant 3.200000e+01 : f32
    %104 = vector.broadcast %cst_50 : f32 to vector<8x1xf32>
    %105 = arith.divf %103, %104 : vector<8x1xf32>
    %106 = vector.broadcast %105 : vector<8x1xf32> to vector<8x32xf32>
    %107 = arith.subf %99, %106 : vector<8x32xf32>
    %108 = arith.mulf %107, %107 : vector<8x32xf32>
    %cst_51 = arith.constant dense<0.000000e+00> : vector<8xf32>
    %109 = vector.multi_reduction <add>, %108, %cst_51 [1] : vector<8x32xf32> to vector<8xf32>
    %110 = vector.shape_cast %109 : vector<8xf32> to vector<8x1xf32>
    %cst_52 = arith.constant 3.200000e+01 : f32
    %111 = vector.broadcast %cst_52 : f32 to vector<8x1xf32>
    %112 = arith.divf %110, %111 : vector<8x1xf32>
    %113 = vector.broadcast %105 : vector<8x1xf32> to vector<8x32xf32>
    %114 = arith.subf %99, %113 : vector<8x32xf32>
    %cst_53 = arith.constant 9.99999974E-6 : f32
    %115 = vector.broadcast %cst_53 : f32 to vector<8x1xf32>
    %116 = arith.addf %112, %115 : vector<8x1xf32>
    %117 = math.rsqrt %116 : vector<8x1xf32>
    %118 = vector.broadcast %117 : vector<8x1xf32> to vector<8x32xf32>
    %119 = arith.mulf %114, %118 : vector<8x32xf32>
    %120 = vector.broadcast %100 : vector<1x32xf32> to vector<8x32xf32>
    %121 = arith.mulf %119, %120 : vector<8x32xf32>
    %122 = vector.broadcast %101 : vector<1x32xf32> to vector<8x32xf32>
    %123 = arith.addf %121, %122 : vector<8x32xf32>
    %124 = vector.broadcast %82 : vector<8x1xf32> to vector<8x32xf32>
    %125 = arith.mulf %123, %124 : vector<8x32xf32>
    %c0_54 = arith.constant 0 : index
    %c0_55 = arith.constant 0 : index
    %c0_56 = arith.constant 0 : index
    %126 = vector.load %arg16[%c0_54, %c0_55, %c0_56] : memref<1x8x32xf32, #tpu.memory_space<vmem>>, vector<1x8x32xf32>
    %127 = vector.shape_cast %126 : vector<1x8x32xf32> to vector<8x32xf32>
    %128 = vector.shape_cast %125 : vector<8x32xf32> to vector<1x8x32xf32>
    tpu.vector_store %arg16[%c0_54, %c0_55, %c0_56], %128 {strides = array<i32>} : memref<1x8x32xf32, #tpu.memory_space<vmem>>, vector<1x8x32xf32>,
    return
  }
  func.func @transform_0(%arg0: i32, %arg1: i32, %arg2: memref<2xi32, #tpu.memory_space<smem>>) -> (i32, i32, i32) {
    %c0_i32 = arith.constant 0 : i32
    %c0_i32_0 = arith.constant 0 : i32
    %c0_i32_1 = arith.constant 0 : i32
    return %arg0, %c0_i32, %c0_i32_0 : i32, i32, i32
  }
  func.func @transform_1(%arg0: i32, %arg1: i32, %arg2: memref<2xi32, #tpu.memory_space<smem>>) -> (i32, i32) {
    %c0_i32 = arith.constant 0 : i32
    %c0_i32_0 = arith.constant 0 : i32
    %c0_i32_1 = arith.constant 0 : i32
    return %c0_i32, %c0_i32_0 : i32, i32
  }
  func.func @transform_2(%arg0: i32, %arg1: i32, %arg2: memref<2xi32, #tpu.memory_space<smem>>) -> (i32, i32) {
    %c0_i32 = arith.constant 0 : i32
    %c0_i32_0 = arith.constant 0 : i32
    %c0_i32_1 = arith.constant 0 : i32
    return %c0_i32, %c0_i32_0 : i32, i32
  }
  func.func @transform_3(%arg0: i32, %arg1: i32, %arg2: memref<2xi32, #tpu.memory_space<smem>>) -> (i32, i32) {
    %c0_i32 = arith.constant 0 : i32
    %c0_i32_0 = arith.constant 0 : i32
    %c0_i32_1 = arith.constant 0 : i32
    return %c0_i32, %c0_i32_0 : i32, i32
  }
  func.func @transform_4(%arg0: i32, %arg1: i32, %arg2: memref<2xi32, #tpu.memory_space<smem>>) -> (i32, i32) {
    %c0_i32 = arith.constant 0 : i32
    %c0_i32_0 = arith.constant 0 : i32
    %c0_i32_1 = arith.constant 0 : i32
    return %c0_i32, %c0_i32_0 : i32, i32
  }
  func.func @transform_5(%arg0: i32, %arg1: i32, %arg2: memref<2xi32, #tpu.memory_space<smem>>) -> (i32, i32) {
    %c0_i32 = arith.constant 0 : i32
    %c0_i32_0 = arith.constant 0 : i32
    %c0_i32_1 = arith.constant 0 : i32
    return %c0_i32, %c0_i32_0 : i32, i32
  }
  func.func @transform_6(%arg0: i32, %arg1: i32, %arg2: memref<2xi32, #tpu.memory_space<smem>>) -> (i32, i32) {
    %c0_i32 = arith.constant 0 : i32
    %c0_i32_0 = arith.constant 0 : i32
    %c0_i32_1 = arith.constant 0 : i32
    return %c0_i32, %c0_i32_0 : i32, i32
  }
  func.func @transform_7(%arg0: i32, %arg1: i32, %arg2: memref<2xi32, #tpu.memory_space<smem>>) -> (i32, i32) {
    %c0_i32 = arith.constant 0 : i32
    %c0_i32_0 = arith.constant 0 : i32
    %c0_i32_1 = arith.constant 0 : i32
    return %c0_i32, %c0_i32_0 : i32, i32
  }
  func.func @transform_8(%arg0: i32, %arg1: i32, %arg2: memref<2xi32, #tpu.memory_space<smem>>) -> (i32, i32) {
    %c0_i32 = arith.constant 0 : i32
    %c0_i32_0 = arith.constant 0 : i32
    %c0_i32_1 = arith.constant 0 : i32
    return %c0_i32, %c0_i32_0 : i32, i32
  }
  func.func @transform_9(%arg0: i32, %arg1: i32, %arg2: memref<2xi32, #tpu.memory_space<smem>>) -> (i32, i32) {
    %c0_i32 = arith.constant 0 : i32
    %c0_i32_0 = arith.constant 0 : i32
    %c0_i32_1 = arith.constant 0 : i32
    return %c0_i32, %c0_i32_0 : i32, i32
  }
  func.func @transform_10(%arg0: i32, %arg1: i32, %arg2: memref<2xi32, #tpu.memory_space<smem>>) -> (i32, i32) {
    %c0_i32 = arith.constant 0 : i32
    %c0_i32_0 = arith.constant 0 : i32
    %c0_i32_1 = arith.constant 0 : i32
    return %c0_i32, %c0_i32_0 : i32, i32
  }
  func.func @transform_11(%arg0: i32, %arg1: i32, %arg2: memref<2xi32, #tpu.memory_space<smem>>) -> (i32, i32) {
    %c0_i32 = arith.constant 0 : i32
    %c0_i32_0 = arith.constant 0 : i32
    %c0_i32_1 = arith.constant 0 : i32
    return %c0_i32, %c0_i32_0 : i32, i32
  }
  func.func @transform_12(%arg0: i32, %arg1: i32, %arg2: memref<2xi32, #tpu.memory_space<smem>>) -> (i32, i32) {
    %c0_i32 = arith.constant 0 : i32
    %c0_i32_0 = arith.constant 0 : i32
    %c0_i32_1 = arith.constant 0 : i32
    return %c0_i32, %c0_i32_0 : i32, i32
  }
  func.func @transform_13(%arg0: i32, %arg1: i32, %arg2: memref<2xi32, #tpu.memory_space<smem>>) -> (i32, i32, i32) {
    %c0_i32 = arith.constant 0 : i32
    %c0_i32_0 = arith.constant 0 : i32
    return %arg0, %arg1, %c0_i32 : i32, i32, i32
  }
  func.func @transform_14(%arg0: i32, %arg1: i32, %arg2: memref<2xi32, #tpu.memory_space<smem>>) -> (i32, i32, i32, i32) {
    %c0_i32 = arith.constant 0 : i32
    %c0_i32_0 = arith.constant 0 : i32
    %c0_i32_1 = arith.constant 0 : i32
    return %c0_i32, %arg0, %arg1, %c0_i32_0 : i32, i32, i32, i32
  }
}

module attributes {stable_mosaic.version = 11 : i64} {
  func.func @_encoder_layer_kernel(%arg0: i32, %arg1: i32, %arg2: memref<2xi32, #tpu.memory_space<smem>>, %arg3: memref<1x8x32xf32, #tpu.memory_space<vmem>>, %arg4: memref<32x96xbf16, #tpu.memory_space<vmem>>, %arg5: memref<1x96xf32, #tpu.memory_space<vmem>>, %arg6: memref<32x32xbf16, #tpu.memory_space<vmem>>, %arg7: memref<1x32xf32, #tpu.memory_space<vmem>>, %arg8: memref<1x32xf32, #tpu.memory_space<vmem>>, %arg9: memref<1x32xf32, #tpu.memory_space<vmem>>, %arg10: memref<32x64xbf16, #tpu.memory_space<vmem>>, %arg11: memref<1x64xf32, #tpu.memory_space<vmem>>, %arg12: memref<64x32xbf16, #tpu.memory_space<vmem>>, %arg13: memref<1x32xf32, #tpu.memory_space<vmem>>, %arg14: memref<1x32xf32, #tpu.memory_space<vmem>>, %arg15: memref<1x32xf32, #tpu.memory_space<vmem>>, %arg16: memref<1x8x32xf32, #tpu.memory_space<vmem>>, %arg17: memref<2x1x8x8xbf16, #tpu.memory_space<vmem>>, %arg18: memref<2x8x16xbf16, #tpu.memory_space<vmem>>, %arg19: memref<2x8x16xbf16, #tpu.memory_space<vmem>>, %arg20: memref<2x8x16xbf16, #tpu.memory_space<vmem>>) attributes {dimension_semantics = [#tpu.dimension_semantics<parallel>, #tpu.dimension_semantics<arbitrary>], iteration_bounds = array<i64: 2, 1>, scalar_prefetch = 1 : i64, scratch_operands = 3 : i64, tpu.core_type = #tpu.core_type<tc>, window_params = [{transform_indices = @transform_0, window_bounds = array<i64: 1, 8, 32>}, {pipeline_mode = #tpu.pipeline_mode<synchronous>, transform_indices = @transform_1, window_bounds = array<i64: 32, 96>}, {pipeline_mode = #tpu.pipeline_mode<synchronous>, transform_indices = @transform_2, window_bounds = array<i64: 1, 96>}, {pipeline_mode = #tpu.pipeline_mode<synchronous>, transform_indices = @transform_3, window_bounds = array<i64: 32, 32>}, {pipeline_mode = #tpu.pipeline_mode<synchronous>, transform_indices = @transform_4, window_bounds = array<i64: 1, 32>}, {pipeline_mode = #tpu.pipeline_mode<synchronous>, transform_indices = @transform_5, window_bounds = array<i64: 1, 32>}, {pipeline_mode = #tpu.pipeline_mode<synchronous>, transform_indices = @transform_6, window_bounds = array<i64: 1, 32>}, {pipeline_mode = #tpu.pipeline_mode<synchronous>, transform_indices = @transform_7, window_bounds = array<i64: 32, 64>}, {pipeline_mode = #tpu.pipeline_mode<synchronous>, transform_indices = @transform_8, window_bounds = array<i64: 1, 64>}, {pipeline_mode = #tpu.pipeline_mode<synchronous>, transform_indices = @transform_9, window_bounds = array<i64: 64, 32>}, {pipeline_mode = #tpu.pipeline_mode<synchronous>, transform_indices = @transform_10, window_bounds = array<i64: 1, 32>}, {pipeline_mode = #tpu.pipeline_mode<synchronous>, transform_indices = @transform_11, window_bounds = array<i64: 1, 32>}, {pipeline_mode = #tpu.pipeline_mode<synchronous>, transform_indices = @transform_12, window_bounds = array<i64: 1, 32>}, {transform_indices = @transform_13, window_bounds = array<i64: 1, 8, 32>}, {transform_indices = @transform_14, window_bounds = array<i64: 2, 1, 8, 8>}]} {
    %0 = arith.index_cast %arg0 : i32 to index
    %1 = memref.load %arg2[%0] : memref<2xi32, #tpu.memory_space<smem>>
    %c0_i32 = arith.constant 0 : i32
    %2 = arith.cmpi eq, %arg1, %c0_i32 : i32
    %3 = arith.extui %2 : i1 to i32
    %c0_i32_0 = arith.constant 0 : i32
    %4 = arith.cmpi ne, %3, %c0_i32_0 : i32
    scf.if %4 {
      %c0_57 = arith.constant 0 : index
      %c0_58 = arith.constant 0 : index
      %c0_59 = arith.constant 0 : index
      %129 = vector.load %arg3[%c0_57, %c0_58, %c0_59] : memref<1x8x32xf32, #tpu.memory_space<vmem>>, vector<1x8x32xf32>
      %130 = vector.shape_cast %129 : vector<1x8x32xf32> to vector<8x32xf32>
      %131 = arith.truncf %130 : vector<8x32xf32> to vector<8x32xbf16>
      %c0_60 = arith.constant 0 : index
      %c0_61 = arith.constant 0 : index
      %132 = vector.load %arg4[%c0_60, %c0_61] : memref<32x96xbf16, #tpu.memory_space<vmem>>, vector<32x96xbf16>
      %cst_62 = arith.constant dense<0.000000e+00> : vector<8x96xf32>
      %133 = tpu.matmul %131, %132, %cst_62 {dimension_numbers = #tpu.dot_dimension_numbers<[1], [0], [0], [1], [0, 0, 1, 1], [], []>} : vector<8x32xbf16>, vector<32x96xbf16>, vector<8x96xf32> -> vector<8x96xf32>
      %c0_63 = arith.constant 0 : index
      %c0_64 = arith.constant 0 : index
      %134 = vector.load %arg5[%c0_63, %c0_64] : memref<1x96xf32, #tpu.memory_space<vmem>>, vector<1x96xf32>
      %135 = vector.broadcast %134 : vector<1x96xf32> to vector<8x96xf32>
      %136 = arith.addf %133, %135 : vector<8x96xf32>
      %137 = vector.extract_strided_slice %136 {offsets = [0, 0], sizes = [8, 16], strides = [1, 1]} : vector<8x96xf32> to vector<8x16xf32>
      %138 = arith.truncf %137 : vector<8x16xf32> to vector<8x16xbf16>
      %c0_65 = arith.constant 0 : index
      %c0_66 = arith.constant 0 : index
      %c0_67 = arith.constant 0 : index
      %139 = vector.load %arg18[%c0_65, %c0_66, %c0_67] : memref<2x8x16xbf16, #tpu.memory_space<vmem>>, vector<1x8x16xbf16>
      %140 = vector.shape_cast %139 : vector<1x8x16xbf16> to vector<8x16xbf16>
      %141 = vector.shape_cast %138 : vector<8x16xbf16> to vector<1x8x16xbf16>
      tpu.vector_store %arg18[%c0_65, %c0_66, %c0_67], %141 {strides = array<i32>} : memref<2x8x16xbf16, #tpu.memory_space<vmem>>, vector<1x8x16xbf16>,
      %142 = vector.extract_strided_slice %136 {offsets = [0, 32], sizes = [8, 16], strides = [1, 1]} : vector<8x96xf32> to vector<8x16xf32>
      %143 = arith.truncf %142 : vector<8x16xf32> to vector<8x16xbf16>
      %c0_68 = arith.constant 0 : index
      %c0_69 = arith.constant 0 : index
      %c0_70 = arith.constant 0 : index
      %144 = vector.load %arg19[%c0_68, %c0_69, %c0_70] : memref<2x8x16xbf16, #tpu.memory_space<vmem>>, vector<1x8x16xbf16>
      %145 = vector.shape_cast %144 : vector<1x8x16xbf16> to vector<8x16xbf16>
      %146 = vector.shape_cast %143 : vector<8x16xbf16> to vector<1x8x16xbf16>
      tpu.vector_store %arg19[%c0_68, %c0_69, %c0_70], %146 {strides = array<i32>} : memref<2x8x16xbf16, #tpu.memory_space<vmem>>, vector<1x8x16xbf16>,
      %147 = vector.extract_strided_slice %136 {offsets = [0, 64], sizes = [8, 16], strides = [1, 1]} : vector<8x96xf32> to vector<8x16xf32>
      %148 = arith.truncf %147 : vector<8x16xf32> to vector<8x16xbf16>
      %c0_71 = arith.constant 0 : index
      %c0_72 = arith.constant 0 : index
      %c0_73 = arith.constant 0 : index
      %149 = vector.load %arg20[%c0_71, %c0_72, %c0_73] : memref<2x8x16xbf16, #tpu.memory_space<vmem>>, vector<1x8x16xbf16>
      %150 = vector.shape_cast %149 : vector<1x8x16xbf16> to vector<8x16xbf16>
      %151 = vector.shape_cast %148 : vector<8x16xbf16> to vector<1x8x16xbf16>
      tpu.vector_store %arg20[%c0_71, %c0_72, %c0_73], %151 {strides = array<i32>} : memref<2x8x16xbf16, #tpu.memory_space<vmem>>, vector<1x8x16xbf16>,
      %152 = vector.extract_strided_slice %136 {offsets = [0, 16], sizes = [8, 16], strides = [1, 1]} : vector<8x96xf32> to vector<8x16xf32>
      %153 = arith.truncf %152 : vector<8x16xf32> to vector<8x16xbf16>
      %c1 = arith.constant 1 : index
      %c0_74 = arith.constant 0 : index
      %c0_75 = arith.constant 0 : index
      %154 = vector.load %arg18[%c1, %c0_74, %c0_75] : memref<2x8x16xbf16, #tpu.memory_space<vmem>>, vector<1x8x16xbf16>
      %155 = vector.shape_cast %154 : vector<1x8x16xbf16> to vector<8x16xbf16>
      %156 = vector.shape_cast %153 : vector<8x16xbf16> to vector<1x8x16xbf16>
      tpu.vector_store %arg18[%c1, %c0_74, %c0_75], %156 {strides = array<i32>} : memref<2x8x16xbf16, #tpu.memory_space<vmem>>, vector<1x8x16xbf16>,
      %157 = vector.extract_strided_slice %136 {offsets = [0, 48], sizes = [8, 16], strides = [1, 1]} : vector<8x96xf32> to vector<8x16xf32>
      %158 = arith.truncf %157 : vector<8x16xf32> to vector<8x16xbf16>
      %c1_76 = arith.constant 1 : index
      %c0_77 = arith.constant 0 : index
      %c0_78 = arith.constant 0 : index
      %159 = vector.load %arg19[%c1_76, %c0_77, %c0_78] : memref<2x8x16xbf16, #tpu.memory_space<vmem>>, vector<1x8x16xbf16>
      %160 = vector.shape_cast %159 : vector<1x8x16xbf16> to vector<8x16xbf16>
      %161 = vector.shape_cast %158 : vector<8x16xbf16> to vector<1x8x16xbf16>
      tpu.vector_store %arg19[%c1_76, %c0_77, %c0_78], %161 {strides = array<i32>} : memref<2x8x16xbf16, #tpu.memory_space<vmem>>, vector<1x8x16xbf16>,
      %162 = vector.extract_strided_slice %136 {offsets = [0, 80], sizes = [8, 16], strides = [1, 1]} : vector<8x96xf32> to vector<8x16xf32>
      %163 = arith.truncf %162 : vector<8x16xf32> to vector<8x16xbf16>
      %c1_79 = arith.constant 1 : index
      %c0_80 = arith.constant 0 : index
      %c0_81 = arith.constant 0 : index
      %164 = vector.load %arg20[%c1_79, %c0_80, %c0_81] : memref<2x8x16xbf16, #tpu.memory_space<vmem>>, vector<1x8x16xbf16>
      %165 = vector.shape_cast %164 : vector<1x8x16xbf16> to vector<8x16xbf16>
      %166 = vector.shape_cast %163 : vector<8x16xbf16> to vector<1x8x16xbf16>
      tpu.vector_store %arg20[%c1_79, %c0_80, %c0_81], %166 {strides = array<i32>} : memref<2x8x16xbf16, #tpu.memory_space<vmem>>, vector<1x8x16xbf16>,
    } else {
    }
    %c8_i32 = arith.constant 8 : i32
    %5 = arith.muli %arg1, %c8_i32 : i32
    %6 = tpu.assume_multiple %5, 8 : i32
    %c0 = arith.constant 0 : index
    %7 = arith.index_cast %6 : i32 to index
    %c0_1 = arith.constant 0 : index
    %8 = vector.load %arg3[%c0, %7, %c0_1] : memref<1x8x32xf32, #tpu.memory_space<vmem>>, vector<1x8x32xf32>
    %9 = vector.shape_cast %8 : vector<1x8x32xf32> to vector<8x32xf32>
    %c0_2 = arith.constant 0 : index
    %10 = arith.index_cast %6 : i32 to index
    %c0_3 = arith.constant 0 : index
    %11 = vector.load %arg18[%c0_2, %10, %c0_3] : memref<2x8x16xbf16, #tpu.memory_space<vmem>>, vector<2x8x16xbf16>
    %c0_4 = arith.constant 0 : index
    %c0_5 = arith.constant 0 : index
    %c0_6 = arith.constant 0 : index
    %12 = vector.load %arg19[%c0_4, %c0_5, %c0_6] : memref<2x8x16xbf16, #tpu.memory_space<vmem>>, vector<2x8x16xbf16>
    "tpu.trace_start"() <{level = 10 : i32, message = "hqd,hkd->hqk"}> : () -> ()
    %cst = arith.constant dense<0.000000e+00> : vector<2x8x8xf32>
    %13 = tpu.matmul %11, %12, %cst {dimension_numbers = #tpu.dot_dimension_numbers<[2], [2], [1], [1], [0, 0, 0, 1, 1, 1], [0], [0]>} : vector<2x8x16xbf16>, vector<2x8x16xbf16>, vector<2x8x8xf32> -> vector<2x8x8xf32>
    "tpu.trace_stop"() : () -> ()
    %cst_7 = arith.constant 2.500000e-01 : f32
    %14 = vector.broadcast %cst_7 : f32 to vector<2x8x8xf32>
    %15 = arith.mulf %13, %14 : vector<2x8x8xf32>
    %16 = tpu.iota {dimensions = array<i32: 2>} : vector<1x1x8xi32>
    %17 = vector.broadcast %1 : i32 to vector<1x1x8xi32>
    %18 = arith.cmpi sge, %16, %17 : vector<1x1x8xi32>
    %cst_8 = arith.constant -1.000000e+30 : f32
    %19 = vector.shape_cast %18 : vector<1x1x8xi1> to vector<1x1x8xi1>
    %20 = vector.broadcast %19 : vector<1x1x8xi1> to vector<2x8x8xi1>
    %21 = vector.broadcast %cst_8 : f32 to vector<2x8x8xf32>
    %22 = arith.select %20, %21, %15 : vector<2x8x8xi1>, vector<2x8x8xf32>
    %cst_9 = arith.constant dense<0xFF800000> : vector<2x8xf32>
    %23 = vector.multi_reduction <maximumf>, %22, %cst_9 [2] : vector<2x8x8xf32> to vector<2x8xf32>
    %24 = vector.shape_cast %23 : vector<2x8xf32> to vector<2x8x1xf32>
    %25 = vector.broadcast %24 : vector<2x8x1xf32> to vector<2x8x8xf32>
    %26 = arith.subf %22, %25 : vector<2x8x8xf32>
    %27 = math.exp %26 : vector<2x8x8xf32>
    %cst_10 = arith.constant dense<0.000000e+00> : vector<2x8xf32>
    %28 = vector.multi_reduction <add>, %27, %cst_10 [2] : vector<2x8x8xf32> to vector<2x8xf32>
    %29 = vector.shape_cast %28 : vector<2x8xf32> to vector<2x8x1xf32>
    %cst_11 = arith.constant 1.000000e+00 : f32
    %30 = vector.broadcast %cst_11 : f32 to vector<2x8x1xf32>
    %31 = arith.divf %30, %29 : vector<2x8x1xf32>
    %32 = vector.broadcast %31 : vector<2x8x1xf32> to vector<2x8x8xf32>
    %33 = arith.mulf %27, %32 : vector<2x8x8xf32>
    %34 = vector.shape_cast %33 : vector<2x8x8xf32> to vector<2x1x8x8xf32>
    %35 = arith.truncf %34 : vector<2x1x8x8xf32> to vector<2x1x8x8xbf16>
    %c0_12 = arith.constant 0 : index
    %c0_13 = arith.constant 0 : index
    %c0_14 = arith.constant 0 : index
    %c0_15 = arith.constant 0 : index
    %36 = vector.load %arg17[%c0_12, %c0_13, %c0_14, %c0_15] : memref<2x1x8x8xbf16, #tpu.memory_space<vmem>>, vector<2x1x8x8xbf16>
    tpu.vector_store %arg17[%c0_12, %c0_13, %c0_14, %c0_15], %35 {strides = array<i32>} : memref<2x1x8x8xbf16, #tpu.memory_space<vmem>>, vector<2x1x8x8xbf16>,
    %37 = arith.truncf %33 : vector<2x8x8xf32> to vector<2x8x8xbf16>
    %c0_16 = arith.constant 0 : index
    %c0_17 = arith.constant 0 : index
    %c0_18 = arith.constant 0 : index
    %38 = vector.load %arg20[%c0_16, %c0_17, %c0_18] : memref<2x8x16xbf16, #tpu.memory_space<vmem>>, vector<2x8x16xbf16>
    "tpu.trace_start"() <{level = 10 : i32, message = "hqk,hkd->hqd"}> : () -> ()
    %cst_19 = arith.constant dense<0.000000e+00> : vector<2x8x16xf32>
    %39 = tpu.matmul %37, %38, %cst_19 {dimension_numbers = #tpu.dot_dimension_numbers<[2], [1], [1], [2], [0, 0, 0, 1, 1, 2], [0], [0]>} : vector<2x8x8xbf16>, vector<2x8x16xbf16>, vector<2x8x16xf32> -> vector<2x8x16xf32>
    "tpu.trace_stop"() : () -> ()
    %40 = vector.extract_strided_slice %39 {offsets = [0, 0, 0], sizes = [1, 8, 16], strides = [1, 1, 1]} : vector<2x8x16xf32> to vector<1x8x16xf32>
    %41 = vector.shape_cast %40 : vector<1x8x16xf32> to vector<8x16xf32>
    %42 = vector.extract_strided_slice %39 {offsets = [1, 0, 0], sizes = [1, 8, 16], strides = [1, 1, 1]} : vector<2x8x16xf32> to vector<1x8x16xf32>
    %43 = vector.shape_cast %42 : vector<1x8x16xf32> to vector<8x16xf32>
    %44 = tpu.concatenate %41, %43 in 1 : vector<8x16xf32>, vector<8x16xf32> -> vector<8x32xf32>
    %45 = arith.truncf %44 : vector<8x32xf32> to vector<8x32xbf16>
    %c0_20 = arith.constant 0 : index
    %c0_21 = arith.constant 0 : index
    %46 = vector.load %arg6[%c0_20, %c0_21] : memref<32x32xbf16, #tpu.memory_space<vmem>>, vector<32x32xbf16>
    %cst_22 = arith.constant dense<0.000000e+00> : vector<8x32xf32>
    %47 = tpu.matmul %45, %46, %cst_22 {dimension_numbers = #tpu.dot_dimension_numbers<[1], [0], [0], [1], [0, 0, 1, 1], [], []>} : vector<8x32xbf16>, vector<32x32xbf16>, vector<8x32xf32> -> vector<8x32xf32>
    %c0_23 = arith.constant 0 : index
    %c0_24 = arith.constant 0 : index
    %48 = vector.load %arg7[%c0_23, %c0_24] : memref<1x32xf32, #tpu.memory_space<vmem>>, vector<1x32xf32>
    %49 = vector.broadcast %48 : vector<1x32xf32> to vector<8x32xf32>
    %50 = arith.addf %47, %49 : vector<8x32xf32>
    %51 = arith.addf %50, %9 : vector<8x32xf32>
    %c0_25 = arith.constant 0 : index
    %c0_26 = arith.constant 0 : index
    %52 = vector.load %arg8[%c0_25, %c0_26] : memref<1x32xf32, #tpu.memory_space<vmem>>, vector<1x32xf32>
    %c0_27 = arith.constant 0 : index
    %c0_28 = arith.constant 0 : index
    %53 = vector.load %arg9[%c0_27, %c0_28] : memref<1x32xf32, #tpu.memory_space<vmem>>, vector<1x32xf32>
    %cst_29 = arith.constant dense<0.000000e+00> : vector<8xf32>
    %54 = vector.multi_reduction <add>, %51, %cst_29 [1] : vector<8x32xf32> to vector<8xf32>
    %55 = vector.shape_cast %54 : vector<8xf32> to vector<8x1xf32>
    %cst_30 = arith.constant 3.200000e+01 : f32
    %56 = vector.broadcast %cst_30 : f32 to vector<8x1xf32>
    %57 = arith.divf %55, %56 : vector<8x1xf32>
    %58 = vector.broadcast %57 : vector<8x1xf32> to vector<8x32xf32>
    %59 = arith.subf %51, %58 : vector<8x32xf32>
    %60 = arith.mulf %59, %59 : vector<8x32xf32>
    %cst_31 = arith.constant dense<0.000000e+00> : vector<8xf32>
    %61 = vector.multi_reduction <add>, %60, %cst_31 [1] : vector<8x32xf32> to vector<8xf32>
    %62 = vector.shape_cast %61 : vector<8xf32> to vector<8x1xf32>
    %cst_32 = arith.constant 3.200000e+01 : f32
    %63 = vector.broadcast %cst_32 : f32 to vector<8x1xf32>
    %64 = arith.divf %62, %63 : vector<8x1xf32>
    %65 = vector.broadcast %57 : vector<8x1xf32> to vector<8x32xf32>
    %66 = arith.subf %51, %65 : vector<8x32xf32>
    %cst_33 = arith.constant 9.99999974E-6 : f32
    %67 = vector.broadcast %cst_33 : f32 to vector<8x1xf32>
    %68 = arith.addf %64, %67 : vector<8x1xf32>
    %69 = math.rsqrt %68 : vector<8x1xf32>
    %70 = vector.broadcast %69 : vector<8x1xf32> to vector<8x32xf32>
    %71 = arith.mulf %66, %70 : vector<8x32xf32>
    %72 = vector.broadcast %52 : vector<1x32xf32> to vector<8x32xf32>
    %73 = arith.mulf %71, %72 : vector<8x32xf32>
    %74 = vector.broadcast %53 : vector<1x32xf32> to vector<8x32xf32>
    %75 = arith.addf %73, %74 : vector<8x32xf32>
    %76 = tpu.iota {dimensions = array<i32: 0>} : vector<8x1xi32>
    %77 = vector.broadcast %6 : i32 to vector<8x1xi32>
    %78 = arith.addi %76, %77 : vector<8x1xi32>
    %79 = vector.broadcast %1 : i32 to vector<8x1xi32>
    %80 = arith.cmpi slt, %78, %79 : vector<8x1xi32>
    %81 = arith.extui %80 : vector<8x1xi1> to vector<8x1xi32>
    %82 = arith.sitofp %81 : vector<8x1xi32> to vector<8x1xf32>
    %83 = vector.broadcast %82 : vector<8x1xf32> to vector<8x32xf32>
    %84 = arith.mulf %75, %83 : vector<8x32xf32>
    %85 = arith.truncf %84 : vector<8x32xf32> to vector<8x32xbf16>
    %c0_34 = arith.constant 0 : index
    %c0_35 = arith.constant 0 : index
    %86 = vector.load %arg10[%c0_34, %c0_35] : memref<32x64xbf16, #tpu.memory_space<vmem>>, vector<32x64xbf16>
    %cst_36 = arith.constant dense<0.000000e+00> : vector<8x64xf32>
    %87 = tpu.matmul %85, %86, %cst_36 {dimension_numbers = #tpu.dot_dimension_numbers<[1], [0], [0], [1], [0, 0, 1, 1], [], []>} : vector<8x32xbf16>, vector<32x64xbf16>, vector<8x64xf32> -> vector<8x64xf32>
    %c0_37 = arith.constant 0 : index
    %c0_38 = arith.constant 0 : index
    %88 = vector.load %arg11[%c0_37, %c0_38] : memref<1x64xf32, #tpu.memory_space<vmem>>, vector<1x64xf32>
    %89 = vector.broadcast %88 : vector<1x64xf32> to vector<8x64xf32>
    %90 = arith.addf %87, %89 : vector<8x64xf32>
    %cst_39 = arith.constant 0.000000e+00 : f32
    %91 = vector.broadcast %cst_39 : f32 to vector<8x64xf32>
    %92 = arith.maximumf %90, %91 : vector<8x64xf32>
    %93 = arith.truncf %92 : vector<8x64xf32> to vector<8x64xbf16>
    %c0_40 = arith.constant 0 : index
    %c0_41 = arith.constant 0 : index
    %94 = vector.load %arg12[%c0_40, %c0_41] : memref<64x32xbf16, #tpu.memory_space<vmem>>, vector<64x32xbf16>
    %cst_42 = arith.constant dense<0.000000e+00> : vector<8x32xf32>
    %95 = tpu.matmul %93, %94, %cst_42 {dimension_numbers = #tpu.dot_dimension_numbers<[1], [0], [0], [1], [0, 0, 1, 1], [], []>} : vector<8x64xbf16>, vector<64x32xbf16>, vector<8x32xf32> -> vector<8x32xf32>
    %c0_43 = arith.constant 0 : index
    %c0_44 = arith.constant 0 : index
    %96 = vector.load %arg13[%c0_43, %c0_44] : memref<1x32xf32, #tpu.memory_space<vmem>>, vector<1x32xf32>
    %97 = vector.broadcast %96 : vector<1x32xf32> to vector<8x32xf32>
    %98 = arith.addf %95, %97 : vector<8x32xf32>
    %99 = arith.addf %98, %84 : vector<8x32xf32>
    %c0_45 = arith.constant 0 : index
    %c0_46 = arith.constant 0 : index
    %100 = vector.load %arg14[%c0_45, %c0_46] : memref<1x32xf32, #tpu.memory_space<vmem>>, vector<1x32xf32>
    %c0_47 = arith.constant 0 : index
    %c0_48 = arith.constant 0 : index
    %101 = vector.load %arg15[%c0_47, %c0_48] : memref<1x32xf32, #tpu.memory_space<vmem>>, vector<1x32xf32>
    %cst_49 = arith.constant dense<0.000000e+00> : vector<8xf32>
    %102 = vector.multi_reduction <add>, %99, %cst_49 [1] : vector<8x32xf32> to vector<8xf32>
    %103 = vector.shape_cast %102 : vector<8xf32> to vector<8x1xf32>
    %cst_50 = arith.constant 3.200000e+01 : f32
    %104 = vector.broadcast %cst_50 : f32 to vector<8x1xf32>
    %105 = arith.divf %103, %104 : vector<8x1xf32>
    %106 = vector.broadcast %105 : vector<8x1xf32> to vector<8x32xf32>
    %107 = arith.subf %99, %106 : vector<8x32xf32>
    %108 = arith.mulf %107, %107 : vector<8x32xf32>
    %cst_51 = arith.constant dense<0.000000e+00> : vector<8xf32>
    %109 = vector.multi_reduction <add>, %108, %cst_51 [1] : vector<8x32xf32> to vector<8xf32>
    %110 = vector.shape_cast %109 : vector<8xf32> to vector<8x1xf32>
    %cst_52 = arith.constant 3.200000e+01 : f32
    %111 = vector.broadcast %cst_52 : f32 to vector<8x1xf32>
    %112 = arith.divf %110, %111 : vector<8x1xf32>
    %113 = vector.broadcast %105 : vector<8x1xf32> to vector<8x32xf32>
    %114 = arith.subf %99, %113 : vector<8x32xf32>
    %cst_53 = arith.constant 9.99999974E-6 : f32
    %115 = vector.broadcast %cst_53 : f32 to vector<8x1xf32>
    %116 = arith.addf %112, %115 : vector<8x1xf32>
    %117 = math.rsqrt %116 : vector<8x1xf32>
    %118 = vector.broadcast %117 : vector<8x1xf32> to vector<8x32xf32>
    %119 = arith.mulf %114, %118 : vector<8x32xf32>
    %120 = vector.broadcast %100 : vector<1x32xf32> to vector<8x32xf32>
    %121 = arith.mulf %119, %120 : vector<8x32xf32>
    %122 = vector.broadcast %101 : vector<1x32xf32> to vector<8x32xf32>
    %123 = arith.addf %121, %122 : vector<8x32xf32>
    %124 = vector.broadcast %82 : vector<8x1xf32> to vector<8x32xf32>
    %125 = arith.mulf %123, %124 : vector<8x32xf32>
    %c0_54 = arith.constant 0 : index
    %c0_55 = arith.constant 0 : index
    %c0_56 = arith.constant 0 : index
    %126 = vector.load %arg16[%c0_54, %c0_55, %c0_56] : memref<1x8x32xf32, #tpu.memory_space<vmem>>, vector<1x8x32xf32>
    %127 = vector.shape_cast %126 : vector<1x8x32xf32> to vector<8x32xf32>
    %128 = vector.shape_cast %125 : vector<8x32xf32> to vector<1x8x32xf32>
    tpu.vector_store %arg16[%c0_54, %c0_55, %c0_56], %128 {strides = array<i32>} : memref<1x8x32xf32, #tpu.memory_space<vmem>>, vector<1x8x32xf32>,
    return
  }
  func.func @transform_0(%arg0: i32, %arg1: i32, %arg2: memref<2xi32, #tpu.memory_space<smem>>) -> (i32, i32, i32) {
    %c0_i32 = arith.constant 0 : i32
    %c0_i32_0 = arith.constant 0 : i32
    %c0_i32_1 = arith.constant 0 : i32
    return %arg0, %c0_i32, %c0_i32_0 : i32, i32, i32
  }
  func.func @transform_1(%arg0: i32, %arg1: i32, %arg2: memref<2xi32, #tpu.memory_space<smem>>) -> (i32, i32) {
    %c0_i32 = arith.constant 0 : i32
    %c0_i32_0 = arith.constant 0 : i32
    %c0_i32_1 = arith.constant 0 : i32
    return %c0_i32, %c0_i32_0 : i32, i32
  }
  func.func @transform_2(%arg0: i32, %arg1: i32, %arg2: memref<2xi32, #tpu.memory_space<smem>>) -> (i32, i32) {
    %c0_i32 = arith.constant 0 : i32
    %c0_i32_0 = arith.constant 0 : i32
    %c0_i32_1 = arith.constant 0 : i32
    return %c0_i32, %c0_i32_0 : i32, i32
  }
  func.func @transform_3(%arg0: i32, %arg1: i32, %arg2: memref<2xi32, #tpu.memory_space<smem>>) -> (i32, i32) {
    %c0_i32 = arith.constant 0 : i32
    %c0_i32_0 = arith.constant 0 : i32
    %c0_i32_1 = arith.constant 0 : i32
    return %c0_i32, %c0_i32_0 : i32, i32
  }
  func.func @transform_4(%arg0: i32, %arg1: i32, %arg2: memref<2xi32, #tpu.memory_space<smem>>) -> (i32, i32) {
    %c0_i32 = arith.constant 0 : i32
    %c0_i32_0 = arith.constant 0 : i32
    %c0_i32_1 = arith.constant 0 : i32
    return %c0_i32, %c0_i32_0 : i32, i32
  }
  func.func @transform_5(%arg0: i32, %arg1: i32, %arg2: memref<2xi32, #tpu.memory_space<smem>>) -> (i32, i32) {
    %c0_i32 = arith.constant 0 : i32
    %c0_i32_0 = arith.constant 0 : i32
    %c0_i32_1 = arith.constant 0 : i32
    return %c0_i32, %c0_i32_0 : i32, i32
  }
  func.func @transform_6(%arg0: i32, %arg1: i32, %arg2: memref<2xi32, #tpu.memory_space<smem>>) -> (i32, i32) {
    %c0_i32 = arith.constant 0 : i32
    %c0_i32_0 = arith.constant 0 : i32
    %c0_i32_1 = arith.constant 0 : i32
    return %c0_i32, %c0_i32_0 : i32, i32
  }
  func.func @transform_7(%arg0: i32, %arg1: i32, %arg2: memref<2xi32, #tpu.memory_space<smem>>) -> (i32, i32) {
    %c0_i32 = arith.constant 0 : i32
    %c0_i32_0 = arith.constant 0 : i32
    %c0_i32_1 = arith.constant 0 : i32
    return %c0_i32, %c0_i32_0 : i32, i32
  }
  func.func @transform_8(%arg0: i32, %arg1: i32, %arg2: memref<2xi32, #tpu.memory_space<smem>>) -> (i32, i32) {
    %c0_i32 = arith.constant 0 : i32
    %c0_i32_0 = arith.constant 0 : i32
    %c0_i32_1 = arith.constant 0 : i32
    return %c0_i32, %c0_i32_0 : i32, i32
  }
  func.func @transform_9(%arg0: i32, %arg1: i32, %arg2: memref<2xi32, #tpu.memory_space<smem>>) -> (i32, i32) {
    %c0_i32 = arith.constant 0 : i32
    %c0_i32_0 = arith.constant 0 : i32
    %c0_i32_1 = arith.constant 0 : i32
    return %c0_i32, %c0_i32_0 : i32, i32
  }
  func.func @transform_10(%arg0: i32, %arg1: i32, %arg2: memref<2xi32, #tpu.memory_space<smem>>) -> (i32, i32) {
    %c0_i32 = arith.constant 0 : i32
    %c0_i32_0 = arith.constant 0 : i32
    %c0_i32_1 = arith.constant 0 : i32
    return %c0_i32, %c0_i32_0 : i32, i32
  }
  func.func @transform_11(%arg0: i32, %arg1: i32, %arg2: memref<2xi32, #tpu.memory_space<smem>>) -> (i32, i32) {
    %c0_i32 = arith.constant 0 : i32
    %c0_i32_0 = arith.constant 0 : i32
    %c0_i32_1 = arith.constant 0 : i32
    return %c0_i32, %c0_i32_0 : i32, i32
  }
  func.func @transform_12(%arg0: i32, %arg1: i32, %arg2: memref<2xi32, #tpu.memory_space<smem>>) -> (i32, i32) {
    %c0_i32 = arith.constant 0 : i32
    %c0_i32_0 = arith.constant 0 : i32
    %c0_i32_1 = arith.constant 0 : i32
    return %c0_i32, %c0_i32_0 : i32, i32
  }
  func.func @transform_13(%arg0: i32, %arg1: i32, %arg2: memref<2xi32, #tpu.memory_space<smem>>) -> (i32, i32, i32) {
    %c0_i32 = arith.constant 0 : i32
    %c0_i32_0 = arith.constant 0 : i32
    return %arg0, %arg1, %c0_i32 : i32, i32, i32
  }
  func.func @transform_14(%arg0: i32, %arg1: i32, %arg2: memref<2xi32, #tpu.memory_space<smem>>) -> (i32, i32, i32, i32) {
    %c0_i32 = arith.constant 0 : i32
    %c0_i32_0 = arith.constant 0 : i32
    %c0_i32_1 = arith.constant 0 : i32
    return %c0_i32, %arg0, %arg1, %c0_i32_0 : i32, i32, i32, i32
  }
}

</mosaic_0001>

<llo_original>
// kernel: encoder_forward.3
$region0: #{encoder_forward.3}
  #allocation0 [shape = 'u32[]', space=smem, size = 0x4, offset = 0x4, fixed_abs, tag = 'smem constant byte address 0x4 - core index']
  #allocation1 [shape = 'u32[144,128]{1,0:T(1,128)}', space=vmem, size = 0x12000, scoped, tag = 'internal scratch']
  %s0 = inlined_call_operand.vmem [shape: f32[2,8,16], index: 0, kind: input, shape index: {}]
  %s1 = inlined_call_operand.vmem [shape: bf16[16,32], index: 1, kind: input, shape index: {}]
  %s2 = inlined_call_operand.vmem [shape: f32[1,32], index: 2, kind: input, shape index: {}]
  %s3 = inlined_call_operand.vmem [shape: f32[1,32], index: 3, kind: input, shape index: {}]
  %s4 = inlined_call_operand.vmem [shape: f32[1,32], index: 4, kind: input, shape index: {}]
  %s5 = inlined_call_operand.vmem [shape: f32[8,32], index: 5, kind: input, shape index: {}]
  %s6 = inlined_call_operand.vmem [shape: f32[2,8,32], index: 6, kind: output, shape index: {}]
  %s7 = sld [smem:[#allocation0]]
  $region57: #{encoder_forward.3} parent=0
    _
  %s9 = ssub.s32 1, %s7
  %s10 = scalar_select 0, %s9, %s7
  loop: start=0, step=1, limit=4
  $region2: #{encoder_forward.3} parent=0 // loop_pre_header
    _
  $region3: #{encoder_forward.3} parent=0 // loop_header
    %s12 = sphi 0, %s16
    %p13 = scmp.ge.s32.totalorder %s12, 4
    %s19 = sphi 0, %s31
    %s20 = sphi 0, %s27
    %s21 = sphi 0, %s19
    %s22 = sphi 0, %s20
    %s23 = sphi 0, %s21
    %s24 = sphi 0, %s22
    %s36 = sphi 0, %s38
    %s39 = sphi 0, %s36
    %s40 = sphi 0, %s39
    %s56 = sphi 0, %s40
    %s60 = sphi 0, %s60
    %s62 = sphi 0, %s60
    %s63 = sphi 0, %s62
    %s77 = sphi 0, %s63
    %s81 = sphi 0, %s81
    %s83 = sphi 0, %s81
    %s84 = sphi 0, %s83
    %s98 = sphi 0, %s84
    %s102 = sphi 0, %s102
    %s104 = sphi 0, %s102
    %s105 = sphi 0, %s104
    %s119 = sphi 0, %s105
    %s123 = sphi 0, %s123
    %s125 = sphi 0, %s123
    %s126 = sphi 0, %s125
    %s140 = sphi 0, %s126
    %s146 = sphi 0, %s148
    %s149 = sphi 0, %s146
    %s150 = sphi 0, %s149
    %s166 = sphi 0, %s150
    %s174 = sphi 0, %s176
    %s177 = sphi 0, %s174
    %s178 = sphi 0, %s177
    %s194 = sphi 0, %s178
  $region4: #{encoder_forward.3} parent=0 // loop_header_branch
    %15 = sbr.rel (%p13) target = $region8
  $region5: #{encoder_forward.3} parent=0 // loop_body
    %s17 = ssub.s32 %s12, 1
    %s18 = ssub.s32 %s12, 2
    %s25 = sadd.s32 1, %s20
    %p26 = scmp.ge.s32.totalorder %s25, 1
    %s27 = scalar_select %p26, 0, %s25
    %s28 = sadd.s32 1, %s19
    %s29 = scalar_select %p26, %s28, %s19
    %p30 = scmp.ge.s32.totalorder %s29, 2
    %s31 = scalar_select %p30, 0, %s29
    %s32 = ssub.s32 %s19, %s31
    %s33 = ssub.s32 %s20, %s27
    %s34 = sor.u32 %s32, %s33
    %p35 = scmp.eq.s32.totalorder %s34, 0
    %s37 = sadd.s32 %s36, 1
    %s38 = scalar_select %p35, %s36, %s37
    %p41 = pneg %p35
    %p42 = scmp.eq.s32.totalorder %s12, 1
    %p43 = por %p41, %p42
    %p44 = scmp.ne.s32.totalorder %s36, %s39
    %p45 = scmp.eq.s32.totalorder %s12, 0
    %p46 = por %p44, %p45
    %p47 = scmp.ne.s32.totalorder %s36, %s39
    %p48 = scmp.eq.s32.totalorder %s17, 1
    %p49 = por %p47, %p48
    %p50 = scmp.ne.s32.totalorder %s39, %s40
    %p51 = scmp.eq.s32.totalorder %s17, 0
    %p52 = por %p50, %p51
    %p53 = scmp.ne.s32.totalorder %s39, %s40
    %p54 = scmp.eq.s32.totalorder %s18, 1
    %p55 = por %p53, %p54
    %p57 = scmp.ne.s32.totalorder %s40, %s56
    %p58 = scmp.eq.s32.totalorder %s18, 0
    %p59 = por %p57, %p58
    %s61 = sadd.s32 %s60, 1
    %p64 = scmp.eq.s32.totalorder %s12, 1
    %p65 = scmp.ne.s32.totalorder %s60, %s62
    %p66 = scmp.eq.s32.totalorder %s12, 0
    %p67 = por %p65, %p66
    %p68 = scmp.ne.s32.totalorder %s60, %s62
    %p69 = scmp.eq.s32.totalorder %s17, 1
    %p70 = por %p68, %p69
    %p71 = scmp.ne.s32.totalorder %s62, %s63
    %p72 = scmp.eq.s32.totalorder %s17, 0
    %p73 = por %p71, %p72
    %p74 = scmp.ne.s32.totalorder %s62, %s63
    %p75 = scmp.eq.s32.totalorder %s18, 1
    %p76 = por %p74, %p75
    %p78 = scmp.ne.s32.totalorder %s63, %s77
    %p79 = scmp.eq.s32.totalorder %s18, 0
    %p80 = por %p78, %p79
    %s82 = sadd.s32 %s81, 1
    %p85 = scmp.eq.s32.totalorder %s12, 1
    %p86 = scmp.ne.s32.totalorder %s81, %s83
    %p87 = scmp.eq.s32.totalorder %s12, 0
    %p88 = por %p86, %p87
    %p89 = scmp.ne.s32.totalorder %s81, %s83
    %p90 = scmp.eq.s32.totalorder %s17, 1
    %p91 = por %p89, %p90
    %p92 = scmp.ne.s32.totalorder %s83, %s84
    %p93 = scmp.eq.s32.totalorder %s17, 0
    %p94 = por %p92, %p93
    %p95 = scmp.ne.s32.totalorder %s83, %s84
    %p96 = scmp.eq.s32.totalorder %s18, 1
    %p97 = por %p95, %p96
    %p99 = scmp.ne.s32.totalorder %s84, %s98
    %p100 = scmp.eq.s32.totalorder %s18, 0
    %p101 = por %p99, %p100
    %s103 = sadd.s32 %s102, 1
    %p106 = scmp.eq.s32.totalorder %s12, 1
    %p107 = scmp.ne.s32.totalorder %s102, %s104
    %p108 = scmp.eq.s32.totalorder %s12, 0
    %p109 = por %p107, %p108
    %p110 = scmp.ne.s32.totalorder %s102, %s104
    %p111 = scmp.eq.s32.totalorder %s17, 1
    %p112 = por %p110, %p111
    %p113 = scmp.ne.s32.totalorder %s104, %s105
    %p114 = scmp.eq.s32.totalorder %s17, 0
    %p115 = por %p113, %p114
    %p116 = scmp.ne.s32.totalorder %s104, %s105
    %p117 = scmp.eq.s32.totalorder %s18, 1
    %p118 = por %p116, %p117
    %p120 = scmp.ne.s32.totalorder %s105, %s119
    %p121 = scmp.eq.s32.totalorder %s18, 0
    %p122 = por %p120, %p121
    %s124 = sadd.s32 %s123, 1
    %p127 = scmp.eq.s32.totalorder %s12, 1
    %p128 = scmp.ne.s32.totalorder %s123, %s125
    %p129 = scmp.eq.s32.totalorder %s12, 0
    %p130 = por %p128, %p129
    %p131 = scmp.ne.s32.totalorder %s123, %s125
    %p132 = scmp.eq.s32.totalorder %s17, 1
    %p133 = por %p131, %p132
    %p134 = scmp.ne.s32.totalorder %s125, %s126
    %p135 = scmp.eq.s32.totalorder %s17, 0
    %p136 = por %p134, %p135
    %p137 = scmp.ne.s32.totalorder %s125, %s126
    %p138 = scmp.eq.s32.totalorder %s18, 1
    %p139 = por %p137, %p138
    %p141 = scmp.ne.s32.totalorder %s126, %s140
    %p142 = scmp.eq.s32.totalorder %s18, 0
    %p143 = por %p141, %p142
    %s144 = ssub.s32 %s20, %s27
    %p145 = scmp.eq.s32.totalorder %s144, 0
    %s147 = sadd.s32 %s146, 1
    %s148 = scalar_select %p145, %s146, %s147
    %p151 = pneg %p145
    %p152 = scmp.eq.s32.totalorder %s12, 1
    %p153 = por %p151, %p152
    %p154 = scmp.ne.s32.totalorder %s146, %s149
    %p155 = scmp.eq.s32.totalorder %s12, 0
    %p156 = por %p154, %p155
    %p157 = scmp.ne.s32.totalorder %s146, %s149
    %p158 = scmp.eq.s32.totalorder %s17, 1
    %p159 = por %p157, %p158
    %p160 = scmp.ne.s32.totalorder %s149, %s150
    %p161 = scmp.eq.s32.totalorder %s17, 0
    %p162 = por %p160, %p161
    %p163 = scmp.ne.s32.totalorder %s149, %s150
    %p164 = scmp.eq.s32.totalorder %s18, 1
    %p165 = por %p163, %p164
    %p167 = scmp.ne.s32.totalorder %s150, %s166
    %p168 = scmp.eq.s32.totalorder %s18, 0
    %p169 = por %p167, %p168
    %s170 = ssub.s32 %s19, %s31
    %s171 = ssub.s32 %s20, %s27
    %s172 = sor.u32 %s170, %s171
    %p173 = scmp.eq.s32.totalorder %s172, 0
    %s175 = sadd.s32 %s174, 1
    %s176 = scalar_select %p173, %s174, %s175
    %p179 = pneg %p173
    %p180 = scmp.eq.s32.totalorder %s12, 1
    %p181 = por %p179, %p180
    %p182 = scmp.ne.s32.totalorder %s174, %s177
    %p183 = scmp.eq.s32.totalorder %s12, 0
    %p184 = por %p182, %p183
    %p185 = scmp.ne.s32.totalorder %s174, %s177
    %p186 = scmp.eq.s32.totalorder %s17, 1
    %p187 = por %p185, %p186
    %p188 = scmp.ne.s32.totalorder %s177, %s178
    %p189 = scmp.eq.s32.totalorder %s17, 0
    %p190 = por %p188, %p189
    %p191 = scmp.ne.s32.totalorder %s177, %s178
    %p192 = scmp.eq.s32.totalorder %s18, 1
    %p193 = por %p191, %p192
    %p195 = scmp.ne.s32.totalorder %s178, %s194
    %p196 = scmp.eq.s32.totalorder %s18, 0
    %p197 = por %p195, %p196
    %p198 = scmp.le.s32.totalorder 1, %s12
    %p199 = scmp.lt.s32.totalorder %s12, 3
    %p200 = pnand %p198, %p199
    %p201 = pneg %p200
    // Predicated region
    $region9: #{encoder_forward.3} parent=5 // pred_check
      _
    $region10: #{encoder_forward.3} parent=5 // pred_check_branch
      %203 = sbr.rel (%p200) target = $region12
    $region11: #{encoder_forward.3} parent=5 // pred_region
      %s204 = ssub.s32 %s12, 1
      // Predicated region
      $region13: #{encoder_forward.3} parent=11 // pred_check
        %p205 = pneg %p73
      $region14: #{encoder_forward.3} parent=11 // pred_check_branch
        %207 = sbr.rel (%p205) target = $region16
      $region15: #{encoder_forward.3} parent=11 // pred_region
        _
      $region16: #{encoder_forward.3} parent=11 // pred_fallthru
        _
      // Predicated region
      $region17: #{encoder_forward.3} parent=11 // pred_check
        %p208 = pneg %p94
      $region18: #{encoder_forward.3} parent=11 // pred_check_branch
        %210 = sbr.rel (%p208) target = $region20
      $region19: #{encoder_forward.3} parent=11 // pred_region
        _
      $region20: #{encoder_forward.3} parent=11 // pred_fallthru
        _
      // Predicated region
      $region21: #{encoder_forward.3} parent=11 // pred_check
        %p211 = pneg %p115
      $region22: #{encoder_forward.3} parent=11 // pred_check_branch
        %213 = sbr.rel (%p211) target = $region24
      $region23: #{encoder_forward.3} parent=11 // pred_region
        _
      $region24: #{encoder_forward.3} parent=11 // pred_fallthru
        _
      // Predicated region
      $region25: #{encoder_forward.3} parent=11 // pred_check
        %p214 = pneg %p136
      $region26: #{encoder_forward.3} parent=11 // pred_check_branch
        %216 = sbr.rel (%p214) target = $region28
      $region27: #{encoder_forward.3} parent=11 // pred_region
        _
      $region28: #{encoder_forward.3} parent=11 // pred_fallthru
        _
      // Predicated region
      $region29: #{encoder_forward.3} parent=11 // pred_check
        %p217 = pneg %p162
      $region30: #{encoder_forward.3} parent=11 // pred_check_branch
        %219 = sbr.rel (%p217) target = $region32
      $region31: #{encoder_forward.3} parent=11 // pred_region
        %p220 = scmp.lt.s32.totalorder %s22, 0
        %s221 = scalar_select %p220, %s22, 0
        %s222 = smul.addr %s221, 8
        %s223 = scalar_lea.vmem %s5, %s222
      $region32: #{encoder_forward.3} parent=11 // pred_fallthru
        _
    $region12: #{encoder_forward.3} parent=5 // pred_fallthru
      _
    %p224 = scmp.lt.s32.totalorder %s12, 2
    // Predicated region
    $region33: #{encoder_forward.3} parent=5 // pred_check
      %p225 = pneg %p224
    $region34: #{encoder_forward.3} parent=5 // pred_check_branch
      %227 = sbr.rel (%p225) target = $region36
    $region35: #{encoder_forward.3} parent=5 // pred_region
      // Predicated region
      $region37: #{encoder_forward.3} parent=35 // pred_check
        %p228 = pneg %p46
      $region38: #{encoder_forward.3} parent=35 // pred_check_branch
        %230 = sbr.rel (%p228) target = $region40
      $region39: #{encoder_forward.3} parent=35 // pred_region
        %p231 = scmp.lt.s32.totalorder %s19, 1
        %s232 = scalar_select %p231, %s19, 1
        %p233 = scmp.lt.s32.totalorder %s20, 0
        %s234 = scalar_select %p233, %s20, 0
        %s235 = sadd.s32 %s234, %s232
        %s236 = smul.addr %s235, 8
        %s237 = scalar_lea.vmem %s0, %s236
      $region40: #{encoder_forward.3} parent=35 // pred_fallthru
        _
    $region36: #{encoder_forward.3} parent=5 // pred_fallthru
      _
    %p238 = scmp.le.s32.totalorder 1, %s12
    %p239 = scmp.lt.s32.totalorder %s12, 3
    %p240 = pnand %p238, %p239
    %p241 = pneg %p240
    // Predicated region
    $region41: #{encoder_forward.3} parent=5 // pred_check
      _
    $region42: #{encoder_forward.3} parent=5 // pred_check_branch
      %243 = sbr.rel (%p240) target = $region44
    $region43: #{encoder_forward.3} parent=5 // pred_region
      %s244 = ssub.s32 %s12, 1
      %p245 = scmp.lt.s32.totalorder %s21, 1
      %s246 = scalar_select %p245, %s21, 1
      %p247 = scmp.lt.s32.totalorder %s22, 0
      %s248 = scalar_select %p247, %s22, 0
      %s249 = sadd.s32 %s248, %s246
      %s250 = smul.addr %s249, 8
      %s251 = scalar_lea.vmem %s0, %s250
      %p252 = pneg %p52
      %p253 = pneg %p49
      %p254 = pneg %p73
      %p255 = pneg %p70
      %p256 = pneg %p94
      %p257 = pneg %p91
      %p258 = pneg %p115
      %p259 = pneg %p112
      %p260 = pneg %p136
      %p261 = pneg %p133
      %p262 = scmp.lt.s32.totalorder %s22, 0
      %s263 = scalar_select %p262, %s22, 0
      %s264 = smul.addr %s263, 8
      %s265 = scalar_lea.vmem %s5, %s264
      %p266 = pneg %p162
      %p267 = pneg %p159
      %p268 = pneg %p190
      %p269 = pneg %p187
      %p270 = scmp.lt.s32.totalorder %s21, 1
      %s271 = scalar_select %p270, %s21, 1
      %p272 = scmp.lt.s32.totalorder %s22, 0
      %s273 = scalar_select %p272, %s22, 0
      %s274 = sadd.s32 %s273, %s271
      %s275 = smul.addr %s274, 8
      %s276 = scalar_lea.vmem %s6, %s275
      %p277 = scmp.lt.s32.totalorder %s21, 1
      %s278 = scalar_select %p277, %s21, 1
      %p279 = scmp.lt.s32.totalorder %s22, 0
      %s280 = scalar_select %p279, %s22, 0
      %s281 = sadd.s32 %s280, %s278
      %s282 = smul.addr %s281, 8
      %s283 = scalar_lea.vmem %s0, %s282
      %p284 = scmp.lt.s32.totalorder %s22, 0
      %s285 = scalar_select %p284, %s22, 0
      %s286 = smul.addr %s285, 8
      %s287 = scalar_lea.vmem %s5, %s286
      %p288 = scmp.lt.s32.totalorder %s21, 1
      %s289 = scalar_select %p288, %s21, 1
      %p290 = scmp.lt.s32.totalorder %s22, 0
      %s291 = scalar_select %p290, %s22, 0
      %s292 = sadd.s32 %s291, %s289
      %s293 = smul.addr %s292, 8
      %s294 = scalar_lea.vmem %s6, %s293
      %v296 = vld [vmem:[%s283] sm:$0xff]
      %v297 = vpack.c.bf16 %v296, %v296
      %v298 = vld [vmem:[%s1] sm:$0xf]
      %v299 = vld [vmem:[%s1 + $0x4] sm:$0xf]
      %v300 = vld [vmem:[%s2] sm:$0x1]
      %v302 = vlaneseq
      %v303 = vshrl.u32 %v302, 7
      %v304 = vsub.s32 0, %v303
      %v305 = vrot.slane %v300, %v304
      %v309 = vunpack.c.l.b16 %v298
      %v310 = vunpack.c.l.b16 %v299
      %v311 = vpack.c.b16 %v310, %v309
      %vm313 = vcmask 130048
      %v315 = vsel %vm313, %v297, 0
      %317 = vmatprep.subr.bf16.mxu0 0
      %318 = vmatpush1.bf16.msra.mxu0 0
      %319 = vmatprep.subr.bf16.mxu0 0
      %320 = vmatpush1.bf16.msra.mxu0 0
      %321 = vmatprep.subr.bf16.mxu0 0
      %322 = vmatpush1.bf16.msra.mxu0 0
      %323 = vmatprep.subr.bf16.mxu0 0
      %324 = vmatpush1.bf16.msra.mxu0 0
      %325 = vmatprep.subr.bf16.mxu0 0
      %326 = vmatpush1.bf16.msra.mxu0 0
      %327 = vmatprep.subr.bf16.mxu0 0
      %328 = vmatpush1.bf16.msra.mxu0 0
      %329 = vmatprep.subr.bf16.mxu0 0
      %330 = vmatpush1.bf16.msra.mxu0 0
      %331 = vmatprep.subr.bf16.mxu0 0
      %332 = vmatpush1.bf16.msra.mxu0 %v311
      %333 = vmatprep.subr.bf16.mxu0 0
      %334 = vmatpush2.bf16.msra.mxu0 0
      %335 = vmatprep.subr.bf16.mxu0 0
      %336 = vmatpush2.bf16.msra.mxu0 0
      %337 = vmatprep.subr.bf16.mxu0 0
      %338 = vmatpush2.bf16.msra.mxu0 0
      %339 = vmatprep.subr.bf16.mxu0 0
      %340 = vmatpush2.bf16.msra.mxu0 0
      %341 = vmatprep.subr.bf16.mxu0 0
      %342 = vmatpush2.bf16.msra.mxu0 0
      %343 = vmatprep.subr.bf16.mxu0 0
      %344 = vmatpush2.bf16.msra.mxu0 0
      %345 = vmatprep.subr.bf16.mxu0 0
      %346 = vmatpush2.bf16.msra.mxu0 0
      %347 = vmatprep.subr.bf16.mxu0 0
      %348 = vmatpush2.bf16.msra.mxu0 0
      %349 = vmatprep.mubr.bf16.mxu0 0
      %350 = vmatmul.mubr.bf16.gmra.mxu0 %v315
      %v351 = vpop.f32.mrf.mxu0
      %v352 = vadd.f32 %v305, %v351
      %v353 = vpop.f32.mrf.mxu0
      %v354 = vpop.f32.mrf.mxu0
      %v355 = vpop.f32.mrf.mxu0
      %356 = vdwg.mxu0
      %v357 = vld [vmem:[%s3] sm:$0x1]
      %v358 = vld [vmem:[%s4] sm:$0x1]
      %vm359 = vcmask 261120
      %v360 = vsel %vm359, %v352, 0.0
      %361 = vadd.xlane.f32.xlu0 %v360
      %v362 = vpop.xlane.xlu0 %361
      %v363 = vrcp.pop 32.0
      %v364 = vmul.f32 %v362, %v363
      %v365 = vsub.f32 %v352, %v364
      %v366 = vmul.f32 %v365, %v365
      %v367 = vsel %vm359, %v366, 0.0
      %368 = vadd.xlane.f32.xlu0 %v367
      %v369 = vpop.xlane.xlu0 %368
      %v370 = vmul.f32 %v369, %v363
      %v371 = vadd.f32 %v370, 1e-05
      %v372 = vrsqrt.pop %v371
      %v373 = vmul.f32 %v365, %v372
      %v375 = vlaneseq
      %v376 = vshrl.u32 %v375, 7
      %v377 = vsub.s32 0, %v376
      %v378 = vrot.slane %v357, %v377
      %v380 = vmul.f32 %v373, %v378
      %v382 = vlaneseq
      %v383 = vshrl.u32 %v382, 7
      %v384 = vsub.s32 0, %v383
      %v385 = vrot.slane %v358, %v384
      %v387 = vadd.f32 %v380, %v385
      %v388 = vld [vmem:[%s287] sm:$0xff]
      %v389 = vadd.f32 %v387, %v388
      %390 = vst.msk [vmem:[%s294] sm:$0xff] %vm359, %v389
      %p391 = scmp.lt.s32.totalorder %s21, 1
      %s392 = scalar_select %p391, %s21, 1
      %p393 = scmp.lt.s32.totalorder %s22, 0
      %s394 = scalar_select %p393, %s22, 0
      %s395 = sadd.s32 %s394, %s392
      %s396 = smul.addr %s395, 8
      %s397 = scalar_lea.vmem %s6, %s396
      // Predicated region
      $region45: #{encoder_forward.3} parent=43 // pred_check
        %p398 = pneg %p187
      $region46: #{encoder_forward.3} parent=43 // pred_check_branch
        %400 = sbr.rel (%p398) target = $region48
      $region47: #{encoder_forward.3} parent=43 // pred_region
        _
      $region48: #{encoder_forward.3} parent=43 // pred_fallthru
        _
    $region44: #{encoder_forward.3} parent=5 // pred_fallthru
      _
    %p401 = scmp.le.s32.totalorder 2, %s12
    // Predicated region
    $region49: #{encoder_forward.3} parent=5 // pred_check
      %p402 = pneg %p401
    $region50: #{encoder_forward.3} parent=5 // pred_check_branch
      %404 = sbr.rel (%p402) target = $region52
    $region51: #{encoder_forward.3} parent=5 // pred_region
      %s405 = ssub.s32 %s12, 2
      // Predicated region
      $region53: #{encoder_forward.3} parent=51 // pred_check
        %p406 = pneg %p193
      $region54: #{encoder_forward.3} parent=51 // pred_check_branch
        %408 = sbr.rel (%p406) target = $region56
      $region55: #{encoder_forward.3} parent=51 // pred_region
        %p409 = scmp.lt.s32.totalorder %s23, 1
        %s410 = scalar_select %p409, %s23, 1
        %p411 = scmp.lt.s32.totalorder %s24, 0
        %s412 = scalar_select %p411, %s24, 0
        %s413 = sadd.s32 %s412, %s410
        %s414 = smul.addr %s413, 8
        %s415 = scalar_lea.vmem %s6, %s414
      $region56: #{encoder_forward.3} parent=51 // pred_fallthru
        _
    $region52: #{encoder_forward.3} parent=5 // pred_fallthru
      _
  $region6: #{encoder_forward.3} parent=0 // loop_footer
    %s16 = sadd.s32 1, %s12
  $region7: #{encoder_forward.3} parent=0 // loop_footer_branch
    %11 = sbr.rel target = $region3
  $region8: #{encoder_forward.3} parent=0 // loop_exit
    _

// kernel: encoder_forward.4
$region0: #{encoder_forward.4}
  #allocation0 [shape = 'u32[]', space=smem, size = 0x4, offset = 0x4, fixed_abs, tag = 'smem constant byte address 0x4 - core index']
  #allocation1 [shape = 'u32[144,128]{1,0:T(1,128)}', space=vmem, size = 0x12000, scoped, tag = 'internal scratch']
  #allocation2 [shape = 'bf16[2,8,16]{2,1,0:T(8,128)(2,1)}', space=vmem, size = 0x1000, scoped, tag = 'scratch operand']
  #allocation3 [shape = 'bf16[2,8,16]{2,1,0:T(8,128)(2,1)}', space=vmem, size = 0x1000, scoped, tag = 'scratch operand']
  #allocation4 [shape = 'bf16[2,8,16]{2,1,0:T(8,128)(2,1)}', space=vmem, size = 0x1000, scoped, tag = 'scratch operand']
  #allocation5 [shape = 's32[1]{0}', space=sflag, size = 0x4, scoped, tag = 'scoped memory for encoder_forward.4']
  #allocation6 [shape = 'u8[512]{0}', space=smem, size = 0x200, scoped, tag = 'prefetched SMEM operand 0']
  %s0 = inlined_call_operand.vmem [shape: s32[2], index: 0, kind: input, shape index: {}]
  %s1 = inlined_call_operand.vmem [shape: f32[2,8,32], index: 1, kind: input, shape index: {}]
  %s2 = inlined_call_operand.vmem [shape: bf16[32,96], index: 2, kind: input, shape index: {}]
  %s3 = inlined_call_operand.vmem [shape: f32[1,96], index: 3, kind: input, shape index: {}]
  %s4 = inlined_call_operand.vmem [shape: bf16[32,32], index: 4, kind: input, shape index: {}]
  %s5 = inlined_call_operand.vmem [shape: f32[1,32], index: 5, kind: input, shape index: {}]
  %s6 = inlined_call_operand.vmem [shape: f32[1,32], index: 6, kind: input, shape index: {}]
  %s7 = inlined_call_operand.vmem [shape: f32[1,32], index: 7, kind: input, shape index: {}]
  %s8 = inlined_call_operand.vmem [shape: bf16[32,64], index: 8, kind: input, shape index: {}]
  %s9 = inlined_call_operand.vmem [shape: f32[1,64], index: 9, kind: input, shape index: {}]
  %s10 = inlined_call_operand.vmem [shape: bf16[64,32], index: 10, kind: input, shape index: {}]
  %s11 = inlined_call_operand.vmem [shape: f32[1,32], index: 11, kind: input, shape index: {}]
  %s12 = inlined_call_operand.vmem [shape: f32[1,32], index: 12, kind: input, shape index: {}]
  %s13 = inlined_call_operand.vmem [shape: f32[1,32], index: 13, kind: input, shape index: {}]
  %s14 = inlined_call_operand.vmem [shape: f32[2,8,32], index: 14, kind: output, shape index: {0}]
  %s15 = inlined_call_operand.hbm [shape: bf16[2,2,8,8], index: 15, kind: output, shape index: {1}]
  %16 = xla_tuple %s14, %s15
  %s17 = sld [smem:[#allocation0]]
  $region97: #{encoder_forward.4} parent=0
    _
  %s19 = ssub.s32 1, %s17
  %s20 = scalar_select 0, %s19, %s17
  %s21 = sshll.u32 %s0, 4
  %s22 = int_to_ptr.vmem [resolvable:$true] %s21
  %24 = dma.vmem_to_smem %s22, 16, [#allocation6], [#allocation5]
  %25 = dma.done [#allocation5], 16
  %26 = sfence
  $region1: #{encoder_forward.4} parent=0
    #allocation7 [shape = 'u8[8192]{0}', space=vmem, size = 0x2000, scoped, tag = 'output window, operand 1']
    #allocation8 [shape = 's32[2]{0}', space=sflag, size = 0x8, scoped, tag = 'scoped memory for encoder_forward.4']
    %27 = vsyncpa [#allocation8], 0
    %s28 = scalar_lea.sflag [#allocation8], 1
    %29 = vsyncpa %s28, 0
    loop: start=0, step=1, limit=4
    $region2: #{encoder_forward.4} parent=1 // loop_pre_header
      _
    $region3: #{encoder_forward.4} parent=1 // loop_header
      %s31 = sphi 0, %s35
      %p32 = scmp.ge.s32.totalorder %s31, 4
      %s38 = sphi 0, %s50
      %s39 = sphi 0, %s46
      %s40 = sphi 0, %s38
      %s41 = sphi 0, %s39
      %s42 = sphi 0, %s40
      %s43 = sphi 0, %s41
      %s53 = sphi 0, %s55
      %s56 = sphi 0, %s53
      %s57 = sphi 0, %s56
      %s73 = sphi 0, %s57
      %s77 = sphi 0, %s77
      %s79 = sphi 0, %s77
      %s80 = sphi 0, %s79
      %s94 = sphi 0, %s80
      %s98 = sphi 0, %s98
      %s100 = sphi 0, %s98
      %s101 = sphi 0, %s100
      %s115 = sphi 0, %s101
      %s119 = sphi 0, %s119
      %s121 = sphi 0, %s119
      %s122 = sphi 0, %s121
      %s136 = sphi 0, %s122
      %s140 = sphi 0, %s140
      %s142 = sphi 0, %s140
      %s143 = sphi 0, %s142
      %s157 = sphi 0, %s143
      %s161 = sphi 0, %s161
      %s163 = sphi 0, %s161
      %s164 = sphi 0, %s163
      %s178 = sphi 0, %s164
      %s182 = sphi 0, %s182
      %s184 = sphi 0, %s182
      %s185 = sphi 0, %s184
      %s199 = sphi 0, %s185
      %s203 = sphi 0, %s203
      %s205 = sphi 0, %s203
      %s206 = sphi 0, %s205
      %s220 = sphi 0, %s206
      %s224 = sphi 0, %s224
      %s226 = sphi 0, %s224
      %s227 = sphi 0, %s226
      %s241 = sphi 0, %s227
      %s245 = sphi 0, %s245
      %s247 = sphi 0, %s245
      %s248 = sphi 0, %s247
      %s262 = sphi 0, %s248
      %s266 = sphi 0, %s266
      %s268 = sphi 0, %s266
      %s269 = sphi 0, %s268
      %s283 = sphi 0, %s269
      %s287 = sphi 0, %s287
      %s289 = sphi 0, %s287
      %s290 = sphi 0, %s289
      %s304 = sphi 0, %s290
      %s308 = sphi 0, %s308
      %s310 = sphi 0, %s308
      %s311 = sphi 0, %s310
      %s325 = sphi 0, %s311
      %s333 = sphi 0, %s335
      %s336 = sphi 0, %s333
      %s337 = sphi 0, %s336
      %s353 = sphi 0, %s337
      %s361 = sphi 0, %s363
      %s364 = sphi 0, %s361
      %s365 = sphi 0, %s364
      %s381 = sphi 0, %s365
    $region4: #{encoder_forward.4} parent=1 // loop_header_branch
      %34 = sbr.rel (%p32) target = $region8
    $region5: #{encoder_forward.4} parent=1 // loop_body
      %s36 = ssub.s32 %s31, 1
      %s37 = ssub.s32 %s31, 2
      %s44 = sadd.s32 1, %s39
      %p45 = scmp.ge.s32.totalorder %s44, 1
      %s46 = scalar_select %p45, 0, %s44
      %s47 = sadd.s32 1, %s38
      %s48 = scalar_select %p45, %s47, %s38
      %p49 = scmp.ge.s32.totalorder %s48, 2
      %s50 = scalar_select %p49, 0, %s48
      %s51 = ssub.s32 %s38, %s50
      %p52 = scmp.eq.s32.totalorder %s51, 0
      %s54 = sadd.s32 %s53, 1
      %s55 = scalar_select %p52, %s53, %s54
      %p58 = pneg %p52
      %p59 = scmp.eq.s32.totalorder %s31, 1
      %p60 = por %p58, %p59
      %p61 = scmp.ne.s32.totalorder %s53, %s56
      %p62 = scmp.eq.s32.totalorder %s31, 0
      %p63 = por %p61, %p62
      %p64 = scmp.ne.s32.totalorder %s53, %s56
      %p65 = scmp.eq.s32.totalorder %s36, 1
      %p66 = por %p64, %p65
      %p67 = scmp.ne.s32.totalorder %s56, %s57
      %p68 = scmp.eq.s32.totalorder %s36, 0
      %p69 = por %p67, %p68
      %p70 = scmp.ne.s32.totalorder %s56, %s57
      %p71 = scmp.eq.s32.totalorder %s37, 1
      %p72 = por %p70, %p71
      %p74 = scmp.ne.s32.totalorder %s57, %s73
      %p75 = scmp.eq.s32.totalorder %s37, 0
      %p76 = por %p74, %p75
      %s78 = sadd.s32 %s77, 1
      %p81 = scmp.eq.s32.totalorder %s31, 1
      %p82 = scmp.ne.s32.totalorder %s77, %s79
      %p83 = scmp.eq.s32.totalorder %s31, 0
      %p84 = por %p82, %p83
      %p85 = scmp.ne.s32.totalorder %s77, %s79
      %p86 = scmp.eq.s32.totalorder %s36, 1
      %p87 = por %p85, %p86
      %p88 = scmp.ne.s32.totalorder %s79, %s80
      %p89 = scmp.eq.s32.totalorder %s36, 0
      %p90 = por %p88, %p89
      %p91 = scmp.ne.s32.totalorder %s79, %s80
      %p92 = scmp.eq.s32.totalorder %s37, 1
      %p93 = por %p91, %p92
      %p95 = scmp.ne.s32.totalorder %s80, %s94
      %p96 = scmp.eq.s32.totalorder %s37, 0
      %p97 = por %p95, %p96
      %s99 = sadd.s32 %s98, 1
      %p102 = scmp.eq.s32.totalorder %s31, 1
      %p103 = scmp.ne.s32.totalorder %s98, %s100
      %p104 = scmp.eq.s32.totalorder %s31, 0
      %p105 = por %p103, %p104
      %p106 = scmp.ne.s32.totalorder %s98, %s100
      %p107 = scmp.eq.s32.totalorder %s36, 1
      %p108 = por %p106, %p107
      %p109 = scmp.ne.s32.totalorder %s100, %s101
      %p110 = scmp.eq.s32.totalorder %s36, 0
      %p111 = por %p109, %p110
      %p112 = scmp.ne.s32.totalorder %s100, %s101
      %p113 = scmp.eq.s32.totalorder %s37, 1
      %p114 = por %p112, %p113
      %p116 = scmp.ne.s32.totalorder %s101, %s115
      %p117 = scmp.eq.s32.totalorder %s37, 0
      %p118 = por %p116, %p117
      %s120 = sadd.s32 %s119, 1
      %p123 = scmp.eq.s32.totalorder %s31, 1
      %p124 = scmp.ne.s32.totalorder %s119, %s121
      %p125 = scmp.eq.s32.totalorder %s31, 0
      %p126 = por %p124, %p125
      %p127 = scmp.ne.s32.totalorder %s119, %s121
      %p128 = scmp.eq.s32.totalorder %s36, 1
      %p129 = por %p127, %p128
      %p130 = scmp.ne.s32.totalorder %s121, %s122
      %p131 = scmp.eq.s32.totalorder %s36, 0
      %p132 = por %p130, %p131
      %p133 = scmp.ne.s32.totalorder %s121, %s122
      %p134 = scmp.eq.s32.totalorder %s37, 1
      %p135 = por %p133, %p134
      %p137 = scmp.ne.s32.totalorder %s122, %s136
      %p138 = scmp.eq.s32.totalorder %s37, 0
      %p139 = por %p137, %p138
      %s141 = sadd.s32 %s140, 1
      %p144 = scmp.eq.s32.totalorder %s31, 1
      %p145 = scmp.ne.s32.totalorder %s140, %s142
      %p146 = scmp.eq.s32.totalorder %s31, 0
      %p147 = por %p145, %p146
      %p148 = scmp.ne.s32.totalorder %s140, %s142
      %p149 = scmp.eq.s32.totalorder %s36, 1
      %p150 = por %p148, %p149
      %p151 = scmp.ne.s32.totalorder %s142, %s143
      %p152 = scmp.eq.s32.totalorder %s36, 0
      %p153 = por %p151, %p152
      %p154 = scmp.ne.s32.totalorder %s142, %s143
      %p155 = scmp.eq.s32.totalorder %s37, 1
      %p156 = por %p154, %p155
      %p158 = scmp.ne.s32.totalorder %s143, %s157
      %p159 = scmp.eq.s32.totalorder %s37, 0
      %p160 = por %p158, %p159
      %s162 = sadd.s32 %s161, 1
      %p165 = scmp.eq.s32.totalorder %s31, 1
      %p166 = scmp.ne.s32.totalorder %s161, %s163
      %p167 = scmp.eq.s32.totalorder %s31, 0
      %p168 = por %p166, %p167
      %p169 = scmp.ne.s32.totalorder %s161, %s163
      %p170 = scmp.eq.s32.totalorder %s36, 1
      %p171 = por %p169, %p170
      %p172 = scmp.ne.s32.totalorder %s163, %s164
      %p173 = scmp.eq.s32.totalorder %s36, 0
      %p174 = por %p172, %p173
      %p175 = scmp.ne.s32.totalorder %s163, %s164
      %p176 = scmp.eq.s32.totalorder %s37, 1
      %p177 = por %p175, %p176
      %p179 = scmp.ne.s32.totalorder %s164, %s178
      %p180 = scmp.eq.s32.totalorder %s37, 0
      %p181 = por %p179, %p180
      %s183 = sadd.s32 %s182, 1
      %p186 = scmp.eq.s32.totalorder %s31, 1
      %p187 = scmp.ne.s32.totalorder %s182, %s184
      %p188 = scmp.eq.s32.totalorder %s31, 0
      %p189 = por %p187, %p188
      %p190 = scmp.ne.s32.totalorder %s182, %s184
      %p191 = scmp.eq.s32.totalorder %s36, 1
      %p192 = por %p190, %p191
      %p193 = scmp.ne.s32.totalorder %s184, %s185
      %p194 = scmp.eq.s32.totalorder %s36, 0
      %p195 = por %p193, %p194
      %p196 = scmp.ne.s32.totalorder %s184, %s185
      %p197 = scmp.eq.s32.totalorder %s37, 1
      %p198 = por %p196, %p197
      %p200 = scmp.ne.s32.totalorder %s185, %s199
      %p201 = scmp.eq.s32.totalorder %s37, 0
      %p202 = por %p200, %p201
      %s204 = sadd.s32 %s203, 1
      %p207 = scmp.eq.s32.totalorder %s31, 1
      %p208 = scmp.ne.s32.totalorder %s203, %s205
      %p209 = scmp.eq.s32.totalorder %s31, 0
      %p210 = por %p208, %p209
      %p211 = scmp.ne.s32.totalorder %s203, %s205
      %p212 = scmp.eq.s32.totalorder %s36, 1
      %p213 = por %p211, %p212
      %p214 = scmp.ne.s32.totalorder %s205, %s206
      %p215 = scmp.eq.s32.totalorder %s36, 0
      %p216 = por %p214, %p215
      %p217 = scmp.ne.s32.totalorder %s205, %s206
      %p218 = scmp.eq.s32.totalorder %s37, 1
      %p219 = por %p217, %p218
      %p221 = scmp.ne.s32.totalorder %s206, %s220
      %p222 = scmp.eq.s32.totalorder %s37, 0
      %p223 = por %p221, %p222
      %s225 = sadd.s32 %s224, 1
      %p228 = scmp.eq.s32.totalorder %s31, 1
      %p229 = scmp.ne.s32.totalorder %s224, %s226
      %p230 = scmp.eq.s32.totalorder %s31, 0
      %p231 = por %p229, %p230
      %p232 = scmp.ne.s32.totalorder %s224, %s226
      %p233 = scmp.eq.s32.totalorder %s36, 1
      %p234 = por %p232, %p233
      %p235 = scmp.ne.s32.totalorder %s226, %s227
      %p236 = scmp.eq.s32.totalorder %s36, 0
      %p237 = por %p235, %p236
      %p238 = scmp.ne.s32.totalorder %s226, %s227
      %p239 = scmp.eq.s32.totalorder %s37, 1
      %p240 = por %p238, %p239
      %p242 = scmp.ne.s32.totalorder %s227, %s241
      %p243 = scmp.eq.s32.totalorder %s37, 0
      %p244 = por %p242, %p243
      %s246 = sadd.s32 %s245, 1
      %p249 = scmp.eq.s32.totalorder %s31, 1
      %p250 = scmp.ne.s32.totalorder %s245, %s247
      %p251 = scmp.eq.s32.totalorder %s31, 0
      %p252 = por %p250, %p251
      %p253 = scmp.ne.s32.totalorder %s245, %s247
      %p254 = scmp.eq.s32.totalorder %s36, 1
      %p255 = por %p253, %p254
      %p256 = scmp.ne.s32.totalorder %s247, %s248
      %p257 = scmp.eq.s32.totalorder %s36, 0
      %p258 = por %p256, %p257
      %p259 = scmp.ne.s32.totalorder %s247, %s248
      %p260 = scmp.eq.s32.totalorder %s37, 1
      %p261 = por %p259, %p260
      %p263 = scmp.ne.s32.totalorder %s248, %s262
      %p264 = scmp.eq.s32.totalorder %s37, 0
      %p265 = por %p263, %p264
      %s267 = sadd.s32 %s266, 1
      %p270 = scmp.eq.s32.totalorder %s31, 1
      %p271 = scmp.ne.s32.totalorder %s266, %s268
      %p272 = scmp.eq.s32.totalorder %s31, 0
      %p273 = por %p271, %p272
      %p274 = scmp.ne.s32.totalorder %s266, %s268
      %p275 = scmp.eq.s32.totalorder %s36, 1
      %p276 = por %p274, %p275
      %p277 = scmp.ne.s32.totalorder %s268, %s269
      %p278 = scmp.eq.s32.totalorder %s36, 0
      %p279 = por %p277, %p278
      %p280 = scmp.ne.s32.totalorder %s268, %s269
      %p281 = scmp.eq.s32.totalorder %s37, 1
      %p282 = por %p280, %p281
      %p284 = scmp.ne.s32.totalorder %s269, %s283
      %p285 = scmp.eq.s32.totalorder %s37, 0
      %p286 = por %p284, %p285
      %s288 = sadd.s32 %s287, 1
      %p291 = scmp.eq.s32.totalorder %s31, 1
      %p292 = scmp.ne.s32.totalorder %s287, %s289
      %p293 = scmp.eq.s32.totalorder %s31, 0
      %p294 = por %p292, %p293
      %p295 = scmp.ne.s32.totalorder %s287, %s289
      %p296 = scmp.eq.s32.totalorder %s36, 1
      %p297 = por %p295, %p296
      %p298 = scmp.ne.s32.totalorder %s289, %s290
      %p299 = scmp.eq.s32.totalorder %s36, 0
      %p300 = por %p298, %p299
      %p301 = scmp.ne.s32.totalorder %s289, %s290
      %p302 = scmp.eq.s32.totalorder %s37, 1
      %p303 = por %p301, %p302
      %p305 = scmp.ne.s32.totalorder %s290, %s304
      %p306 = scmp.eq.s32.totalorder %s37, 0
      %p307 = por %p305, %p306
      %s309 = sadd.s32 %s308, 1
      %p312 = scmp.eq.s32.totalorder %s31, 1
      %p313 = scmp.ne.s32.totalorder %s308, %s310
      %p314 = scmp.eq.s32.totalorder %s31, 0
      %p315 = por %p313, %p314
      %p316 = scmp.ne.s32.totalorder %s308, %s310
      %p317 = scmp.eq.s32.totalorder %s36, 1
      %p318 = por %p316, %p317
      %p319 = scmp.ne.s32.totalorder %s310, %s311
      %p320 = scmp.eq.s32.totalorder %s36, 0
      %p321 = por %p319, %p320
      %p322 = scmp.ne.s32.totalorder %s310, %s311
      %p323 = scmp.eq.s32.totalorder %s37, 1
      %p324 = por %p322, %p323
      %p326 = scmp.ne.s32.totalorder %s311, %s325
      %p327 = scmp.eq.s32.totalorder %s37, 0
      %p328 = por %p326, %p327
      %s329 = ssub.s32 %s38, %s50
      %s330 = ssub.s32 %s39, %s46
      %s331 = sor.u32 %s329, %s330
      %p332 = scmp.eq.s32.totalorder %s331, 0
      %s334 = sadd.s32 %s333, 1
      %s335 = scalar_select %p332, %s333, %s334
      %p338 = pneg %p332
      %p339 = scmp.eq.s32.totalorder %s31, 1
      %p340 = por %p338, %p339
      %p341 = scmp.ne.s32.totalorder %s333, %s336
      %p342 = scmp.eq.s32.totalorder %s31, 0
      %p343 = por %p341, %p342
      %p344 = scmp.ne.s32.totalorder %s333, %s336
      %p345 = scmp.eq.s32.totalorder %s36, 1
      %p346 = por %p344, %p345
      %p347 = scmp.ne.s32.totalorder %s336, %s337
      %p348 = scmp.eq.s32.totalorder %s36, 0
      %p349 = por %p347, %p348
      %p350 = scmp.ne.s32.totalorder %s336, %s337
      %p351 = scmp.eq.s32.totalorder %s37, 1
      %p352 = por %p350, %p351
      %p354 = scmp.ne.s32.totalorder %s337, %s353
      %p355 = scmp.eq.s32.totalorder %s37, 0
      %p356 = por %p354, %p355
      %s357 = ssub.s32 %s38, %s50
      %s358 = ssub.s32 %s39, %s46
      %s359 = sor.u32 %s357, %s358
      %p360 = scmp.eq.s32.totalorder %s359, 0
      %s362 = sadd.s32 %s361, 1
      %s363 = scalar_select %p360, %s361, %s362
      %p366 = pneg %p360
      %p367 = scmp.eq.s32.totalorder %s31, 1
      %p368 = por %p366, %p367
      %p369 = scmp.ne.s32.totalorder %s361, %s364
      %p370 = scmp.eq.s32.totalorder %s31, 0
      %p371 = por %p369, %p370
      %p372 = scmp.ne.s32.totalorder %s361, %s364
      %p373 = scmp.eq.s32.totalorder %s36, 1
      %p374 = por %p372, %p373
      %p375 = scmp.ne.s32.totalorder %s364, %s365
      %p376 = scmp.eq.s32.totalorder %s36, 0
      %p377 = por %p375, %p376
      %p378 = scmp.ne.s32.totalorder %s364, %s365
      %p379 = scmp.eq.s32.totalorder %s37, 1
      %p380 = por %p378, %p379
      %p382 = scmp.ne.s32.totalorder %s365, %s381
      %p383 = scmp.eq.s32.totalorder %s37, 0
      %p384 = por %p382, %p383
      %p385 = scmp.le.s32.totalorder 1, %s31
      %p386 = scmp.lt.s32.totalorder %s31, 3
      %p387 = pnand %p385, %p386
      %p388 = pneg %p387
      // Predicated region
      $region9: #{encoder_forward.4} parent=5 // pred_check
        _
      $region10: #{encoder_forward.4} parent=5 // pred_check_branch
        %390 = sbr.rel (%p387) target = $region12
      $region11: #{encoder_forward.4} parent=5 // pred_region
        %s391 = ssub.s32 %s31, 1
        // Predicated region
        $region13: #{encoder_forward.4} parent=11 // pred_check
          %p392 = pneg %p90
        $region14: #{encoder_forward.4} parent=11 // pred_check_branch
          %394 = sbr.rel (%p392) target = $region16
        $region15: #{encoder_forward.4} parent=11 // pred_region
          _
        $region16: #{encoder_forward.4} parent=11 // pred_fallthru
          _
        // Predicated region
        $region17: #{encoder_forward.4} parent=11 // pred_check
          %p395 = pneg %p111
        $region18: #{encoder_forward.4} parent=11 // pred_check_branch
          %397 = sbr.rel (%p395) target = $region20
        $region19: #{encoder_forward.4} parent=11 // pred_region
          _
        $region20: #{encoder_forward.4} parent=11 // pred_fallthru
          _
        // Predicated region
        $region21: #{encoder_forward.4} parent=11 // pred_check
          %p398 = pneg %p132
        $region22: #{encoder_forward.4} parent=11 // pred_check_branch
          %400 = sbr.rel (%p398) target = $region24
        $region23: #{encoder_forward.4} parent=11 // pred_region
          _
        $region24: #{encoder_forward.4} parent=11 // pred_fallthru
          _
        // Predicated region
        $region25: #{encoder_forward.4} parent=11 // pred_check
          %p401 = pneg %p153
        $region26: #{encoder_forward.4} parent=11 // pred_check_branch
          %403 = sbr.rel (%p401) target = $region28
        $region27: #{encoder_forward.4} parent=11 // pred_region
          _
        $region28: #{encoder_forward.4} parent=11 // pred_fallthru
          _
        // Predicated region
        $region29: #{encoder_forward.4} parent=11 // pred_check
          %p404 = pneg %p174
        $region30: #{encoder_forward.4} parent=11 // pred_check_branch
          %406 = sbr.rel (%p404) target = $region32
        $region31: #{encoder_forward.4} parent=11 // pred_region
          _
        $region32: #{encoder_forward.4} parent=11 // pred_fallthru
          _
        // Predicated region
        $region33: #{encoder_forward.4} parent=11 // pred_check
          %p407 = pneg %p195
        $region34: #{encoder_forward.4} parent=11 // pred_check_branch
          %409 = sbr.rel (%p407) target = $region36
        $region35: #{encoder_forward.4} parent=11 // pred_region
          _
        $region36: #{encoder_forward.4} parent=11 // pred_fallthru
          _
        // Predicated region
        $region37: #{encoder_forward.4} parent=11 // pred_check
          %p410 = pneg %p216
        $region38: #{encoder_forward.4} parent=11 // pred_check_branch
          %412 = sbr.rel (%p410) target = $region40
        $region39: #{encoder_forward.4} parent=11 // pred_region
          _
        $region40: #{encoder_forward.4} parent=11 // pred_fallthru
          _
        // Predicated region
        $region41: #{encoder_forward.4} parent=11 // pred_check
          %p413 = pneg %p237
        $region42: #{encoder_forward.4} parent=11 // pred_check_branch
          %415 = sbr.rel (%p413) target = $region44
        $region43: #{encoder_forward.4} parent=11 // pred_region
          _
        $region44: #{encoder_forward.4} parent=11 // pred_fallthru
          _
        // Predicated region
        $region45: #{encoder_forward.4} parent=11 // pred_check
          %p416 = pneg %p258
        $region46: #{encoder_forward.4} parent=11 // pred_check_branch
          %418 = sbr.rel (%p416) target = $region48
        $region47: #{encoder_forward.4} parent=11 // pred_region
          _
        $region48: #{encoder_forward.4} parent=11 // pred_fallthru
          _
        // Predicated region
        $region49: #{encoder_forward.4} parent=11 // pred_check
          %p419 = pneg %p279
        $region50: #{encoder_forward.4} parent=11 // pred_check_branch
          %421 = sbr.rel (%p419) target = $region52
        $region51: #{encoder_forward.4} parent=11 // pred_region
          _
        $region52: #{encoder_forward.4} parent=11 // pred_fallthru
          _
        // Predicated region
        $region53: #{encoder_forward.4} parent=11 // pred_check
          %p422 = pneg %p300
        $region54: #{encoder_forward.4} parent=11 // pred_check_branch
          %424 = sbr.rel (%p422) target = $region56
        $region55: #{encoder_forward.4} parent=11 // pred_region
          _
        $region56: #{encoder_forward.4} parent=11 // pred_fallthru
          _
        // Predicated region
        $region57: #{encoder_forward.4} parent=11 // pred_check
          %p425 = pneg %p321
        $region58: #{encoder_forward.4} parent=11 // pred_check_branch
          %427 = sbr.rel (%p425) target = $region60
        $region59: #{encoder_forward.4} parent=11 // pred_region
          _
        $region60: #{encoder_forward.4} parent=11 // pred_fallthru
          _
      $region12: #{encoder_forward.4} parent=5 // pred_fallthru
        _
      %p428 = scmp.lt.s32.totalorder %s31, 2
      // Predicated region
      $region61: #{encoder_forward.4} parent=5 // pred_check
        %p429 = pneg %p428
      $region62: #{encoder_forward.4} parent=5 // pred_check_branch
        %431 = sbr.rel (%p429) target = $region64
      $region63: #{encoder_forward.4} parent=5 // pred_region
        // Predicated region
        $region65: #{encoder_forward.4} parent=63 // pred_check
          %p432 = pneg %p63
        $region66: #{encoder_forward.4} parent=63 // pred_check_branch
          %434 = sbr.rel (%p432) target = $region68
        $region67: #{encoder_forward.4} parent=63 // pred_region
          %p435 = scmp.lt.s32.totalorder %s38, 1
          %s436 = scalar_select %p435, %s38, 1
          %s437 = smul.addr %s436, 8
          %s438 = scalar_lea.vmem %s1, %s437
        $region68: #{encoder_forward.4} parent=63 // pred_fallthru
          _
      $region64: #{encoder_forward.4} parent=5 // pred_fallthru
        _
      %p439 = scmp.le.s32.totalorder 1, %s31
      %p440 = scmp.lt.s32.totalorder %s31, 3
      %p441 = pnand %p439, %p440
      %p442 = pneg %p441
      // Predicated region
      $region69: #{encoder_forward.4} parent=5 // pred_check
        _
      $region70: #{encoder_forward.4} parent=5 // pred_check_branch
        %444 = sbr.rel (%p441) target = $region72
      $region71: #{encoder_forward.4} parent=5 // pred_region
        %s445 = ssub.s32 %s31, 1
        %p446 = scmp.lt.s32.totalorder %s40, 1
        %s447 = scalar_select %p446, %s40, 1
        %s448 = smul.addr %s447, 8
        %s449 = scalar_lea.vmem %s1, %s448
        %p450 = pneg %p69
        %p451 = pneg %p66
        %p452 = pneg %p90
        %p453 = pneg %p87
        %p454 = pneg %p111
        %p455 = pneg %p108
        %p456 = pneg %p132
        %p457 = pneg %p129
        %p458 = pneg %p153
        %p459 = pneg %p150
        %p460 = pneg %p174
        %p461 = pneg %p171
        %p462 = pneg %p195
        %p463 = pneg %p192
        %p464 = pneg %p216
        %p465 = pneg %p213
        %p466 = pneg %p237
        %p467 = pneg %p234
        %p468 = pneg %p258
        %p469 = pneg %p255
        %p470 = pneg %p279
        %p471 = pneg %p276
        %p472 = pneg %p300
        %p473 = pneg %p297
        %p474 = pneg %p321
        %p475 = pneg %p318
        %p476 = pneg %p349
        %p477 = pneg %p346
        %p478 = scmp.lt.s32.totalorder %s40, 1
        %s479 = scalar_select %p478, %s40, 1
        %p480 = scmp.lt.s32.totalorder %s41, 0
        %s481 = scalar_select %p480, %s41, 0
        %s482 = sadd.s32 %s481, %s479
        %s483 = smul.addr %s482, 8
        %s484 = scalar_lea.vmem %s14, %s483
        %p485 = pneg %p377
        %p486 = pneg %p374
        %s487 = sand.u32 %s364, 1
        %s488 = scalar_lea.sflag [#allocation8], %s487
        %s489 = sand.u32 %s364, 1
        %s490 = smul.addr %s489, 8
        %s491 = scalar_lea.vmem [#allocation7], %s490
        %p492 = scmp.lt.s32.totalorder %s40, 1
        %s493 = scalar_select %p492, %s40, 1
        %s494 = smul.addr %s493, 8
        %s495 = scalar_lea.vmem %s1, %s494
        %p496 = scmp.lt.s32.totalorder %s40, 1
        %s497 = scalar_select %p496, %s40, 1
        %p498 = scmp.lt.s32.totalorder %s41, 0
        %s499 = scalar_select %p498, %s41, 0
        %s500 = sadd.s32 %s499, %s497
        %s501 = smul.addr %s500, 8
        %s502 = scalar_lea.vmem %s14, %s501
        %s504 = sld [smem:[#allocation6 + %s40]]
        %p505 = scmp.eq.s32.totalorder %s41, 0
        // Predicated region
        $region73: #{encoder_forward.4} parent=71 // pred_check
          %p506 = pneg %p505
        $region74: #{encoder_forward.4} parent=71 // pred_check_branch
          %508 = sbr.rel (%p506) target = $region76
        $region75: #{encoder_forward.4} parent=71 // pred_region
          %v509 = vld [vmem:[%s495] sm:$0xff]
          %v510 = vpack.c.bf16 %v509, %v509
          %v511 = vld [vmem:[%s2] sm:$0xf]
          %v512 = vld [vmem:[%s2 + $0x4] sm:$0xf]
          %v513 = vld [vmem:[%s2 + $0x8] sm:$0xf]
          %v514 = vld [vmem:[%s2 + $0xc] sm:$0xf]
          %v515 = vld [vmem:[%s3] sm:$0x1]
          %v517 = vlaneseq
          %v518 = vshrl.u32 %v517, 7
          %v519 = vsub.s32 0, %v518
          %v520 = vrot.slane %v515, %v519
          %v526 = vunpack.c.l.b16 %v511
          %v527 = vunpack.c.l.b16 %v512
          %v528 = vunpack.c.l.b16 %v513
          %v529 = vunpack.c.l.b16 %v514
          %v530 = vpack.c.b16 %v527, %v526
          %v531 = vpack.c.b16 %v529, %v528
          %vm534 = vcmask 261120
          %v536 = vsel %vm534, %v510, 0
          %538 = vmatprep.subr.bf16.mxu0 0
          %539 = vmatpush1.bf16.msra.mxu0 0
          %540 = vmatprep.subr.bf16.mxu0 0
          %541 = vmatpush1.bf16.msra.mxu0 0
          %542 = vmatprep.subr.bf16.mxu0 0
          %543 = vmatpush1.bf16.msra.mxu0 0
          %544 = vmatprep.subr.bf16.mxu0 0
          %545 = vmatpush1.bf16.msra.mxu0 0
          %546 = vmatprep.subr.bf16.mxu0 0
          %547 = vmatpush1.bf16.msra.mxu0 0
          %548 = vmatprep.subr.bf16.mxu0 0
          %549 = vmatpush1.bf16.msra.mxu0 0
          %550 = vmatprep.subr.bf16.mxu0 0
          %551 = vmatpush1.bf16.msra.mxu0 %v531
          %552 = vmatprep.subr.bf16.mxu0 0
          %553 = vmatpush1.bf16.msra.mxu0 %v530
          %554 = vmatprep.subr.bf16.mxu0 0
          %555 = vmatpush2.bf16.msra.mxu0 0
          %556 = vmatprep.subr.bf16.mxu0 0
          %557 = vmatpush2.bf16.msra.mxu0 0
          %558 = vmatprep.subr.bf16.mxu0 0
          %559 = vmatpush2.bf16.msra.mxu0 0
          %560 = vmatprep.subr.bf16.mxu0 0
          %561 = vmatpush2.bf16.msra.mxu0 0
          %562 = vmatprep.subr.bf16.mxu0 0
          %563 = vmatpush2.bf16.msra.mxu0 0
          %564 = vmatprep.subr.bf16.mxu0 0
          %565 = vmatpush2.bf16.msra.mxu0 0
          %566 = vmatprep.subr.bf16.mxu0 0
          %567 = vmatpush2.bf16.msra.mxu0 0
          %568 = vmatprep.subr.bf16.mxu0 0
          %569 = vmatpush2.bf16.msra.mxu0 0
          %570 = vmatprep.mubr.bf16.mxu0 0
          %571 = vmatmul.mubr.bf16.gmra.mxu0 %v536
          %v572 = vpop.f32.mrf.mxu0
          %v573 = vadd.f32 %v520, %v572
          %v574 = vpop.f32.mrf.mxu0
          %v575 = vpop.f32.mrf.mxu0
          %v576 = vpop.f32.mrf.mxu0
          %577 = vdwg.mxu0
          %v578 = vpack.c.bf16 %v573, %v573
          %vm579 = vcmask 125952
          %580 = vst.msk [vmem:[#allocation2] sm:$0xf] %vm579, %v578
          %v582 = vunpack.c.l.b16 %v578
          %v583 = vpack.c.b16 %v582, %v582
          %584 = vrot.lane.b32.xlu0 %v583, 96
          %v585 = vpop.permute.xlu0 %584
          %587 = vst.msk [vmem:[#allocation3] sm:$0xf] %vm579, %v585
          %588 = vrot.lane.b32.xlu0 %v583, 64
          %v589 = vpop.permute.xlu0 %588
          %591 = vst.msk [vmem:[#allocation4] sm:$0xf] %vm579, %v589
          %592 = vrot.lane.b32.xlu0 %v583, 112
          %v593 = vpop.permute.xlu0 %592
          %s595 = scalar_lea.vmem [#allocation2], 4
          %596 = vst.msk [vmem:[%s595] sm:$0xf] %vm579, %v593
          %597 = vrot.lane.b32.xlu0 %v583, 80
          %v598 = vpop.permute.xlu0 %597
          %s600 = scalar_lea.vmem [#allocation3], 4
          %601 = vst.msk [vmem:[%s600] sm:$0xf] %vm579, %v598
          %602 = vrot.lane.b32.xlu0 %v583, 48
          %v603 = vpop.permute.xlu0 %602
          %s605 = scalar_lea.vmem [#allocation4], 4
          %606 = vst.msk [vmem:[%s605] sm:$0xf] %vm579, %v603
        $region76: #{encoder_forward.4} parent=71 // pred_fallthru
          _
        %s607 = smul.u32 %s41, 8
        %s608 = scalar_lea.vmem %s495, %s607
        %v609 = vld [vmem:[%s608] sm:$0xff]
        %s610 = sshra.s32 %s607, 3
        %s611 = sand.u32 %s607, 7
        %s612 = smul.addr %s610, 4
        %s613 = scalar_lea.vmem [#allocation2], %s612
        %v614 = vld [vmem:[%s613] sm:$0xf]
        %v615 = vld [vmem:[%s613 + $0x4] sm:$0xf]
        %v616 = vld [vmem:[#allocation3] sm:$0xf]
        %v617 = vld [vmem:[#allocation3 + $0x4] sm:$0xf]
        %vm618 = vcmask 130048
        %v620 = vsel %vm618, %v614, 0
        %v623 = vsel %vm618, %v616, 0
        %625 = vmatprep.subr.bf16.mxu0 0
        %626 = vmatpush1.bf16.xpose.msra.mxu0 0
        %627 = vmatprep.subr.bf16.mxu0 0
        %628 = vmatpush1.bf16.xpose.msra.mxu0 0
        %629 = vmatprep.subr.bf16.mxu0 0
        %630 = vmatpush1.bf16.xpose.msra.mxu0 0
        %631 = vmatprep.subr.bf16.mxu0 0
        %632 = vmatpush1.bf16.xpose.msra.mxu0 0
        %633 = vmatprep.subr.bf16.mxu0 0
        %634 = vmatpush1.bf16.xpose.msra.mxu0 0
        %635 = vmatprep.subr.bf16.mxu0 0
        %636 = vmatpush1.bf16.xpose.msra.mxu0 0
        %637 = vmatprep.subr.bf16.mxu0 0
        %638 = vmatpush1.bf16.xpose.msra.mxu0 0
        %639 = vmatprep.subr.bf16.mxu0 0
        %640 = vmatpush1.bf16.xpose.msra.mxu0 %v623
        %641 = vmatprep.subr.bf16.mxu0 0
        %642 = vmatpush2.bf16.xpose.msra.mxu0 0
        %643 = vmatprep.subr.bf16.mxu0 0
        %644 = vmatpush2.bf16.xpose.msra.mxu0 0
        %645 = vmatprep.subr.bf16.mxu0 0
        %646 = vmatpush2.bf16.xpose.msra.mxu0 0
        %647 = vmatprep.subr.bf16.mxu0 0
        %648 = vmatpush2.bf16.xpose.msra.mxu0 0
        %649 = vmatprep.subr.bf16.mxu0 0
        %650 = vmatpush2.bf16.xpose.msra.mxu0 0
        %651 = vmatprep.subr.bf16.mxu0 0
        %652 = vmatpush2.bf16.xpose.msra.mxu0 0
        %653 = vmatprep.subr.bf16.mxu0 0
        %654 = vmatpush2.bf16.xpose.msra.mxu0 0
        %655 = vmatprep.subr.bf16.mxu0 0
        %656 = vmatpush2.bf16.xpose.msra.mxu0 0
        %657 = vmatprep.mubr.bf16.mxu0 0
        %658 = vmatmul.mubr.bf16.gmra.mxu0 %v620
        %v659 = vpop.f32.mrf.mxu0
        %v660 = vadd.f32 0.0, %v659
        %v661 = vpop.f32.mrf.mxu0
        %v662 = vpop.f32.mrf.mxu0
        %v663 = vpop.f32.mrf.mxu0
        %664 = vdwg.mxu0
        %v666 = vsel %vm618, %v615, 0
        %v669 = vsel %vm618, %v617, 0
        %671 = vmatprep.subr.bf16.mxu0 0
        %672 = vmatpush1.bf16.xpose.msra.mxu0 0
        %673 = vmatprep.subr.bf16.mxu0 0
        %674 = vmatpush1.bf16.xpose.msra.mxu0 0
        %675 = vmatprep.subr.bf16.mxu0 0
        %676 = vmatpush1.bf16.xpose.msra.mxu0 0
        %677 = vmatprep.subr.bf16.mxu0 0
        %678 = vmatpush1.bf16.xpose.msra.mxu0 0
        %679 = vmatprep.subr.bf16.mxu0 0
        %680 = vmatpush1.bf16.xpose.msra.mxu0 0
        %681 = vmatprep.subr.bf16.mxu0 0
        %682 = vmatpush1.bf16.xpose.msra.mxu0 0
        %683 = vmatprep.subr.bf16.mxu0 0
        %684 = vmatpush1.bf16.xpose.msra.mxu0 0
        %685 = vmatprep.subr.bf16.mxu0 0
        %686 = vmatpush1.bf16.xpose.msra.mxu0 %v669
        %687 = vmatprep.subr.bf16.mxu0 0
        %688 = vmatpush2.bf16.xpose.msra.mxu0 0
        %689 = vmatprep.subr.bf16.mxu0 0
        %690 = vmatpush2.bf16.xpose.msra.mxu0 0
        %691 = vmatprep.subr.bf16.mxu0 0
        %692 = vmatpush2.bf16.xpose.msra.mxu0 0
        %693 = vmatprep.subr.bf16.mxu0 0
        %694 = vmatpush2.bf16.xpose.msra.mxu0 0
        %695 = vmatprep.subr.bf16.mxu0 0
        %696 = vmatpush2.bf16.xpose.msra.mxu0 0
        %697 = vmatprep.subr.bf16.mxu0 0
        %698 = vmatpush2.bf16.xpose.msra.mxu0 0
        %699 = vmatprep.subr.bf16.mxu0 0
        %700 = vmatpush2.bf16.xpose.msra.mxu0 0
        %701 = vmatprep.subr.bf16.mxu0 0
        %702 = vmatpush2.bf16.xpose.msra.mxu0 0
        %703 = vmatprep.mubr.bf16.mxu0 0
        %704 = vmatmul.mubr.bf16.gmra.mxu0 %v666
        %v705 = vpop.f32.mrf.mxu0
        %v706 = vadd.f32 0.0, %v705
        %v707 = vpop.f32.mrf.mxu0
        %v708 = vpop.f32.mrf.mxu0
        %v709 = vpop.f32.mrf.mxu0
        %710 = vdwg.mxu0
        %v711 = vmul.f32 %v660, 0.25
        %v712 = vmul.f32 %v706, 0.25
        %v713 = vlaneseq
        %v714 = vand.u32 %v713, 127
        %v715 = vstv %s504
        %vm716 = vcmp.ge.s32.totalorder %v714, %v715
        %v717 = vsel %vm716, 1, 0
        %vm718 = vcmp.eq.s32.totalorder %v717, 1
        %v719 = vsel %vm718, -1e+30, %v711
        %v720 = vsel %vm718, -1e+30, %v712
        %vm721 = vcmask 64512
        %v722 = vsel %vm721, %v719, -inf
        %723 = vmax.xlane.f32.xlu0 %v722
        %v724 = vpop.xlane.xlu0 %723
        %v725 = vsel %vm721, %v720, -inf
        %726 = vmax.xlane.f32.xlu0 %v725
        %v727 = vpop.xlane.xlu0 %726
        %v728 = vsub.f32 %v719, %v724
        %v729 = vsub.f32 %v720, %v727
        %v730 = vmul.f32 %v728, 1.442695
        %v731 = vpow.pop %v730
        %v732 = vmul.f32 %v729, 1.442695
        %v733 = vpow.pop %v732
        %v734 = vsel %vm721, %v731, 0.0
        %735 = vadd.xlane.f32.xlu0 %v734
        %v736 = vpop.xlane.xlu0 %735
        %v737 = vsel %vm721, %v733, 0.0
        %738 = vadd.xlane.f32.xlu0 %v737
        %v739 = vpop.xlane.xlu0 %738
        %v740 = vrcp.pop %v736
        %v741 = vmul.f32 1.0, %v740
        %v742 = vrcp.pop %v739
        %v743 = vmul.f32 1.0, %v742
        %v744 = vmul.f32 %v731, %v741
        %v745 = vmul.f32 %v733, %v743
        %v746 = vpack.c.bf16 %v744, %v744
        %v747 = vpack.c.bf16 %v745, %v745
        %vm748 = vcmask 60416
        %749 = vst.msk [vmem:[%s491] sm:$0xf] %vm748, %v746
        %750 = vst.msk [vmem:[%s491 + $0x4] sm:$0xf] %vm748, %v747
        %v751 = vld [vmem:[#allocation4] sm:$0xf]
        %v752 = vld [vmem:[#allocation4 + $0x4] sm:$0xf]
        %v754 = vsel %vm721, %v746, 0
        %vm756 = vcmask 1043456
        %v758 = vsel %vm756, %v751, 0
        %760 = vmatprep.subr.bf16.mxu0 0
        %761 = vmatpush1.bf16.msra.mxu0 0
        %762 = vmatprep.subr.bf16.mxu0 0
        %763 = vmatpush1.bf16.msra.mxu0 0
        %764 = vmatprep.subr.bf16.mxu0 0
        %765 = vmatpush1.bf16.msra.mxu0 0
        %766 = vmatprep.subr.bf16.mxu0 0
        %767 = vmatpush1.bf16.msra.mxu0 0
        %768 = vmatprep.subr.bf16.mxu0 0
        %769 = vmatpush1.bf16.msra.mxu0 0
        %770 = vmatprep.subr.bf16.mxu0 0
        %771 = vmatpush1.bf16.msra.mxu0 0
        %772 = vmatprep.subr.bf16.mxu0 0
        %773 = vmatpush1.bf16.msra.mxu0 0
        %774 = vmatprep.subr.bf16.mxu0 0
        %775 = vmatpush1.bf16.msra.mxu0 %v758
        %776 = vmatprep.subr.bf16.mxu0 0
        %777 = vmatpush2.bf16.msra.mxu0 0
        %778 = vmatprep.subr.bf16.mxu0 0
        %779 = vmatpush2.bf16.msra.mxu0 0
        %780 = vmatprep.subr.bf16.mxu0 0
        %781 = vmatpush2.bf16.msra.mxu0 0
        %782 = vmatprep.subr.bf16.mxu0 0
        %783 = vmatpush2.bf16.msra.mxu0 0
        %784 = vmatprep.subr.bf16.mxu0 0
        %785 = vmatpush2.bf16.msra.mxu0 0
        %786 = vmatprep.subr.bf16.mxu0 0
        %787 = vmatpush2.bf16.msra.mxu0 0
        %788 = vmatprep.subr.bf16.mxu0 0
        %789 = vmatpush2.bf16.msra.mxu0 0
        %790 = vmatprep.subr.bf16.mxu0 0
        %791 = vmatpush2.bf16.msra.mxu0 0
        %792 = vmatprep.mubr.bf16.mxu0 0
        %793 = vmatmul.mubr.bf16.gmra.mxu0 %v754
        %v794 = vpop.f32.mrf.mxu0
        %v795 = vadd.f32 0.0, %v794
        %v796 = vpop.f32.mrf.mxu0
        %v797 = vpop.f32.mrf.mxu0
        %v798 = vpop.f32.mrf.mxu0
        %799 = vdwg.mxu0
        %v801 = vsel %vm721, %v747, 0
        %v804 = vsel %vm756, %v752, 0
        %806 = vmatprep.subr.bf16.mxu0 0
        %807 = vmatpush1.bf16.msra.mxu0 0
        %808 = vmatprep.subr.bf16.mxu0 0
        %809 = vmatpush1.bf16.msra.mxu0 0
        %810 = vmatprep.subr.bf16.mxu0 0
        %811 = vmatpush1.bf16.msra.mxu0 0
        %812 = vmatprep.subr.bf16.mxu0 0
        %813 = vmatpush1.bf16.msra.mxu0 0
        %814 = vmatprep.subr.bf16.mxu0 0
        %815 = vmatpush1.bf16.msra.mxu0 0
        %816 = vmatprep.subr.bf16.mxu0 0
        %817 = vmatpush1.bf16.msra.mxu0 0
        %818 = vmatprep.subr.bf16.mxu0 0
        %819 = vmatpush1.bf16.msra.mxu0 0
        %820 = vmatprep.subr.bf16.mxu0 0
        %821 = vmatpush1.bf16.msra.mxu0 %v804
        %822 = vmatprep.subr.bf16.mxu0 0
        %823 = vmatpush2.bf16.msra.mxu0 0
        %824 = vmatprep.subr.bf16.mxu0 0
        %825 = vmatpush2.bf16.msra.mxu0 0
        %826 = vmatprep.subr.bf16.mxu0 0
        %827 = vmatpush2.bf16.msra.mxu0 0
        %828 = vmatprep.subr.bf16.mxu0 0
        %829 = vmatpush2.bf16.msra.mxu0 0
        %830 = vmatprep.subr.bf16.mxu0 0
        %831 = vmatpush2.bf16.msra.mxu0 0
        %832 = vmatprep.subr.bf16.mxu0 0
        %833 = vmatpush2.bf16.msra.mxu0 0
        %834 = vmatprep.subr.bf16.mxu0 0
        %835 = vmatpush2.bf16.msra.mxu0 0
        %836 = vmatprep.subr.bf16.mxu0 0
        %837 = vmatpush2.bf16.msra.mxu0 0
        %838 = vmatprep.mubr.bf16.mxu0 0
        %839 = vmatmul.mubr.bf16.gmra.mxu0 %v801
        %v840 = vpop.f32.mrf.mxu0
        %v841 = vadd.f32 0.0, %v840
        %v842 = vpop.f32.mrf.mxu0
        %v843 = vpop.f32.mrf.mxu0
        %v844 = vpop.f32.mrf.mxu0
        %845 = vdwg.mxu0
        %847 = vrot.lane.b32.xlu0 %v841, 16
        %v848 = vpop.permute.xlu0 %847
        %v850 = vsel %vm618, %v795, %v848
        %v851 = vpack.c.bf16 %v850, %v850
        %v852 = vld [vmem:[%s4] sm:$0xf]
        %v853 = vld [vmem:[%s4 + $0x4] sm:$0xf]
        %v854 = vld [vmem:[%s4 + $0x8] sm:$0xf]
        %v855 = vld [vmem:[%s4 + $0xc] sm:$0xf]
        %v856 = vld [vmem:[%s5] sm:$0x1]
        %v858 = vlaneseq
        %v859 = vshrl.u32 %v858, 7
        %v860 = vsub.s32 0, %v859
        %v861 = vrot.slane %v856, %v860
        %v867 = vunpack.c.l.b16 %v852
        %v868 = vunpack.c.l.b16 %v853
        %v869 = vunpack.c.l.b16 %v854
        %v870 = vunpack.c.l.b16 %v855
        %v871 = vpack.c.b16 %v868, %v867
        %v872 = vpack.c.b16 %v870, %v869
        %vm875 = vcmask 261120
        %v877 = vsel %vm875, %v851, 0
        %879 = vmatprep.subr.bf16.mxu0 0
        %880 = vmatpush1.bf16.msra.mxu0 0
        %881 = vmatprep.subr.bf16.mxu0 0
        %882 = vmatpush1.bf16.msra.mxu0 0
        %883 = vmatprep.subr.bf16.mxu0 0
        %884 = vmatpush1.bf16.msra.mxu0 0
        %885 = vmatprep.subr.bf16.mxu0 0
        %886 = vmatpush1.bf16.msra.mxu0 0
        %887 = vmatprep.subr.bf16.mxu0 0
        %888 = vmatpush1.bf16.msra.mxu0 0
        %889 = vmatprep.subr.bf16.mxu0 0
        %890 = vmatpush1.bf16.msra.mxu0 0
        %891 = vmatprep.subr.bf16.mxu0 0
        %892 = vmatpush1.bf16.msra.mxu0 %v872
        %893 = vmatprep.subr.bf16.mxu0 0
        %894 = vmatpush1.bf16.msra.mxu0 %v871
        %895 = vmatprep.subr.bf16.mxu0 0
        %896 = vmatpush2.bf16.msra.mxu0 0
        %897 = vmatprep.subr.bf16.mxu0 0
        %898 = vmatpush2.bf16.msra.mxu0 0
        %899 = vmatprep.subr.bf16.mxu0 0
        %900 = vmatpush2.bf16.msra.mxu0 0
        %901 = vmatprep.subr.bf16.mxu0 0
        %902 = vmatpush2.bf16.msra.mxu0 0
        %903 = vmatprep.subr.bf16.mxu0 0
        %904 = vmatpush2.bf16.msra.mxu0 0
        %905 = vmatprep.subr.bf16.mxu0 0
        %906 = vmatpush2.bf16.msra.mxu0 0
        %907 = vmatprep.subr.bf16.mxu0 0
        %908 = vmatpush2.bf16.msra.mxu0 0
        %909 = vmatprep.subr.bf16.mxu0 0
        %910 = vmatpush2.bf16.msra.mxu0 0
        %911 = vmatprep.mubr.bf16.mxu0 0
        %912 = vmatmul.mubr.bf16.gmra.mxu0 %v877
        %v913 = vpop.f32.mrf.mxu0
        %v914 = vadd.f32 %v861, %v913
        %v915 = vpop.f32.mrf.mxu0
        %v916 = vpop.f32.mrf.mxu0
        %v917 = vpop.f32.mrf.mxu0
        %918 = vdwg.mxu0
        %v919 = vadd.f32 %v914, %v609
        %v920 = vld [vmem:[%s6] sm:$0x1]
        %v921 = vld [vmem:[%s7] sm:$0x1]
        %v922 = vsel %vm875, %v919, 0.0
        %923 = vadd.xlane.f32.xlu0 %v922
        %v924 = vpop.xlane.xlu0 %923
        %v925 = vrcp.pop 32.0
        %v926 = vmul.f32 %v924, %v925
        %v927 = vsub.f32 %v919, %v926
        %v928 = vmul.f32 %v927, %v927
        %v929 = vsel %vm875, %v928, 0.0
        %930 = vadd.xlane.f32.xlu0 %v929
        %v931 = vpop.xlane.xlu0 %930
        %v932 = vmul.f32 %v931, %v925
        %v933 = vadd.f32 %v932, 1e-05
        %v934 = vrsqrt.pop %v933
        %v935 = vmul.f32 %v927, %v934
        %v937 = vlaneseq
        %v938 = vshrl.u32 %v937, 7
        %v939 = vsub.s32 0, %v938
        %v940 = vrot.slane %v920, %v939
        %v942 = vmul.f32 %v935, %v940
        %v944 = vlaneseq
        %v945 = vshrl.u32 %v944, 7
        %v946 = vsub.s32 0, %v945
        %v947 = vrot.slane %v921, %v946
        %v949 = vadd.f32 %v942, %v947
        %v950 = vlaneseq
        %v951 = vshrl.u32 %v950, 7
        %v952 = vstv %s607
        %v953 = vadd.s32 %v951, %v952
        %vm954 = vcmp.lt.s32.totalorder %v953, %v715
        %v955 = vsel %vm954, 1, 0
        %v956 = vcvt.s32.f32 %v955
        %v957 = vmul.f32 %v949, %v956
        %v958 = vpack.c.bf16 %v957, %v957
        %v959 = vld [vmem:[%s8] sm:$0xf]
        %v960 = vld [vmem:[%s8 + $0x4] sm:$0xf]
        %v961 = vld [vmem:[%s8 + $0x8] sm:$0xf]
        %v962 = vld [vmem:[%s8 + $0xc] sm:$0xf]
        %v963 = vld [vmem:[%s9] sm:$0x1]
        %v965 = vlaneseq
        %v966 = vshrl.u32 %v965, 7
        %v967 = vsub.s32 0, %v966
        %v968 = vrot.slane %v963, %v967
        %v974 = vunpack.c.l.b16 %v959
        %v975 = vunpack.c.l.b16 %v960
        %v976 = vunpack.c.l.b16 %v961
        %v977 = vunpack.c.l.b16 %v962
        %v978 = vpack.c.b16 %v975, %v974
        %v979 = vpack.c.b16 %v977, %v976
        %v983 = vsel %vm875, %v958, 0
        %985 = vmatprep.subr.bf16.mxu0 0
        %986 = vmatpush1.bf16.msra.mxu0 0
        %987 = vmatprep.subr.bf16.mxu0 0
        %988 = vmatpush1.bf16.msra.mxu0 0
        %989 = vmatprep.subr.bf16.mxu0 0
        %990 = vmatpush1.bf16.msra.mxu0 0
        %991 = vmatprep.subr.bf16.mxu0 0
        %992 = vmatpush1.bf16.msra.mxu0 0
        %993 = vmatprep.subr.bf16.mxu0 0
        %994 = vmatpush1.bf16.msra.mxu0 0
        %995 = vmatprep.subr.bf16.mxu0 0
        %996 = vmatpush1.bf16.msra.mxu0 0
        %997 = vmatprep.subr.bf16.mxu0 0
        %998 = vmatpush1.bf16.msra.mxu0 %v979
        %999 = vmatprep.subr.bf16.mxu0 0
        %1000 = vmatpush1.bf16.msra.mxu0 %v978
        %1001 = vmatprep.subr.bf16.mxu0 0
        %1002 = vmatpush2.bf16.msra.mxu0 0
        %1003 = vmatprep.subr.bf16.mxu0 0
        %1004 = vmatpush2.bf16.msra.mxu0 0
        %1005 = vmatprep.subr.bf16.mxu0 0
        %1006 = vmatpush2.bf16.msra.mxu0 0
        %1007 = vmatprep.subr.bf16.mxu0 0
        %1008 = vmatpush2.bf16.msra.mxu0 0
        %1009 = vmatprep.subr.bf16.mxu0 0
        %1010 = vmatpush2.bf16.msra.mxu0 0
        %1011 = vmatprep.subr.bf16.mxu0 0
        %1012 = vmatpush2.bf16.msra.mxu0 0
        %1013 = vmatprep.subr.bf16.mxu0 0
        %1014 = vmatpush2.bf16.msra.mxu0 0
        %1015 = vmatprep.subr.bf16.mxu0 0
        %1016 = vmatpush2.bf16.msra.mxu0 0
        %1017 = vmatprep.mubr.bf16.mxu0 0
        %1018 = vmatmul.mubr.bf16.gmra.mxu0 %v983
        %v1019 = vpop.f32.mrf.mxu0
        %v1020 = vadd.f32 %v968, %v1019
        %v1021 = vpop.f32.mrf.mxu0
        %v1022 = vpop.f32.mrf.mxu0
        %v1023 = vpop.f32.mrf.mxu0
        %1024 = vdwg.mxu0
        %v1025 = vmax.f32 %v1020, 0.0
        %v1026 = vpack.c.bf16 %v1025, %v1025
        %v1027 = vld [vmem:[%s10] sm:$0xf]
        %v1028 = vld [vmem:[%s10 + $0x4] sm:$0xf]
        %v1029 = vld [vmem:[%s10 + $0x8] sm:$0xf]
        %v1030 = vld [vmem:[%s10 + $0xc] sm:$0xf]
        %v1031 = vld [vmem:[%s10 + $0x10] sm:$0xf]
        %v1032 = vld [vmem:[%s10 + $0x14] sm:$0xf]
        %v1033 = vld [vmem:[%s10 + $0x18] sm:$0xf]
        %v1034 = vld [vmem:[%s10 + $0x1c] sm:$0xf]
        %v1035 = vld [vmem:[%s11] sm:$0x1]
        %v1037 = vlaneseq
        %v1038 = vshrl.u32 %v1037, 7
        %v1039 = vsub.s32 0, %v1038
        %v1040 = vrot.slane %v1035, %v1039
        %v1050 = vunpack.c.l.b16 %v1027
        %v1051 = vunpack.c.l.b16 %v1028
        %v1052 = vunpack.c.l.b16 %v1029
        %v1053 = vunpack.c.l.b16 %v1030
        %v1054 = vunpack.c.l.b16 %v1031
        %v1055 = vunpack.c.l.b16 %v1032
        %v1056 = vunpack.c.l.b16 %v1033
        %v1057 = vunpack.c.l.b16 %v1034
        %v1058 = vpack.c.b16 %v1051, %v1050
        %v1059 = vpack.c.b16 %v1053, %v1052
        %v1060 = vpack.c.b16 %v1055, %v1054
        %v1061 = vpack.c.b16 %v1057, %v1056
        %vm1066 = vcmask 523264
        %v1068 = vsel %vm1066, %v1026, 0
        %1070 = vmatprep.subr.bf16.mxu0 0
        %1071 = vmatpush1.bf16.msra.mxu0 0
        %1072 = vmatprep.subr.bf16.mxu0 0
        %1073 = vmatpush1.bf16.msra.mxu0 0
        %1074 = vmatprep.subr.bf16.mxu0 0
        %1075 = vmatpush1.bf16.msra.mxu0 0
        %1076 = vmatprep.subr.bf16.mxu0 0
        %1077 = vmatpush1.bf16.msra.mxu0 0
        %1078 = vmatprep.subr.bf16.mxu0 0
        %1079 = vmatpush1.bf16.msra.mxu0 %v1061
        %1080 = vmatprep.subr.bf16.mxu0 0
        %1081 = vmatpush1.bf16.msra.mxu0 %v1060
        %1082 = vmatprep.subr.bf16.mxu0 0
        %1083 = vmatpush1.bf16.msra.mxu0 %v1059
        %1084 = vmatprep.subr.bf16.mxu0 0
        %1085 = vmatpush1.bf16.msra.mxu0 %v1058
        %1086 = vmatprep.subr.bf16.mxu0 0
        %1087 = vmatpush2.bf16.msra.mxu0 0
        %1088 = vmatprep.subr.bf16.mxu0 0
        %1089 = vmatpush2.bf16.msra.mxu0 0
        %1090 = vmatprep.subr.bf16.mxu0 0
        %1091 = vmatpush2.bf16.msra.mxu0 0
        %1092 = vmatprep.subr.bf16.mxu0 0
        %1093 = vmatpush2.bf16.msra.mxu0 0
        %1094 = vmatprep.subr.bf16.mxu0 0
        %1095 = vmatpush2.bf16.msra.mxu0 0
        %1096 = vmatprep.subr.bf16.mxu0 0
        %1097 = vmatpush2.bf16.msra.mxu0 0
        %1098 = vmatprep.subr.bf16.mxu0 0
        %1099 = vmatpush2.bf16.msra.mxu0 0
        %1100 = vmatprep.subr.bf16.mxu0 0
        %1101 = vmatpush2.bf16.msra.mxu0 0
        %1102 = vmatprep.mubr.bf16.mxu0 0
        %1103 = vmatmul.mubr.bf16.gmra.mxu0 %v1068
        %v1104 = vpop.f32.mrf.mxu0
        %v1105 = vadd.f32 %v1040, %v1104
        %v1106 = vpop.f32.mrf.mxu0
        %v1107 = vpop.f32.mrf.mxu0
        %v1108 = vpop.f32.mrf.mxu0
        %1109 = vdwg.mxu0
        %v1110 = vadd.f32 %v1105, %v957
        %v1111 = vld [vmem:[%s12] sm:$0x1]
        %v1112 = vld [vmem:[%s13] sm:$0x1]
        %v1113 = vsel %vm875, %v1110, 0.0
        %1114 = vadd.xlane.f32.xlu0 %v1113
        %v1115 = vpop.xlane.xlu0 %1114
        %v1116 = vmul.f32 %v1115, %v925
        %v1117 = vsub.f32 %v1110, %v1116
        %v1118 = vmul.f32 %v1117, %v1117
        %v1119 = vsel %vm875, %v1118, 0.0
        %1120 = vadd.xlane.f32.xlu0 %v1119
        %v1121 = vpop.xlane.xlu0 %1120
        %v1122 = vmul.f32 %v1121, %v925
        %v1123 = vadd.f32 %v1122, 1e-05
        %v1124 = vrsqrt.pop %v1123
        %v1125 = vmul.f32 %v1117, %v1124
        %v1127 = vlaneseq
        %v1128 = vshrl.u32 %v1127, 7
        %v1129 = vsub.s32 0, %v1128
        %v1130 = vrot.slane %v1111, %v1129
        %v1132 = vmul.f32 %v1125, %v1130
        %v1134 = vlaneseq
        %v1135 = vshrl.u32 %v1134, 7
        %v1136 = vsub.s32 0, %v1135
        %v1137 = vrot.slane %v1112, %v1136
        %v1139 = vadd.f32 %v1132, %v1137
        %v1140 = vmul.f32 %v1139, %v956
        %1141 = vst.msk [vmem:[%s502] sm:$0xff] %vm875, %v1140
        %p1142 = scmp.lt.s32.totalorder %s40, 1
        %s1143 = scalar_select %p1142, %s40, 1
        %p1144 = scmp.lt.s32.totalorder %s41, 0
        %s1145 = scalar_select %p1144, %s41, 0
        %s1146 = sadd.s32 %s1145, %s1143
        %s1147 = smul.addr %s1146, 8
        %s1148 = scalar_lea.vmem %s14, %s1147
        %s1149 = sand.u32 %s364, 1
        %s1150 = scalar_lea.sflag [#allocation8], %s1149
        %s1151 = sand.u32 %s364, 1
        %s1152 = smul.addr %s1151, 8
        %s1153 = scalar_lea.vmem [#allocation7], %s1152
        // Predicated region
        $region77: #{encoder_forward.4} parent=71 // pred_check
          %p1154 = pneg %p346
        $region78: #{encoder_forward.4} parent=71 // pred_check_branch
          %1156 = sbr.rel (%p1154) target = $region80
        $region79: #{encoder_forward.4} parent=71 // pred_region
          _
        $region80: #{encoder_forward.4} parent=71 // pred_fallthru
          _
        // Predicated region
        $region81: #{encoder_forward.4} parent=71 // pred_check
          %p1157 = pneg %p374
        $region82: #{encoder_forward.4} parent=71 // pred_check_branch
          %1159 = sbr.rel (%p1157) target = $region84
        $region83: #{encoder_forward.4} parent=71 // pred_region
          %s1161 = ssub.s32 128, 128
          %1162 = vsyncadd %s1150, %s1161
          %s1163 = sadd.s32 %s41, %s40
          %s1164 = smul.addr %s1163, 64
          %s1165 = scalar_lea.hbm %s15, %s1164
          %s1166 = sshll.u32 %s1153, 4
          %s1167 = int_to_ptr.vmem [resolvable:$true] %s1166
          %1172 = dma.vmem_to_hbm [thread:$0]  %s1167, 128, %s1165, %s1150, 64, 128, 4
        $region84: #{encoder_forward.4} parent=71 // pred_fallthru
          _
      $region72: #{encoder_forward.4} parent=5 // pred_fallthru
        _
      %p1173 = scmp.le.s32.totalorder 2, %s31
      // Predicated region
      $region85: #{encoder_forward.4} parent=5 // pred_check
        %p1174 = pneg %p1173
      $region86: #{encoder_forward.4} parent=5 // pred_check_branch
        %1176 = sbr.rel (%p1174) target = $region88
      $region87: #{encoder_forward.4} parent=5 // pred_region
        %s1177 = ssub.s32 %s31, 2
        // Predicated region
        $region89: #{encoder_forward.4} parent=87 // pred_check
          %p1178 = pneg %p352
        $region90: #{encoder_forward.4} parent=87 // pred_check_branch
          %1180 = sbr.rel (%p1178) target = $region92
        $region91: #{encoder_forward.4} parent=87 // pred_region
          %p1181 = scmp.lt.s32.totalorder %s42, 1
          %s1182 = scalar_select %p1181, %s42, 1
          %p1183 = scmp.lt.s32.totalorder %s43, 0
          %s1184 = scalar_select %p1183, %s43, 0
          %s1185 = sadd.s32 %s1184, %s1182
          %s1186 = smul.addr %s1185, 8
          %s1187 = scalar_lea.vmem %s14, %s1186
        $region92: #{encoder_forward.4} parent=87 // pred_fallthru
          _
        // Predicated region
        $region93: #{encoder_forward.4} parent=87 // pred_check
          %p1188 = pneg %p380
        $region94: #{encoder_forward.4} parent=87 // pred_check_branch
          %1190 = sbr.rel (%p1188) target = $region96
        $region95: #{encoder_forward.4} parent=87 // pred_region
          %s1191 = sand.u32 %s365, 1
          %s1192 = scalar_lea.sflag [#allocation8], %s1191
          %s1193 = sand.u32 %s365, 1
          %s1194 = smul.addr %s1193, 8
          %s1195 = scalar_lea.vmem [#allocation7], %s1194
          %1196 = dma.done %s1192, 128
        $region96: #{encoder_forward.4} parent=87 // pred_fallthru
          _
      $region88: #{encoder_forward.4} parent=5 // pred_fallthru
        _
    $region6: #{encoder_forward.4} parent=1 // loop_footer
      %s35 = sadd.s32 1, %s31
    $region7: #{encoder_forward.4} parent=1 // loop_footer_branch
      %30 = sbr.rel target = $region3
    $region8: #{encoder_forward.4} parent=1 // loop_exit
      _
    %1197 = vsyncpa [#allocation8], 1
    %s1198 = scalar_lea.sflag [#allocation8], 1
    %1199 = vsyncpa %s1198, 1

// kernel: encoder_forward.5
$region0: #{encoder_forward.5}
  #allocation0 [shape = 'u32[]', space=smem, size = 0x4, offset = 0x4, fixed_abs, tag = 'smem constant byte address 0x4 - core index']
  #allocation1 [shape = 'u32[144,128]{1,0:T(1,128)}', space=vmem, size = 0x12000, scoped, tag = 'internal scratch']
  #allocation2 [shape = 'bf16[2,8,16]{2,1,0:T(8,128)(2,1)}', space=vmem, size = 0x1000, scoped, tag = 'scratch operand']
  #allocation3 [shape = 'bf16[2,8,16]{2,1,0:T(8,128)(2,1)}', space=vmem, size = 0x1000, scoped, tag = 'scratch operand']
  #allocation4 [shape = 'bf16[2,8,16]{2,1,0:T(8,128)(2,1)}', space=vmem, size = 0x1000, scoped, tag = 'scratch operand']
  #allocation5 [shape = 's32[1]{0}', space=sflag, size = 0x4, scoped, tag = 'scoped memory for encoder_forward.5']
  #allocation6 [shape = 'u8[512]{0}', space=smem, size = 0x200, scoped, tag = 'prefetched SMEM operand 0']
  %s0 = inlined_call_operand.vmem [shape: s32[2], index: 0, kind: input, shape index: {}]
  %s1 = inlined_call_operand.vmem [shape: f32[2,8,32], index: 1, kind: input, shape index: {}]
  %s2 = inlined_call_operand.vmem [shape: bf16[32,96], index: 2, kind: input, shape index: {}]
  %s3 = inlined_call_operand.vmem [shape: f32[1,96], index: 3, kind: input, shape index: {}]
  %s4 = inlined_call_operand.vmem [shape: bf16[32,32], index: 4, kind: input, shape index: {}]
  %s5 = inlined_call_operand.vmem [shape: f32[1,32], index: 5, kind: input, shape index: {}]
  %s6 = inlined_call_operand.vmem [shape: f32[1,32], index: 6, kind: input, shape index: {}]
  %s7 = inlined_call_operand.vmem [shape: f32[1,32], index: 7, kind: input, shape index: {}]
  %s8 = inlined_call_operand.vmem [shape: bf16[32,64], index: 8, kind: input, shape index: {}]
  %s9 = inlined_call_operand.vmem [shape: f32[1,64], index: 9, kind: input, shape index: {}]
  %s10 = inlined_call_operand.vmem [shape: bf16[64,32], index: 10, kind: input, shape index: {}]
  %s11 = inlined_call_operand.vmem [shape: f32[1,32], index: 11, kind: input, shape index: {}]
  %s12 = inlined_call_operand.vmem [shape: f32[1,32], index: 12, kind: input, shape index: {}]
  %s13 = inlined_call_operand.vmem [shape: f32[1,32], index: 13, kind: input, shape index: {}]
  %s14 = inlined_call_operand.hbm [shape: f32[2,8,32], index: 14, kind: output, shape index: {0}]
  %s15 = inlined_call_operand.hbm [shape: bf16[2,2,8,8], index: 15, kind: output, shape index: {1}]
  %16 = xla_tuple %s14, %s15
  %s17 = sld [smem:[#allocation0]]
  $region97: #{encoder_forward.5} parent=0
    _
  %s19 = ssub.s32 1, %s17
  %s20 = scalar_select 0, %s19, %s17
  %s21 = sshll.u32 %s0, 4
  %s22 = int_to_ptr.vmem [resolvable:$true] %s21
  %24 = dma.vmem_to_smem %s22, 16, [#allocation6], [#allocation5]
  %25 = dma.done [#allocation5], 16
  %26 = sfence
  $region1: #{encoder_forward.5} parent=0
    #allocation7 [shape = 'u8[8192]{0}', space=vmem, size = 0x2000, scoped, tag = 'output window, operand 0']
    #allocation8 [shape = 's32[2]{0}', space=sflag, size = 0x8, scoped, tag = 'scoped memory for encoder_forward.5']
    #allocation9 [shape = 'u8[8192]{0}', space=vmem, size = 0x2000, scoped, tag = 'output window, operand 1']
    #allocation10 [shape = 's32[2]{0}', space=sflag, size = 0x8, scoped, tag = 'scoped memory for encoder_forward.5']
    %27 = vsyncpa [#allocation8], 0
    %s28 = scalar_lea.sflag [#allocation8], 1
    %29 = vsyncpa %s28, 0
    %30 = vsyncpa [#allocation10], 0
    %s31 = scalar_lea.sflag [#allocation10], 1
    %32 = vsyncpa %s31, 0
    loop: start=0, step=1, limit=4
    $region2: #{encoder_forward.5} parent=1 // loop_pre_header
      _
    $region3: #{encoder_forward.5} parent=1 // loop_header
      %s34 = sphi 0, %s38
      %p35 = scmp.ge.s32.totalorder %s34, 4
      %s41 = sphi 0, %s53
      %s42 = sphi 0, %s49
      %s43 = sphi 0, %s41
      %s44 = sphi 0, %s42
      %s45 = sphi 0, %s43
      %s46 = sphi 0, %s44
      %s56 = sphi 0, %s58
      %s59 = sphi 0, %s56
      %s60 = sphi 0, %s59
      %s76 = sphi 0, %s60
      %s80 = sphi 0, %s80
      %s82 = sphi 0, %s80
      %s83 = sphi 0, %s82
      %s97 = sphi 0, %s83
      %s101 = sphi 0, %s101
      %s103 = sphi 0, %s101
      %s104 = sphi 0, %s103
      %s118 = sphi 0, %s104
      %s122 = sphi 0, %s122
      %s124 = sphi 0, %s122
      %s125 = sphi 0, %s124
      %s139 = sphi 0, %s125
      %s143 = sphi 0, %s143
      %s145 = sphi 0, %s143
      %s146 = sphi 0, %s145
      %s160 = sphi 0, %s146
      %s164 = sphi 0, %s164
      %s166 = sphi 0, %s164
      %s167 = sphi 0, %s166
      %s181 = sphi 0, %s167
      %s185 = sphi 0, %s185
      %s187 = sphi 0, %s185
      %s188 = sphi 0, %s187
      %s202 = sphi 0, %s188
      %s206 = sphi 0, %s206
      %s208 = sphi 0, %s206
      %s209 = sphi 0, %s208
      %s223 = sphi 0, %s209
      %s227 = sphi 0, %s227
      %s229 = sphi 0, %s227
      %s230 = sphi 0, %s229
      %s244 = sphi 0, %s230
      %s248 = sphi 0, %s248
      %s250 = sphi 0, %s248
      %s251 = sphi 0, %s250
      %s265 = sphi 0, %s251
      %s269 = sphi 0, %s269
      %s271 = sphi 0, %s269
      %s272 = sphi 0, %s271
      %s286 = sphi 0, %s272
      %s290 = sphi 0, %s290
      %s292 = sphi 0, %s290
      %s293 = sphi 0, %s292
      %s307 = sphi 0, %s293
      %s311 = sphi 0, %s311
      %s313 = sphi 0, %s311
      %s314 = sphi 0, %s313
      %s328 = sphi 0, %s314
      %s336 = sphi 0, %s338
      %s339 = sphi 0, %s336
      %s340 = sphi 0, %s339
      %s356 = sphi 0, %s340
      %s364 = sphi 0, %s366
      %s367 = sphi 0, %s364
      %s368 = sphi 0, %s367
      %s384 = sphi 0, %s368
    $region4: #{encoder_forward.5} parent=1 // loop_header_branch
      %37 = sbr.rel (%p35) target = $region8
    $region5: #{encoder_forward.5} parent=1 // loop_body
      %s39 = ssub.s32 %s34, 1
      %s40 = ssub.s32 %s34, 2
      %s47 = sadd.s32 1, %s42
      %p48 = scmp.ge.s32.totalorder %s47, 1
      %s49 = scalar_select %p48, 0, %s47
      %s50 = sadd.s32 1, %s41
      %s51 = scalar_select %p48, %s50, %s41
      %p52 = scmp.ge.s32.totalorder %s51, 2
      %s53 = scalar_select %p52, 0, %s51
      %s54 = ssub.s32 %s41, %s53
      %p55 = scmp.eq.s32.totalorder %s54, 0
      %s57 = sadd.s32 %s56, 1
      %s58 = scalar_select %p55, %s56, %s57
      %p61 = pneg %p55
      %p62 = scmp.eq.s32.totalorder %s34, 1
      %p63 = por %p61, %p62
      %p64 = scmp.ne.s32.totalorder %s56, %s59
      %p65 = scmp.eq.s32.totalorder %s34, 0
      %p66 = por %p64, %p65
      %p67 = scmp.ne.s32.totalorder %s56, %s59
      %p68 = scmp.eq.s32.totalorder %s39, 1
      %p69 = por %p67, %p68
      %p70 = scmp.ne.s32.totalorder %s59, %s60
      %p71 = scmp.eq.s32.totalorder %s39, 0
      %p72 = por %p70, %p71
      %p73 = scmp.ne.s32.totalorder %s59, %s60
      %p74 = scmp.eq.s32.totalorder %s40, 1
      %p75 = por %p73, %p74
      %p77 = scmp.ne.s32.totalorder %s60, %s76
      %p78 = scmp.eq.s32.totalorder %s40, 0
      %p79 = por %p77, %p78
      %s81 = sadd.s32 %s80, 1
      %p84 = scmp.eq.s32.totalorder %s34, 1
      %p85 = scmp.ne.s32.totalorder %s80, %s82
      %p86 = scmp.eq.s32.totalorder %s34, 0
      %p87 = por %p85, %p86
      %p88 = scmp.ne.s32.totalorder %s80, %s82
      %p89 = scmp.eq.s32.totalorder %s39, 1
      %p90 = por %p88, %p89
      %p91 = scmp.ne.s32.totalorder %s82, %s83
      %p92 = scmp.eq.s32.totalorder %s39, 0
      %p93 = por %p91, %p92
      %p94 = scmp.ne.s32.totalorder %s82, %s83
      %p95 = scmp.eq.s32.totalorder %s40, 1
      %p96 = por %p94, %p95
      %p98 = scmp.ne.s32.totalorder %s83, %s97
      %p99 = scmp.eq.s32.totalorder %s40, 0
      %p100 = por %p98, %p99
      %s102 = sadd.s32 %s101, 1
      %p105 = scmp.eq.s32.totalorder %s34, 1
      %p106 = scmp.ne.s32.totalorder %s101, %s103
      %p107 = scmp.eq.s32.totalorder %s34, 0
      %p108 = por %p106, %p107
      %p109 = scmp.ne.s32.totalorder %s101, %s103
      %p110 = scmp.eq.s32.totalorder %s39, 1
      %p111 = por %p109, %p110
      %p112 = scmp.ne.s32.totalorder %s103, %s104
      %p113 = scmp.eq.s32.totalorder %s39, 0
      %p114 = por %p112, %p113
      %p115 = scmp.ne.s32.totalorder %s103, %s104
      %p116 = scmp.eq.s32.totalorder %s40, 1
      %p117 = por %p115, %p116
      %p119 = scmp.ne.s32.totalorder %s104, %s118
      %p120 = scmp.eq.s32.totalorder %s40, 0
      %p121 = por %p119, %p120
      %s123 = sadd.s32 %s122, 1
      %p126 = scmp.eq.s32.totalorder %s34, 1
      %p127 = scmp.ne.s32.totalorder %s122, %s124
      %p128 = scmp.eq.s32.totalorder %s34, 0
      %p129 = por %p127, %p128
      %p130 = scmp.ne.s32.totalorder %s122, %s124
      %p131 = scmp.eq.s32.totalorder %s39, 1
      %p132 = por %p130, %p131
      %p133 = scmp.ne.s32.totalorder %s124, %s125
      %p134 = scmp.eq.s32.totalorder %s39, 0
      %p135 = por %p133, %p134
      %p136 = scmp.ne.s32.totalorder %s124, %s125
      %p137 = scmp.eq.s32.totalorder %s40, 1
      %p138 = por %p136, %p137
      %p140 = scmp.ne.s32.totalorder %s125, %s139
      %p141 = scmp.eq.s32.totalorder %s40, 0
      %p142 = por %p140, %p141
      %s144 = sadd.s32 %s143, 1
      %p147 = scmp.eq.s32.totalorder %s34, 1
      %p148 = scmp.ne.s32.totalorder %s143, %s145
      %p149 = scmp.eq.s32.totalorder %s34, 0
      %p150 = por %p148, %p149
      %p151 = scmp.ne.s32.totalorder %s143, %s145
      %p152 = scmp.eq.s32.totalorder %s39, 1
      %p153 = por %p151, %p152
      %p154 = scmp.ne.s32.totalorder %s145, %s146
      %p155 = scmp.eq.s32.totalorder %s39, 0
      %p156 = por %p154, %p155
      %p157 = scmp.ne.s32.totalorder %s145, %s146
      %p158 = scmp.eq.s32.totalorder %s40, 1
      %p159 = por %p157, %p158
      %p161 = scmp.ne.s32.totalorder %s146, %s160
      %p162 = scmp.eq.s32.totalorder %s40, 0
      %p163 = por %p161, %p162
      %s165 = sadd.s32 %s164, 1
      %p168 = scmp.eq.s32.totalorder %s34, 1
      %p169 = scmp.ne.s32.totalorder %s164, %s166
      %p170 = scmp.eq.s32.totalorder %s34, 0
      %p171 = por %p169, %p170
      %p172 = scmp.ne.s32.totalorder %s164, %s166
      %p173 = scmp.eq.s32.totalorder %s39, 1
      %p174 = por %p172, %p173
      %p175 = scmp.ne.s32.totalorder %s166, %s167
      %p176 = scmp.eq.s32.totalorder %s39, 0
      %p177 = por %p175, %p176
      %p178 = scmp.ne.s32.totalorder %s166, %s167
      %p179 = scmp.eq.s32.totalorder %s40, 1
      %p180 = por %p178, %p179
      %p182 = scmp.ne.s32.totalorder %s167, %s181
      %p183 = scmp.eq.s32.totalorder %s40, 0
      %p184 = por %p182, %p183
      %s186 = sadd.s32 %s185, 1
      %p189 = scmp.eq.s32.totalorder %s34, 1
      %p190 = scmp.ne.s32.totalorder %s185, %s187
      %p191 = scmp.eq.s32.totalorder %s34, 0
      %p192 = por %p190, %p191
      %p193 = scmp.ne.s32.totalorder %s185, %s187
      %p194 = scmp.eq.s32.totalorder %s39, 1
      %p195 = por %p193, %p194
      %p196 = scmp.ne.s32.totalorder %s187, %s188
      %p197 = scmp.eq.s32.totalorder %s39, 0
      %p198 = por %p196, %p197
      %p199 = scmp.ne.s32.totalorder %s187, %s188
      %p200 = scmp.eq.s32.totalorder %s40, 1
      %p201 = por %p199, %p200
      %p203 = scmp.ne.s32.totalorder %s188, %s202
      %p204 = scmp.eq.s32.totalorder %s40, 0
      %p205 = por %p203, %p204
      %s207 = sadd.s32 %s206, 1
      %p210 = scmp.eq.s32.totalorder %s34, 1
      %p211 = scmp.ne.s32.totalorder %s206, %s208
      %p212 = scmp.eq.s32.totalorder %s34, 0
      %p213 = por %p211, %p212
      %p214 = scmp.ne.s32.totalorder %s206, %s208
      %p215 = scmp.eq.s32.totalorder %s39, 1
      %p216 = por %p214, %p215
      %p217 = scmp.ne.s32.totalorder %s208, %s209
      %p218 = scmp.eq.s32.totalorder %s39, 0
      %p219 = por %p217, %p218
      %p220 = scmp.ne.s32.totalorder %s208, %s209
      %p221 = scmp.eq.s32.totalorder %s40, 1
      %p222 = por %p220, %p221
      %p224 = scmp.ne.s32.totalorder %s209, %s223
      %p225 = scmp.eq.s32.totalorder %s40, 0
      %p226 = por %p224, %p225
      %s228 = sadd.s32 %s227, 1
      %p231 = scmp.eq.s32.totalorder %s34, 1
      %p232 = scmp.ne.s32.totalorder %s227, %s229
      %p233 = scmp.eq.s32.totalorder %s34, 0
      %p234 = por %p232, %p233
      %p235 = scmp.ne.s32.totalorder %s227, %s229
      %p236 = scmp.eq.s32.totalorder %s39, 1
      %p237 = por %p235, %p236
      %p238 = scmp.ne.s32.totalorder %s229, %s230
      %p239 = scmp.eq.s32.totalorder %s39, 0
      %p240 = por %p238, %p239
      %p241 = scmp.ne.s32.totalorder %s229, %s230
      %p242 = scmp.eq.s32.totalorder %s40, 1
      %p243 = por %p241, %p242
      %p245 = scmp.ne.s32.totalorder %s230, %s244
      %p246 = scmp.eq.s32.totalorder %s40, 0
      %p247 = por %p245, %p246
      %s249 = sadd.s32 %s248, 1
      %p252 = scmp.eq.s32.totalorder %s34, 1
      %p253 = scmp.ne.s32.totalorder %s248, %s250
      %p254 = scmp.eq.s32.totalorder %s34, 0
      %p255 = por %p253, %p254
      %p256 = scmp.ne.s32.totalorder %s248, %s250
      %p257 = scmp.eq.s32.totalorder %s39, 1
      %p258 = por %p256, %p257
      %p259 = scmp.ne.s32.totalorder %s250, %s251
      %p260 = scmp.eq.s32.totalorder %s39, 0
      %p261 = por %p259, %p260
      %p262 = scmp.ne.s32.totalorder %s250, %s251
      %p263 = scmp.eq.s32.totalorder %s40, 1
      %p264 = por %p262, %p263
      %p266 = scmp.ne.s32.totalorder %s251, %s265
      %p267 = scmp.eq.s32.totalorder %s40, 0
      %p268 = por %p266, %p267
      %s270 = sadd.s32 %s269, 1
      %p273 = scmp.eq.s32.totalorder %s34, 1
      %p274 = scmp.ne.s32.totalorder %s269, %s271
      %p275 = scmp.eq.s32.totalorder %s34, 0
      %p276 = por %p274, %p275
      %p277 = scmp.ne.s32.totalorder %s269, %s271
      %p278 = scmp.eq.s32.totalorder %s39, 1
      %p279 = por %p277, %p278
      %p280 = scmp.ne.s32.totalorder %s271, %s272
      %p281 = scmp.eq.s32.totalorder %s39, 0
      %p282 = por %p280, %p281
      %p283 = scmp.ne.s32.totalorder %s271, %s272
      %p284 = scmp.eq.s32.totalorder %s40, 1
      %p285 = por %p283, %p284
      %p287 = scmp.ne.s32.totalorder %s272, %s286
      %p288 = scmp.eq.s32.totalorder %s40, 0
      %p289 = por %p287, %p288
      %s291 = sadd.s32 %s290, 1
      %p294 = scmp.eq.s32.totalorder %s34, 1
      %p295 = scmp.ne.s32.totalorder %s290, %s292
      %p296 = scmp.eq.s32.totalorder %s34, 0
      %p297 = por %p295, %p296
      %p298 = scmp.ne.s32.totalorder %s290, %s292
      %p299 = scmp.eq.s32.totalorder %s39, 1
      %p300 = por %p298, %p299
      %p301 = scmp.ne.s32.totalorder %s292, %s293
      %p302 = scmp.eq.s32.totalorder %s39, 0
      %p303 = por %p301, %p302
      %p304 = scmp.ne.s32.totalorder %s292, %s293
      %p305 = scmp.eq.s32.totalorder %s40, 1
      %p306 = por %p304, %p305
      %p308 = scmp.ne.s32.totalorder %s293, %s307
      %p309 = scmp.eq.s32.totalorder %s40, 0
      %p310 = por %p308, %p309
      %s312 = sadd.s32 %s311, 1
      %p315 = scmp.eq.s32.totalorder %s34, 1
      %p316 = scmp.ne.s32.totalorder %s311, %s313
      %p317 = scmp.eq.s32.totalorder %s34, 0
      %p318 = por %p316, %p317
      %p319 = scmp.ne.s32.totalorder %s311, %s313
      %p320 = scmp.eq.s32.totalorder %s39, 1
      %p321 = por %p319, %p320
      %p322 = scmp.ne.s32.totalorder %s313, %s314
      %p323 = scmp.eq.s32.totalorder %s39, 0
      %p324 = por %p322, %p323
      %p325 = scmp.ne.s32.totalorder %s313, %s314
      %p326 = scmp.eq.s32.totalorder %s40, 1
      %p327 = por %p325, %p326
      %p329 = scmp.ne.s32.totalorder %s314, %s328
      %p330 = scmp.eq.s32.totalorder %s40, 0
      %p331 = por %p329, %p330
      %s332 = ssub.s32 %s41, %s53
      %s333 = ssub.s32 %s42, %s49
      %s334 = sor.u32 %s332, %s333
      %p335 = scmp.eq.s32.totalorder %s334, 0
      %s337 = sadd.s32 %s336, 1
      %s338 = scalar_select %p335, %s336, %s337
      %p341 = pneg %p335
      %p342 = scmp.eq.s32.totalorder %s34, 1
      %p343 = por %p341, %p342
      %p344 = scmp.ne.s32.totalorder %s336, %s339
      %p345 = scmp.eq.s32.totalorder %s34, 0
      %p346 = por %p344, %p345
      %p347 = scmp.ne.s32.totalorder %s336, %s339
      %p348 = scmp.eq.s32.totalorder %s39, 1
      %p349 = por %p347, %p348
      %p350 = scmp.ne.s32.totalorder %s339, %s340
      %p351 = scmp.eq.s32.totalorder %s39, 0
      %p352 = por %p350, %p351
      %p353 = scmp.ne.s32.totalorder %s339, %s340
      %p354 = scmp.eq.s32.totalorder %s40, 1
      %p355 = por %p353, %p354
      %p357 = scmp.ne.s32.totalorder %s340, %s356
      %p358 = scmp.eq.s32.totalorder %s40, 0
      %p359 = por %p357, %p358
      %s360 = ssub.s32 %s41, %s53
      %s361 = ssub.s32 %s42, %s49
      %s362 = sor.u32 %s360, %s361
      %p363 = scmp.eq.s32.totalorder %s362, 0
      %s365 = sadd.s32 %s364, 1
      %s366 = scalar_select %p363, %s364, %s365
      %p369 = pneg %p363
      %p370 = scmp.eq.s32.totalorder %s34, 1
      %p371 = por %p369, %p370
      %p372 = scmp.ne.s32.totalorder %s364, %s367
      %p373 = scmp.eq.s32.totalorder %s34, 0
      %p374 = por %p372, %p373
      %p375 = scmp.ne.s32.totalorder %s364, %s367
      %p376 = scmp.eq.s32.totalorder %s39, 1
      %p377 = por %p375, %p376
      %p378 = scmp.ne.s32.totalorder %s367, %s368
      %p379 = scmp.eq.s32.totalorder %s39, 0
      %p380 = por %p378, %p379
      %p381 = scmp.ne.s32.totalorder %s367, %s368
      %p382 = scmp.eq.s32.totalorder %s40, 1
      %p383 = por %p381, %p382
      %p385 = scmp.ne.s32.totalorder %s368, %s384
      %p386 = scmp.eq.s32.totalorder %s40, 0
      %p387 = por %p385, %p386
      %p388 = scmp.le.s32.totalorder 1, %s34
      %p389 = scmp.lt.s32.totalorder %s34, 3
      %p390 = pnand %p388, %p389
      %p391 = pneg %p390
      // Predicated region
      $region9: #{encoder_forward.5} parent=5 // pred_check
        _
      $region10: #{encoder_forward.5} parent=5 // pred_check_branch
        %393 = sbr.rel (%p390) target = $region12
      $region11: #{encoder_forward.5} parent=5 // pred_region
        %s394 = ssub.s32 %s34, 1
        // Predicated region
        $region13: #{encoder_forward.5} parent=11 // pred_check
          %p395 = pneg %p93
        $region14: #{encoder_forward.5} parent=11 // pred_check_branch
          %397 = sbr.rel (%p395) target = $region16
        $region15: #{encoder_forward.5} parent=11 // pred_region
          _
        $region16: #{encoder_forward.5} parent=11 // pred_fallthru
          _
        // Predicated region
        $region17: #{encoder_forward.5} parent=11 // pred_check
          %p398 = pneg %p114
        $region18: #{encoder_forward.5} parent=11 // pred_check_branch
          %400 = sbr.rel (%p398) target = $region20
        $region19: #{encoder_forward.5} parent=11 // pred_region
          _
        $region20: #{encoder_forward.5} parent=11 // pred_fallthru
          _
        // Predicated region
        $region21: #{encoder_forward.5} parent=11 // pred_check
          %p401 = pneg %p135
        $region22: #{encoder_forward.5} parent=11 // pred_check_branch
          %403 = sbr.rel (%p401) target = $region24
        $region23: #{encoder_forward.5} parent=11 // pred_region
          _
        $region24: #{encoder_forward.5} parent=11 // pred_fallthru
          _
        // Predicated region
        $region25: #{encoder_forward.5} parent=11 // pred_check
          %p404 = pneg %p156
        $region26: #{encoder_forward.5} parent=11 // pred_check_branch
          %406 = sbr.rel (%p404) target = $region28
        $region27: #{encoder_forward.5} parent=11 // pred_region
          _
        $region28: #{encoder_forward.5} parent=11 // pred_fallthru
          _
        // Predicated region
        $region29: #{encoder_forward.5} parent=11 // pred_check
          %p407 = pneg %p177
        $region30: #{encoder_forward.5} parent=11 // pred_check_branch
          %409 = sbr.rel (%p407) target = $region32
        $region31: #{encoder_forward.5} parent=11 // pred_region
          _
        $region32: #{encoder_forward.5} parent=11 // pred_fallthru
          _
        // Predicated region
        $region33: #{encoder_forward.5} parent=11 // pred_check
          %p410 = pneg %p198
        $region34: #{encoder_forward.5} parent=11 // pred_check_branch
          %412 = sbr.rel (%p410) target = $region36
        $region35: #{encoder_forward.5} parent=11 // pred_region
          _
        $region36: #{encoder_forward.5} parent=11 // pred_fallthru
          _
        // Predicated region
        $region37: #{encoder_forward.5} parent=11 // pred_check
          %p413 = pneg %p219
        $region38: #{encoder_forward.5} parent=11 // pred_check_branch
          %415 = sbr.rel (%p413) target = $region40
        $region39: #{encoder_forward.5} parent=11 // pred_region
          _
        $region40: #{encoder_forward.5} parent=11 // pred_fallthru
          _
        // Predicated region
        $region41: #{encoder_forward.5} parent=11 // pred_check
          %p416 = pneg %p240
        $region42: #{encoder_forward.5} parent=11 // pred_check_branch
          %418 = sbr.rel (%p416) target = $region44
        $region43: #{encoder_forward.5} parent=11 // pred_region
          _
        $region44: #{encoder_forward.5} parent=11 // pred_fallthru
          _
        // Predicated region
        $region45: #{encoder_forward.5} parent=11 // pred_check
          %p419 = pneg %p261
        $region46: #{encoder_forward.5} parent=11 // pred_check_branch
          %421 = sbr.rel (%p419) target = $region48
        $region47: #{encoder_forward.5} parent=11 // pred_region
          _
        $region48: #{encoder_forward.5} parent=11 // pred_fallthru
          _
        // Predicated region
        $region49: #{encoder_forward.5} parent=11 // pred_check
          %p422 = pneg %p282
        $region50: #{encoder_forward.5} parent=11 // pred_check_branch
          %424 = sbr.rel (%p422) target = $region52
        $region51: #{encoder_forward.5} parent=11 // pred_region
          _
        $region52: #{encoder_forward.5} parent=11 // pred_fallthru
          _
        // Predicated region
        $region53: #{encoder_forward.5} parent=11 // pred_check
          %p425 = pneg %p303
        $region54: #{encoder_forward.5} parent=11 // pred_check_branch
          %427 = sbr.rel (%p425) target = $region56
        $region55: #{encoder_forward.5} parent=11 // pred_region
          _
        $region56: #{encoder_forward.5} parent=11 // pred_fallthru
          _
        // Predicated region
        $region57: #{encoder_forward.5} parent=11 // pred_check
          %p428 = pneg %p324
        $region58: #{encoder_forward.5} parent=11 // pred_check_branch
          %430 = sbr.rel (%p428) target = $region60
        $region59: #{encoder_forward.5} parent=11 // pred_region
          _
        $region60: #{encoder_forward.5} parent=11 // pred_fallthru
          _
      $region12: #{encoder_forward.5} parent=5 // pred_fallthru
        _
      %p431 = scmp.lt.s32.totalorder %s34, 2
      // Predicated region
      $region61: #{encoder_forward.5} parent=5 // pred_check
        %p432 = pneg %p431
      $region62: #{encoder_forward.5} parent=5 // pred_check_branch
        %434 = sbr.rel (%p432) target = $region64
      $region63: #{encoder_forward.5} parent=5 // pred_region
        // Predicated region
        $region65: #{encoder_forward.5} parent=63 // pred_check
          %p435 = pneg %p66
        $region66: #{encoder_forward.5} parent=63 // pred_check_branch
          %437 = sbr.rel (%p435) target = $region68
        $region67: #{encoder_forward.5} parent=63 // pred_region
          %p438 = scmp.lt.s32.totalorder %s41, 1
          %s439 = scalar_select %p438, %s41, 1
          %s440 = smul.addr %s439, 8
          %s441 = scalar_lea.vmem %s1, %s440
        $region68: #{encoder_forward.5} parent=63 // pred_fallthru
          _
      $region64: #{encoder_forward.5} parent=5 // pred_fallthru
        _
      %p442 = scmp.le.s32.totalorder 1, %s34
      %p443 = scmp.lt.s32.totalorder %s34, 3
      %p444 = pnand %p442, %p443
      %p445 = pneg %p444
      // Predicated region
      $region69: #{encoder_forward.5} parent=5 // pred_check
        _
      $region70: #{encoder_forward.5} parent=5 // pred_check_branch
        %447 = sbr.rel (%p444) target = $region72
      $region71: #{encoder_forward.5} parent=5 // pred_region
        %s448 = ssub.s32 %s34, 1
        %p449 = scmp.lt.s32.totalorder %s43, 1
        %s450 = scalar_select %p449, %s43, 1
        %s451 = smul.addr %s450, 8
        %s452 = scalar_lea.vmem %s1, %s451
        %p453 = pneg %p72
        %p454 = pneg %p69
        %p455 = pneg %p93
        %p456 = pneg %p90
        %p457 = pneg %p114
        %p458 = pneg %p111
        %p459 = pneg %p135
        %p460 = pneg %p132
        %p461 = pneg %p156
        %p462 = pneg %p153
        %p463 = pneg %p177
        %p464 = pneg %p174
        %p465 = pneg %p198
        %p466 = pneg %p195
        %p467 = pneg %p219
        %p468 = pneg %p216
        %p469 = pneg %p240
        %p470 = pneg %p237
        %p471 = pneg %p261
        %p472 = pneg %p258
        %p473 = pneg %p282
        %p474 = pneg %p279
        %p475 = pneg %p303
        %p476 = pneg %p300
        %p477 = pneg %p324
        %p478 = pneg %p321
        %p479 = pneg %p352
        %p480 = pneg %p349
        %s481 = sand.u32 %s339, 1
        %s482 = scalar_lea.sflag [#allocation8], %s481
        %s483 = sand.u32 %s339, 1
        %s484 = smul.addr %s483, 8
        %s485 = scalar_lea.vmem [#allocation7], %s484
        %p486 = pneg %p380
        %p487 = pneg %p377
        %s488 = sand.u32 %s367, 1
        %s489 = scalar_lea.sflag [#allocation10], %s488
        %s490 = sand.u32 %s367, 1
        %s491 = smul.addr %s490, 8
        %s492 = scalar_lea.vmem [#allocation9], %s491
        %p493 = scmp.lt.s32.totalorder %s43, 1
        %s494 = scalar_select %p493, %s43, 1
        %s495 = smul.addr %s494, 8
        %s496 = scalar_lea.vmem %s1, %s495
        %s498 = sld [smem:[#allocation6 + %s43]]
        %p499 = scmp.eq.s32.totalorder %s44, 0
        // Predicated region
        $region73: #{encoder_forward.5} parent=71 // pred_check
          %p500 = pneg %p499
        $region74: #{encoder_forward.5} parent=71 // pred_check_branch
          %502 = sbr.rel (%p500) target = $region76
        $region75: #{encoder_forward.5} parent=71 // pred_region
          %v503 = vld [vmem:[%s496] sm:$0xff]
          %v504 = vpack.c.bf16 %v503, %v503
          %v505 = vld [vmem:[%s2] sm:$0xf]
          %v506 = vld [vmem:[%s2 + $0x4] sm:$0xf]
          %v507 = vld [vmem:[%s2 + $0x8] sm:$0xf]
          %v508 = vld [vmem:[%s2 + $0xc] sm:$0xf]
          %v509 = vld [vmem:[%s3] sm:$0x1]
          %v511 = vlaneseq
          %v512 = vshrl.u32 %v511, 7
          %v513 = vsub.s32 0, %v512
          %v514 = vrot.slane %v509, %v513
          %v520 = vunpack.c.l.b16 %v505
          %v521 = vunpack.c.l.b16 %v506
          %v522 = vunpack.c.l.b16 %v507
          %v523 = vunpack.c.l.b16 %v508
          %v524 = vpack.c.b16 %v521, %v520
          %v525 = vpack.c.b16 %v523, %v522
          %vm528 = vcmask 261120
          %v530 = vsel %vm528, %v504, 0
          %532 = vmatprep.subr.bf16.mxu0 0
          %533 = vmatpush1.bf16.msra.mxu0 0
          %534 = vmatprep.subr.bf16.mxu0 0
          %535 = vmatpush1.bf16.msra.mxu0 0
          %536 = vmatprep.subr.bf16.mxu0 0
          %537 = vmatpush1.bf16.msra.mxu0 0
          %538 = vmatprep.subr.bf16.mxu0 0
          %539 = vmatpush1.bf16.msra.mxu0 0
          %540 = vmatprep.subr.bf16.mxu0 0
          %541 = vmatpush1.bf16.msra.mxu0 0
          %542 = vmatprep.subr.bf16.mxu0 0
          %543 = vmatpush1.bf16.msra.mxu0 0
          %544 = vmatprep.subr.bf16.mxu0 0
          %545 = vmatpush1.bf16.msra.mxu0 %v525
          %546 = vmatprep.subr.bf16.mxu0 0
          %547 = vmatpush1.bf16.msra.mxu0 %v524
          %548 = vmatprep.subr.bf16.mxu0 0
          %549 = vmatpush2.bf16.msra.mxu0 0
          %550 = vmatprep.subr.bf16.mxu0 0
          %551 = vmatpush2.bf16.msra.mxu0 0
          %552 = vmatprep.subr.bf16.mxu0 0
          %553 = vmatpush2.bf16.msra.mxu0 0
          %554 = vmatprep.subr.bf16.mxu0 0
          %555 = vmatpush2.bf16.msra.mxu0 0
          %556 = vmatprep.subr.bf16.mxu0 0
          %557 = vmatpush2.bf16.msra.mxu0 0
          %558 = vmatprep.subr.bf16.mxu0 0
          %559 = vmatpush2.bf16.msra.mxu0 0
          %560 = vmatprep.subr.bf16.mxu0 0
          %561 = vmatpush2.bf16.msra.mxu0 0
          %562 = vmatprep.subr.bf16.mxu0 0
          %563 = vmatpush2.bf16.msra.mxu0 0
          %564 = vmatprep.mubr.bf16.mxu0 0
          %565 = vmatmul.mubr.bf16.gmra.mxu0 %v530
          %v566 = vpop.f32.mrf.mxu0
          %v567 = vadd.f32 %v514, %v566
          %v568 = vpop.f32.mrf.mxu0
          %v569 = vpop.f32.mrf.mxu0
          %v570 = vpop.f32.mrf.mxu0
          %571 = vdwg.mxu0
          %v572 = vpack.c.bf16 %v567, %v567
          %vm573 = vcmask 125952
          %574 = vst.msk [vmem:[#allocation2] sm:$0xf] %vm573, %v572
          %v576 = vunpack.c.l.b16 %v572
          %v577 = vpack.c.b16 %v576, %v576
          %578 = vrot.lane.b32.xlu0 %v577, 96
          %v579 = vpop.permute.xlu0 %578
          %581 = vst.msk [vmem:[#allocation3] sm:$0xf] %vm573, %v579
          %582 = vrot.lane.b32.xlu0 %v577, 64
          %v583 = vpop.permute.xlu0 %582
          %585 = vst.msk [vmem:[#allocation4] sm:$0xf] %vm573, %v583
          %586 = vrot.lane.b32.xlu0 %v577, 112
          %v587 = vpop.permute.xlu0 %586
          %s589 = scalar_lea.vmem [#allocation2], 4
          %590 = vst.msk [vmem:[%s589] sm:$0xf] %vm573, %v587
          %591 = vrot.lane.b32.xlu0 %v577, 80
          %v592 = vpop.permute.xlu0 %591
          %s594 = scalar_lea.vmem [#allocation3], 4
          %595 = vst.msk [vmem:[%s594] sm:$0xf] %vm573, %v592
          %596 = vrot.lane.b32.xlu0 %v577, 48
          %v597 = vpop.permute.xlu0 %596
          %s599 = scalar_lea.vmem [#allocation4], 4
          %600 = vst.msk [vmem:[%s599] sm:$0xf] %vm573, %v597
        $region76: #{encoder_forward.5} parent=71 // pred_fallthru
          _
        %s601 = smul.u32 %s44, 8
        %s602 = scalar_lea.vmem %s496, %s601
        %v603 = vld [vmem:[%s602] sm:$0xff]
        %s604 = sshra.s32 %s601, 3
        %s605 = sand.u32 %s601, 7
        %s606 = smul.addr %s604, 4
        %s607 = scalar_lea.vmem [#allocation2], %s606
        %v608 = vld [vmem:[%s607] sm:$0xf]
        %v609 = vld [vmem:[%s607 + $0x4] sm:$0xf]
        %v610 = vld [vmem:[#allocation3] sm:$0xf]
        %v611 = vld [vmem:[#allocation3 + $0x4] sm:$0xf]
        %vm612 = vcmask 130048
        %v614 = vsel %vm612, %v608, 0
        %v617 = vsel %vm612, %v610, 0
        %619 = vmatprep.subr.bf16.mxu0 0
        %620 = vmatpush1.bf16.xpose.msra.mxu0 0
        %621 = vmatprep.subr.bf16.mxu0 0
        %622 = vmatpush1.bf16.xpose.msra.mxu0 0
        %623 = vmatprep.subr.bf16.mxu0 0
        %624 = vmatpush1.bf16.xpose.msra.mxu0 0
        %625 = vmatprep.subr.bf16.mxu0 0
        %626 = vmatpush1.bf16.xpose.msra.mxu0 0
        %627 = vmatprep.subr.bf16.mxu0 0
        %628 = vmatpush1.bf16.xpose.msra.mxu0 0
        %629 = vmatprep.subr.bf16.mxu0 0
        %630 = vmatpush1.bf16.xpose.msra.mxu0 0
        %631 = vmatprep.subr.bf16.mxu0 0
        %632 = vmatpush1.bf16.xpose.msra.mxu0 0
        %633 = vmatprep.subr.bf16.mxu0 0
        %634 = vmatpush1.bf16.xpose.msra.mxu0 %v617
        %635 = vmatprep.subr.bf16.mxu0 0
        %636 = vmatpush2.bf16.xpose.msra.mxu0 0
        %637 = vmatprep.subr.bf16.mxu0 0
        %638 = vmatpush2.bf16.xpose.msra.mxu0 0
        %639 = vmatprep.subr.bf16.mxu0 0
        %640 = vmatpush2.bf16.xpose.msra.mxu0 0
        %641 = vmatprep.subr.bf16.mxu0 0
        %642 = vmatpush2.bf16.xpose.msra.mxu0 0
        %643 = vmatprep.subr.bf16.mxu0 0
        %644 = vmatpush2.bf16.xpose.msra.mxu0 0
        %645 = vmatprep.subr.bf16.mxu0 0
        %646 = vmatpush2.bf16.xpose.msra.mxu0 0
        %647 = vmatprep.subr.bf16.mxu0 0
        %648 = vmatpush2.bf16.xpose.msra.mxu0 0
        %649 = vmatprep.subr.bf16.mxu0 0
        %650 = vmatpush2.bf16.xpose.msra.mxu0 0
        %651 = vmatprep.mubr.bf16.mxu0 0
        %652 = vmatmul.mubr.bf16.gmra.mxu0 %v614
        %v653 = vpop.f32.mrf.mxu0
        %v654 = vadd.f32 0.0, %v653
        %v655 = vpop.f32.mrf.mxu0
        %v656 = vpop.f32.mrf.mxu0
        %v657 = vpop.f32.mrf.mxu0
        %658 = vdwg.mxu0
        %v660 = vsel %vm612, %v609, 0
        %v663 = vsel %vm612, %v611, 0
        %665 = vmatprep.subr.bf16.mxu0 0
        %666 = vmatpush1.bf16.xpose.msra.mxu0 0
        %667 = vmatprep.subr.bf16.mxu0 0
        %668 = vmatpush1.bf16.xpose.msra.mxu0 0
        %669 = vmatprep.subr.bf16.mxu0 0
        %670 = vmatpush1.bf16.xpose.msra.mxu0 0
        %671 = vmatprep.subr.bf16.mxu0 0
        %672 = vmatpush1.bf16.xpose.msra.mxu0 0
        %673 = vmatprep.subr.bf16.mxu0 0
        %674 = vmatpush1.bf16.xpose.msra.mxu0 0
        %675 = vmatprep.subr.bf16.mxu0 0
        %676 = vmatpush1.bf16.xpose.msra.mxu0 0
        %677 = vmatprep.subr.bf16.mxu0 0
        %678 = vmatpush1.bf16.xpose.msra.mxu0 0
        %679 = vmatprep.subr.bf16.mxu0 0
        %680 = vmatpush1.bf16.xpose.msra.mxu0 %v663
        %681 = vmatprep.subr.bf16.mxu0 0
        %682 = vmatpush2.bf16.xpose.msra.mxu0 0
        %683 = vmatprep.subr.bf16.mxu0 0
        %684 = vmatpush2.bf16.xpose.msra.mxu0 0
        %685 = vmatprep.subr.bf16.mxu0 0
        %686 = vmatpush2.bf16.xpose.msra.mxu0 0
        %687 = vmatprep.subr.bf16.mxu0 0
        %688 = vmatpush2.bf16.xpose.msra.mxu0 0
        %689 = vmatprep.subr.bf16.mxu0 0
        %690 = vmatpush2.bf16.xpose.msra.mxu0 0
        %691 = vmatprep.subr.bf16.mxu0 0
        %692 = vmatpush2.bf16.xpose.msra.mxu0 0
        %693 = vmatprep.subr.bf16.mxu0 0
        %694 = vmatpush2.bf16.xpose.msra.mxu0 0
        %695 = vmatprep.subr.bf16.mxu0 0
        %696 = vmatpush2.bf16.xpose.msra.mxu0 0
        %697 = vmatprep.mubr.bf16.mxu0 0
        %698 = vmatmul.mubr.bf16.gmra.mxu0 %v660
        %v699 = vpop.f32.mrf.mxu0
        %v700 = vadd.f32 0.0, %v699
        %v701 = vpop.f32.mrf.mxu0
        %v702 = vpop.f32.mrf.mxu0
        %v703 = vpop.f32.mrf.mxu0
        %704 = vdwg.mxu0
        %v705 = vmul.f32 %v654, 0.25
        %v706 = vmul.f32 %v700, 0.25
        %v707 = vlaneseq
        %v708 = vand.u32 %v707, 127
        %v709 = vstv %s498
        %vm710 = vcmp.ge.s32.totalorder %v708, %v709
        %v711 = vsel %vm710, 1, 0
        %vm712 = vcmp.eq.s32.totalorder %v711, 1
        %v713 = vsel %vm712, -1e+30, %v705
        %v714 = vsel %vm712, -1e+30, %v706
        %vm715 = vcmask 64512
        %v716 = vsel %vm715, %v713, -inf
        %717 = vmax.xlane.f32.xlu0 %v716
        %v718 = vpop.xlane.xlu0 %717
        %v719 = vsel %vm715, %v714, -inf
        %720 = vmax.xlane.f32.xlu0 %v719
        %v721 = vpop.xlane.xlu0 %720
        %v722 = vsub.f32 %v713, %v718
        %v723 = vsub.f32 %v714, %v721
        %v724 = vmul.f32 %v722, 1.442695
        %v725 = vpow.pop %v724
        %v726 = vmul.f32 %v723, 1.442695
        %v727 = vpow.pop %v726
        %v728 = vsel %vm715, %v725, 0.0
        %729 = vadd.xlane.f32.xlu0 %v728
        %v730 = vpop.xlane.xlu0 %729
        %v731 = vsel %vm715, %v727, 0.0
        %732 = vadd.xlane.f32.xlu0 %v731
        %v733 = vpop.xlane.xlu0 %732
        %v734 = vrcp.pop %v730
        %v735 = vmul.f32 1.0, %v734
        %v736 = vrcp.pop %v733
        %v737 = vmul.f32 1.0, %v736
        %v738 = vmul.f32 %v725, %v735
        %v739 = vmul.f32 %v727, %v737
        %v740 = vpack.c.bf16 %v738, %v738
        %v741 = vpack.c.bf16 %v739, %v739
        %vm742 = vcmask 60416
        %743 = vst.msk [vmem:[%s492] sm:$0xf] %vm742, %v740
        %744 = vst.msk [vmem:[%s492 + $0x4] sm:$0xf] %vm742, %v741
        %v745 = vld [vmem:[#allocation4] sm:$0xf]
        %v746 = vld [vmem:[#allocation4 + $0x4] sm:$0xf]
        %v748 = vsel %vm715, %v740, 0
        %vm750 = vcmask 1043456
        %v752 = vsel %vm750, %v745, 0
        %754 = vmatprep.subr.bf16.mxu0 0
        %755 = vmatpush1.bf16.msra.mxu0 0
        %756 = vmatprep.subr.bf16.mxu0 0
        %757 = vmatpush1.bf16.msra.mxu0 0
        %758 = vmatprep.subr.bf16.mxu0 0
        %759 = vmatpush1.bf16.msra.mxu0 0
        %760 = vmatprep.subr.bf16.mxu0 0
        %761 = vmatpush1.bf16.msra.mxu0 0
        %762 = vmatprep.subr.bf16.mxu0 0
        %763 = vmatpush1.bf16.msra.mxu0 0
        %764 = vmatprep.subr.bf16.mxu0 0
        %765 = vmatpush1.bf16.msra.mxu0 0
        %766 = vmatprep.subr.bf16.mxu0 0
        %767 = vmatpush1.bf16.msra.mxu0 0
        %768 = vmatprep.subr.bf16.mxu0 0
        %769 = vmatpush1.bf16.msra.mxu0 %v752
        %770 = vmatprep.subr.bf16.mxu0 0
        %771 = vmatpush2.bf16.msra.mxu0 0
        %772 = vmatprep.subr.bf16.mxu0 0
        %773 = vmatpush2.bf16.msra.mxu0 0
        %774 = vmatprep.subr.bf16.mxu0 0
        %775 = vmatpush2.bf16.msra.mxu0 0
        %776 = vmatprep.subr.bf16.mxu0 0
        %777 = vmatpush2.bf16.msra.mxu0 0
        %778 = vmatprep.subr.bf16.mxu0 0
        %779 = vmatpush2.bf16.msra.mxu0 0
        %780 = vmatprep.subr.bf16.mxu0 0
        %781 = vmatpush2.bf16.msra.mxu0 0
        %782 = vmatprep.subr.bf16.mxu0 0
        %783 = vmatpush2.bf16.msra.mxu0 0
        %784 = vmatprep.subr.bf16.mxu0 0
        %785 = vmatpush2.bf16.msra.mxu0 0
        %786 = vmatprep.mubr.bf16.mxu0 0
        %787 = vmatmul.mubr.bf16.gmra.mxu0 %v748
        %v788 = vpop.f32.mrf.mxu0
        %v789 = vadd.f32 0.0, %v788
        %v790 = vpop.f32.mrf.mxu0
        %v791 = vpop.f32.mrf.mxu0
        %v792 = vpop.f32.mrf.mxu0
        %793 = vdwg.mxu0
        %v795 = vsel %vm715, %v741, 0
        %v798 = vsel %vm750, %v746, 0
        %800 = vmatprep.subr.bf16.mxu0 0
        %801 = vmatpush1.bf16.msra.mxu0 0
        %802 = vmatprep.subr.bf16.mxu0 0
        %803 = vmatpush1.bf16.msra.mxu0 0
        %804 = vmatprep.subr.bf16.mxu0 0
        %805 = vmatpush1.bf16.msra.mxu0 0
        %806 = vmatprep.subr.bf16.mxu0 0
        %807 = vmatpush1.bf16.msra.mxu0 0
        %808 = vmatprep.subr.bf16.mxu0 0
        %809 = vmatpush1.bf16.msra.mxu0 0
        %810 = vmatprep.subr.bf16.mxu0 0
        %811 = vmatpush1.bf16.msra.mxu0 0
        %812 = vmatprep.subr.bf16.mxu0 0
        %813 = vmatpush1.bf16.msra.mxu0 0
        %814 = vmatprep.subr.bf16.mxu0 0
        %815 = vmatpush1.bf16.msra.mxu0 %v798
        %816 = vmatprep.subr.bf16.mxu0 0
        %817 = vmatpush2.bf16.msra.mxu0 0
        %818 = vmatprep.subr.bf16.mxu0 0
        %819 = vmatpush2.bf16.msra.mxu0 0
        %820 = vmatprep.subr.bf16.mxu0 0
        %821 = vmatpush2.bf16.msra.mxu0 0
        %822 = vmatprep.subr.bf16.mxu0 0
        %823 = vmatpush2.bf16.msra.mxu0 0
        %824 = vmatprep.subr.bf16.mxu0 0
        %825 = vmatpush2.bf16.msra.mxu0 0
        %826 = vmatprep.subr.bf16.mxu0 0
        %827 = vmatpush2.bf16.msra.mxu0 0
        %828 = vmatprep.subr.bf16.mxu0 0
        %829 = vmatpush2.bf16.msra.mxu0 0
        %830 = vmatprep.subr.bf16.mxu0 0
        %831 = vmatpush2.bf16.msra.mxu0 0
        %832 = vmatprep.mubr.bf16.mxu0 0
        %833 = vmatmul.mubr.bf16.gmra.mxu0 %v795
        %v834 = vpop.f32.mrf.mxu0
        %v835 = vadd.f32 0.0, %v834
        %v836 = vpop.f32.mrf.mxu0
        %v837 = vpop.f32.mrf.mxu0
        %v838 = vpop.f32.mrf.mxu0
        %839 = vdwg.mxu0
        %841 = vrot.lane.b32.xlu0 %v835, 16
        %v842 = vpop.permute.xlu0 %841
        %v844 = vsel %vm612, %v789, %v842
        %v845 = vpack.c.bf16 %v844, %v844
        %v846 = vld [vmem:[%s4] sm:$0xf]
        %v847 = vld [vmem:[%s4 + $0x4] sm:$0xf]
        %v848 = vld [vmem:[%s4 + $0x8] sm:$0xf]
        %v849 = vld [vmem:[%s4 + $0xc] sm:$0xf]
        %v850 = vld [vmem:[%s5] sm:$0x1]
        %v852 = vlaneseq
        %v853 = vshrl.u32 %v852, 7
        %v854 = vsub.s32 0, %v853
        %v855 = vrot.slane %v850, %v854
        %v861 = vunpack.c.l.b16 %v846
        %v862 = vunpack.c.l.b16 %v847
        %v863 = vunpack.c.l.b16 %v848
        %v864 = vunpack.c.l.b16 %v849
        %v865 = vpack.c.b16 %v862, %v861
        %v866 = vpack.c.b16 %v864, %v863
        %vm869 = vcmask 261120
        %v871 = vsel %vm869, %v845, 0
        %873 = vmatprep.subr.bf16.mxu0 0
        %874 = vmatpush1.bf16.msra.mxu0 0
        %875 = vmatprep.subr.bf16.mxu0 0
        %876 = vmatpush1.bf16.msra.mxu0 0
        %877 = vmatprep.subr.bf16.mxu0 0
        %878 = vmatpush1.bf16.msra.mxu0 0
        %879 = vmatprep.subr.bf16.mxu0 0
        %880 = vmatpush1.bf16.msra.mxu0 0
        %881 = vmatprep.subr.bf16.mxu0 0
        %882 = vmatpush1.bf16.msra.mxu0 0
        %883 = vmatprep.subr.bf16.mxu0 0
        %884 = vmatpush1.bf16.msra.mxu0 0
        %885 = vmatprep.subr.bf16.mxu0 0
        %886 = vmatpush1.bf16.msra.mxu0 %v866
        %887 = vmatprep.subr.bf16.mxu0 0
        %888 = vmatpush1.bf16.msra.mxu0 %v865
        %889 = vmatprep.subr.bf16.mxu0 0
        %890 = vmatpush2.bf16.msra.mxu0 0
        %891 = vmatprep.subr.bf16.mxu0 0
        %892 = vmatpush2.bf16.msra.mxu0 0
        %893 = vmatprep.subr.bf16.mxu0 0
        %894 = vmatpush2.bf16.msra.mxu0 0
        %895 = vmatprep.subr.bf16.mxu0 0
        %896 = vmatpush2.bf16.msra.mxu0 0
        %897 = vmatprep.subr.bf16.mxu0 0
        %898 = vmatpush2.bf16.msra.mxu0 0
        %899 = vmatprep.subr.bf16.mxu0 0
        %900 = vmatpush2.bf16.msra.mxu0 0
        %901 = vmatprep.subr.bf16.mxu0 0
        %902 = vmatpush2.bf16.msra.mxu0 0
        %903 = vmatprep.subr.bf16.mxu0 0
        %904 = vmatpush2.bf16.msra.mxu0 0
        %905 = vmatprep.mubr.bf16.mxu0 0
        %906 = vmatmul.mubr.bf16.gmra.mxu0 %v871
        %v907 = vpop.f32.mrf.mxu0
        %v908 = vadd.f32 %v855, %v907
        %v909 = vpop.f32.mrf.mxu0
        %v910 = vpop.f32.mrf.mxu0
        %v911 = vpop.f32.mrf.mxu0
        %912 = vdwg.mxu0
        %v913 = vadd.f32 %v908, %v603
        %v914 = vld [vmem:[%s6] sm:$0x1]
        %v915 = vld [vmem:[%s7] sm:$0x1]
        %v916 = vsel %vm869, %v913, 0.0
        %917 = vadd.xlane.f32.xlu0 %v916
        %v918 = vpop.xlane.xlu0 %917
        %v919 = vrcp.pop 32.0
        %v920 = vmul.f32 %v918, %v919
        %v921 = vsub.f32 %v913, %v920
        %v922 = vmul.f32 %v921, %v921
        %v923 = vsel %vm869, %v922, 0.0
        %924 = vadd.xlane.f32.xlu0 %v923
        %v925 = vpop.xlane.xlu0 %924
        %v926 = vmul.f32 %v925, %v919
        %v927 = vadd.f32 %v926, 1e-05
        %v928 = vrsqrt.pop %v927
        %v929 = vmul.f32 %v921, %v928
        %v931 = vlaneseq
        %v932 = vshrl.u32 %v931, 7
        %v933 = vsub.s32 0, %v932
        %v934 = vrot.slane %v914, %v933
        %v936 = vmul.f32 %v929, %v934
        %v938 = vlaneseq
        %v939 = vshrl.u32 %v938, 7
        %v940 = vsub.s32 0, %v939
        %v941 = vrot.slane %v915, %v940
        %v943 = vadd.f32 %v936, %v941
        %v944 = vlaneseq
        %v945 = vshrl.u32 %v944, 7
        %v946 = vstv %s601
        %v947 = vadd.s32 %v945, %v946
        %vm948 = vcmp.lt.s32.totalorder %v947, %v709
        %v949 = vsel %vm948, 1, 0
        %v950 = vcvt.s32.f32 %v949
        %v951 = vmul.f32 %v943, %v950
        %v952 = vpack.c.bf16 %v951, %v951
        %v953 = vld [vmem:[%s8] sm:$0xf]
        %v954 = vld [vmem:[%s8 + $0x4] sm:$0xf]
        %v955 = vld [vmem:[%s8 + $0x8] sm:$0xf]
        %v956 = vld [vmem:[%s8 + $0xc] sm:$0xf]
        %v957 = vld [vmem:[%s9] sm:$0x1]
        %v959 = vlaneseq
        %v960 = vshrl.u32 %v959, 7
        %v961 = vsub.s32 0, %v960
        %v962 = vrot.slane %v957, %v961
        %v968 = vunpack.c.l.b16 %v953
        %v969 = vunpack.c.l.b16 %v954
        %v970 = vunpack.c.l.b16 %v955
        %v971 = vunpack.c.l.b16 %v956
        %v972 = vpack.c.b16 %v969, %v968
        %v973 = vpack.c.b16 %v971, %v970
        %v977 = vsel %vm869, %v952, 0
        %979 = vmatprep.subr.bf16.mxu0 0
        %980 = vmatpush1.bf16.msra.mxu0 0
        %981 = vmatprep.subr.bf16.mxu0 0
        %982 = vmatpush1.bf16.msra.mxu0 0
        %983 = vmatprep.subr.bf16.mxu0 0
        %984 = vmatpush1.bf16.msra.mxu0 0
        %985 = vmatprep.subr.bf16.mxu0 0
        %986 = vmatpush1.bf16.msra.mxu0 0
        %987 = vmatprep.subr.bf16.mxu0 0
        %988 = vmatpush1.bf16.msra.mxu0 0
        %989 = vmatprep.subr.bf16.mxu0 0
        %990 = vmatpush1.bf16.msra.mxu0 0
        %991 = vmatprep.subr.bf16.mxu0 0
        %992 = vmatpush1.bf16.msra.mxu0 %v973
        %993 = vmatprep.subr.bf16.mxu0 0
        %994 = vmatpush1.bf16.msra.mxu0 %v972
        %995 = vmatprep.subr.bf16.mxu0 0
        %996 = vmatpush2.bf16.msra.mxu0 0
        %997 = vmatprep.subr.bf16.mxu0 0
        %998 = vmatpush2.bf16.msra.mxu0 0
        %999 = vmatprep.subr.bf16.mxu0 0
        %1000 = vmatpush2.bf16.msra.mxu0 0
        %1001 = vmatprep.subr.bf16.mxu0 0
        %1002 = vmatpush2.bf16.msra.mxu0 0
        %1003 = vmatprep.subr.bf16.mxu0 0
        %1004 = vmatpush2.bf16.msra.mxu0 0
        %1005 = vmatprep.subr.bf16.mxu0 0
        %1006 = vmatpush2.bf16.msra.mxu0 0
        %1007 = vmatprep.subr.bf16.mxu0 0
        %1008 = vmatpush2.bf16.msra.mxu0 0
        %1009 = vmatprep.subr.bf16.mxu0 0
        %1010 = vmatpush2.bf16.msra.mxu0 0
        %1011 = vmatprep.mubr.bf16.mxu0 0
        %1012 = vmatmul.mubr.bf16.gmra.mxu0 %v977
        %v1013 = vpop.f32.mrf.mxu0
        %v1014 = vadd.f32 %v962, %v1013
        %v1015 = vpop.f32.mrf.mxu0
        %v1016 = vpop.f32.mrf.mxu0
        %v1017 = vpop.f32.mrf.mxu0
        %1018 = vdwg.mxu0
        %v1019 = vmax.f32 %v1014, 0.0
        %v1020 = vpack.c.bf16 %v1019, %v1019
        %v1021 = vld [vmem:[%s10] sm:$0xf]
        %v1022 = vld [vmem:[%s10 + $0x4] sm:$0xf]
        %v1023 = vld [vmem:[%s10 + $0x8] sm:$0xf]
        %v1024 = vld [vmem:[%s10 + $0xc] sm:$0xf]
        %v1025 = vld [vmem:[%s10 + $0x10] sm:$0xf]
        %v1026 = vld [vmem:[%s10 + $0x14] sm:$0xf]
        %v1027 = vld [vmem:[%s10 + $0x18] sm:$0xf]
        %v1028 = vld [vmem:[%s10 + $0x1c] sm:$0xf]
        %v1029 = vld [vmem:[%s11] sm:$0x1]
        %v1031 = vlaneseq
        %v1032 = vshrl.u32 %v1031, 7
        %v1033 = vsub.s32 0, %v1032
        %v1034 = vrot.slane %v1029, %v1033
        %v1044 = vunpack.c.l.b16 %v1021
        %v1045 = vunpack.c.l.b16 %v1022
        %v1046 = vunpack.c.l.b16 %v1023
        %v1047 = vunpack.c.l.b16 %v1024
        %v1048 = vunpack.c.l.b16 %v1025
        %v1049 = vunpack.c.l.b16 %v1026
        %v1050 = vunpack.c.l.b16 %v1027
        %v1051 = vunpack.c.l.b16 %v1028
        %v1052 = vpack.c.b16 %v1045, %v1044
        %v1053 = vpack.c.b16 %v1047, %v1046
        %v1054 = vpack.c.b16 %v1049, %v1048
        %v1055 = vpack.c.b16 %v1051, %v1050
        %vm1060 = vcmask 523264
        %v1062 = vsel %vm1060, %v1020, 0
        %1064 = vmatprep.subr.bf16.mxu0 0
        %1065 = vmatpush1.bf16.msra.mxu0 0
        %1066 = vmatprep.subr.bf16.mxu0 0
        %1067 = vmatpush1.bf16.msra.mxu0 0
        %1068 = vmatprep.subr.bf16.mxu0 0
        %1069 = vmatpush1.bf16.msra.mxu0 0
        %1070 = vmatprep.subr.bf16.mxu0 0
        %1071 = vmatpush1.bf16.msra.mxu0 0
        %1072 = vmatprep.subr.bf16.mxu0 0
        %1073 = vmatpush1.bf16.msra.mxu0 %v1055
        %1074 = vmatprep.subr.bf16.mxu0 0
        %1075 = vmatpush1.bf16.msra.mxu0 %v1054
        %1076 = vmatprep.subr.bf16.mxu0 0
        %1077 = vmatpush1.bf16.msra.mxu0 %v1053
        %1078 = vmatprep.subr.bf16.mxu0 0
        %1079 = vmatpush1.bf16.msra.mxu0 %v1052
        %1080 = vmatprep.subr.bf16.mxu0 0
        %1081 = vmatpush2.bf16.msra.mxu0 0
        %1082 = vmatprep.subr.bf16.mxu0 0
        %1083 = vmatpush2.bf16.msra.mxu0 0
        %1084 = vmatprep.subr.bf16.mxu0 0
        %1085 = vmatpush2.bf16.msra.mxu0 0
        %1086 = vmatprep.subr.bf16.mxu0 0
        %1087 = vmatpush2.bf16.msra.mxu0 0
        %1088 = vmatprep.subr.bf16.mxu0 0
        %1089 = vmatpush2.bf16.msra.mxu0 0
        %1090 = vmatprep.subr.bf16.mxu0 0
        %1091 = vmatpush2.bf16.msra.mxu0 0
        %1092 = vmatprep.subr.bf16.mxu0 0
        %1093 = vmatpush2.bf16.msra.mxu0 0
        %1094 = vmatprep.subr.bf16.mxu0 0
        %1095 = vmatpush2.bf16.msra.mxu0 0
        %1096 = vmatprep.mubr.bf16.mxu0 0
        %1097 = vmatmul.mubr.bf16.gmra.mxu0 %v1062
        %v1098 = vpop.f32.mrf.mxu0
        %v1099 = vadd.f32 %v1034, %v1098
        %v1100 = vpop.f32.mrf.mxu0
        %v1101 = vpop.f32.mrf.mxu0
        %v1102 = vpop.f32.mrf.mxu0
        %1103 = vdwg.mxu0
        %v1104 = vadd.f32 %v1099, %v951
        %v1105 = vld [vmem:[%s12] sm:$0x1]
        %v1106 = vld [vmem:[%s13] sm:$0x1]
        %v1107 = vsel %vm869, %v1104, 0.0
        %1108 = vadd.xlane.f32.xlu0 %v1107
        %v1109 = vpop.xlane.xlu0 %1108
        %v1110 = vmul.f32 %v1109, %v919
        %v1111 = vsub.f32 %v1104, %v1110
        %v1112 = vmul.f32 %v1111, %v1111
        %v1113 = vsel %vm869, %v1112, 0.0
        %1114 = vadd.xlane.f32.xlu0 %v1113
        %v1115 = vpop.xlane.xlu0 %1114
        %v1116 = vmul.f32 %v1115, %v919
        %v1117 = vadd.f32 %v1116, 1e-05
        %v1118 = vrsqrt.pop %v1117
        %v1119 = vmul.f32 %v1111, %v1118
        %v1121 = vlaneseq
        %v1122 = vshrl.u32 %v1121, 7
        %v1123 = vsub.s32 0, %v1122
        %v1124 = vrot.slane %v1105, %v1123
        %v1126 = vmul.f32 %v1119, %v1124
        %v1128 = vlaneseq
        %v1129 = vshrl.u32 %v1128, 7
        %v1130 = vsub.s32 0, %v1129
        %v1131 = vrot.slane %v1106, %v1130
        %v1133 = vadd.f32 %v1126, %v1131
        %v1134 = vmul.f32 %v1133, %v950
        %1135 = vst.msk [vmem:[%s485] sm:$0xff] %vm869, %v1134
        %s1136 = sand.u32 %s339, 1
        %s1137 = scalar_lea.sflag [#allocation8], %s1136
        %s1138 = sand.u32 %s339, 1
        %s1139 = smul.addr %s1138, 8
        %s1140 = scalar_lea.vmem [#allocation7], %s1139
        %s1141 = sand.u32 %s367, 1
        %s1142 = scalar_lea.sflag [#allocation10], %s1141
        %s1143 = sand.u32 %s367, 1
        %s1144 = smul.addr %s1143, 8
        %s1145 = scalar_lea.vmem [#allocation9], %s1144
        // Predicated region
        $region77: #{encoder_forward.5} parent=71 // pred_check
          %p1146 = pneg %p349
        $region78: #{encoder_forward.5} parent=71 // pred_check_branch
          %1148 = sbr.rel (%p1146) target = $region80
        $region79: #{encoder_forward.5} parent=71 // pred_region
          %s1150 = ssub.s32 128, 128
          %1151 = vsyncadd %s1137, %s1150
          %s1152 = sadd.s32 %s44, %s43
          %s1153 = smul.addr %s1152, 128
          %s1154 = scalar_lea.hbm %s14, %s1153
          %s1156 = sshll.u32 %s1140, 4
          %s1157 = int_to_ptr.vmem [resolvable:$true] %s1156
          %1159 = dma.vmem_to_hbm [thread:$0]  %s1157, 128, %s1154, %s1137
        $region80: #{encoder_forward.5} parent=71 // pred_fallthru
          _
        // Predicated region
        $region81: #{encoder_forward.5} parent=71 // pred_check
          %p1160 = pneg %p377
        $region82: #{encoder_forward.5} parent=71 // pred_check_branch
          %1162 = sbr.rel (%p1160) target = $region84
        $region83: #{encoder_forward.5} parent=71 // pred_region
          %s1164 = ssub.s32 128, 128
          %1165 = vsyncadd %s1142, %s1164
          %s1166 = sadd.s32 %s44, %s43
          %s1167 = smul.addr %s1166, 64
          %s1168 = scalar_lea.hbm %s15, %s1167
          %s1169 = sshll.u32 %s1145, 4
          %s1170 = int_to_ptr.vmem [resolvable:$true] %s1169
          %1175 = dma.vmem_to_hbm [thread:$0]  %s1170, 128, %s1168, %s1142, 64, 128, 4
        $region84: #{encoder_forward.5} parent=71 // pred_fallthru
          _
      $region72: #{encoder_forward.5} parent=5 // pred_fallthru
        _
      %p1176 = scmp.le.s32.totalorder 2, %s34
      // Predicated region
      $region85: #{encoder_forward.5} parent=5 // pred_check
        %p1177 = pneg %p1176
      $region86: #{encoder_forward.5} parent=5 // pred_check_branch
        %1179 = sbr.rel (%p1177) target = $region88
      $region87: #{encoder_forward.5} parent=5 // pred_region
        %s1180 = ssub.s32 %s34, 2
        // Predicated region
        $region89: #{encoder_forward.5} parent=87 // pred_check
          %p1181 = pneg %p355
        $region90: #{encoder_forward.5} parent=87 // pred_check_branch
          %1183 = sbr.rel (%p1181) target = $region92
        $region91: #{encoder_forward.5} parent=87 // pred_region
          %s1184 = sand.u32 %s340, 1
          %s1185 = scalar_lea.sflag [#allocation8], %s1184
          %s1186 = sand.u32 %s340, 1
          %s1187 = smul.addr %s1186, 8
          %s1188 = scalar_lea.vmem [#allocation7], %s1187
          %1189 = dma.done %s1185, 128
        $region92: #{encoder_forward.5} parent=87 // pred_fallthru
          _
        // Predicated region
        $region93: #{encoder_forward.5} parent=87 // pred_check
          %p1190 = pneg %p383
        $region94: #{encoder_forward.5} parent=87 // pred_check_branch
          %1192 = sbr.rel (%p1190) target = $region96
        $region95: #{encoder_forward.5} parent=87 // pred_region
          %s1193 = sand.u32 %s368, 1
          %s1194 = scalar_lea.sflag [#allocation10], %s1193
          %s1195 = sand.u32 %s368, 1
          %s1196 = smul.addr %s1195, 8
          %s1197 = scalar_lea.vmem [#allocation9], %s1196
          %1198 = dma.done %s1194, 128
        $region96: #{encoder_forward.5} parent=87 // pred_fallthru
          _
      $region88: #{encoder_forward.5} parent=5 // pred_fallthru
        _
    $region6: #{encoder_forward.5} parent=1 // loop_footer
      %s38 = sadd.s32 1, %s34
    $region7: #{encoder_forward.5} parent=1 // loop_footer_branch
      %33 = sbr.rel target = $region3
    $region8: #{encoder_forward.5} parent=1 // loop_exit
      _
    %1199 = vsyncpa [#allocation8], 1
    %s1200 = scalar_lea.sflag [#allocation8], 1
    %1201 = vsyncpa %s1200, 1
    %1202 = vsyncpa [#allocation10], 1
    %s1203 = scalar_lea.sflag [#allocation10], 1
    %1204 = vsyncpa %s1203, 1

</llo_original>
